<compile_context>
chip_gen: v5e
topology: v5e:2x2
jax: 0.10.0
libtpu: 0.0.40
codegen_flags: <defaults>
</compile_context>

<pallas_src>
import math

import numpy as np
import jax
import jax.numpy as jnp
from jax import lax
from jax.experimental import pallas as pl
from jax.experimental.pallas import tpu as pltpu


def _round_up(a, b):
    return ((a + b - 1) // b) * b


# ------------------------------ fused Pallas kernel ------------------------------

def _fused_cnn_kernel(xs_ref, w1big_ref, cb1_ref, s1c_ref, t1c_ref, rmask_ref,
                      tz2_ref, cb2_ref, s2c_ref, t2c_ref, pc_ref, rbig_ref,
                      fc1w_ref, fc1b_ref, fc2w_ref, fc2b_ref, fc3w_ref, fc3b_ref,
                      o_ref, a1_ref, pool_ref):
    bf16 = jnp.bfloat16
    r1 = a1_ref.shape[0]          # N*Hp + 2 : conv1 rows incl. one margin row each end
    r2 = r1 - 2                   # N*Hp     : conv2 / padded-grid rows
    finp = pc_ref.shape[1]        # 128      : pooled per-row block width (lane aligned)
    n = pool_ref.shape[0]         # batch
    n_io = rbig_ref.shape[0] // n # Ho = 14

    # ---- conv1: single K-folded bf16 Toeplitz matmul (input slab pre-shifted
    #      in the wrapper), bias + ReLU + folded BN (f32), interior mask that
    #      implements conv2's zero padding (row mask x column-masked scale). ----
    acc = jnp.dot(xs_ref[...], w1big_ref[...], preferred_element_type=jnp.float32)
    a1_ref[...] = ((jnp.maximum(acc + cb1_ref[...], 0.0) * s1c_ref[...]
                    + t1c_ref[...]) * rmask_ref[...])

    # ---- conv2: 3 row-shifted lane-padded bf16 Toeplitz matmuls, f32 accumulate,
    #      then bias + ReLU + folded BN.  Border rows/cols hold don't-care values
    #      the pooling matrices never select. ----
    acc2 = jnp.dot(a1_ref[pl.ds(0, r2), :].astype(bf16), tz2_ref[0],
                   preferred_element_type=jnp.float32)
    for dy in (1, 2):
        acc2 = acc2 + jnp.dot(a1_ref[pl.ds(dy, r2), :].astype(bf16), tz2_ref[dy],
                              preferred_element_type=jnp.float32)
    y2 = jnp.maximum(acc2 + cb2_ref[...], 0.0) * s2c_ref[...] + t2c_ref[...]

    # ---- AvgPool2x2: column pairs via Pc, then row pairs + batch select via
    #      Rbig (carries the 0.25 factor; rows ordered io-major / batch-minor). ----
    yc = jnp.dot(y2.astype(bf16), pc_ref[...], preferred_element_type=jnp.float32)
    pooled = jnp.dot(rbig_ref[...], yc.astype(bf16),
                     preferred_element_type=jnp.float32)          # (Ho*N, finp)
    # Scatter each io block to lane offset io*finp of the (N, Ho*finp) scratch;
    # the NCHW flatten order is absorbed into fc1's weight-row permutation.
    for io in range(n_io):
        pool_ref[:, io * finp:(io + 1) * finp] = pooled[io * n:(io + 1) * n, :]

    # ---- classifier MLP: fc1 is ONE (N, Ho*finp) x (Ho*finp, 512) matmul.
    #      (Dropout2d = identity in eval mode.) ----
    h1 = jnp.dot(pool_ref[...].astype(bf16), fc1w_ref[...],
                 preferred_element_type=jnp.float32) + fc1b_ref[...]
    h1 = jnp.maximum(h1, 0.0)
    h2 = jnp.dot(h1.astype(bf16), fc2w_ref[...],
                 preferred_element_type=jnp.float32) + fc2b_ref[...]
    h2 = jnp.maximum(h2, 0.0)
    o_ref[...] = (jnp.dot(h2.astype(bf16), fc3w_ref[...],
                          preferred_element_type=jnp.float32) + fc3b_ref[...])


# -------------------- one-time weight / constant preprocessing --------------------

def prepare_inference_params(params, batch, h, w, eps=1e-5):
    """BN fold, lane-padded block-Toeplitz conv weights (bf16), pooling matrices,
    fc1 row permutation.  Runs once, outside the per-call path."""
    w1 = params["conv1_w"]
    w2 = params["conv2_w"]
    c, cin = int(w1.shape[0]), int(w1.shape[1])
    hp, wp = h + 2, w + 2
    m = batch * hp                       # padded-grid rows
    r1 = m + 2                           # conv1 rows incl. one margin row each end
    ho, wo = h // 2, w // 2
    kc = wp * c
    kcp = _round_up(kc, 128)             # 240 -> 256 : full lane tiles / MXU columns
    k1 = 3 * wp * cin
    k1p = _round_up(k1, 128)             # 90 -> 128  : conv1 contraction depth
    fin = wo * c
    finp = _round_up(fin, 128)           # 112 -> 128 : pooled per-row block width
    nh1 = int(params["fc1_w"].shape[1])
    bf = lambda a: a.astype(jnp.bfloat16)

    # ---- block-Toeplitz conv weights (band selector over the W axis) ----
    jin = np.arange(wp)[None, :, None]
    jout = np.arange(wp)[None, None, :]
    dxs = np.arange(3)[:, None, None]
    sel = jnp.asarray((jin == jout + dxs - 1).astype(np.float32))    # (3, wp, wp)

    def toeplitz(w_oihw):
        co_, ci_ = int(w_oihw.shape[0]), int(w_oihw.shape[1])
        t = jnp.einsum("oiyx,xJj->yJijo", w_oihw, sel)
        return t.reshape(3, wp * ci_, wp * co_)

    # conv1: the 3 kernel rows are folded into K (input slab pre-shifted in the
    # wrapper) -> one (k1p, kcp) weight, zero padded to full MXU tiles.
    tz1 = toeplitz(w1).reshape(k1, kc)
    w1big = jnp.zeros((k1p, kcp), jnp.float32).at[:k1, :kc].set(tz1)

    # conv2: keep the 3 row-shifted matmuls; pad both axes to kcp.
    tz2 = jnp.zeros((3, kcp, kcp), jnp.float32).at[:, :kc, :kc].set(toeplitz(w2))

    # ---- BN fold (eval mode) ----
    def bn_fold(g, b, mu, v):
        s = g * lax.rsqrt(v + eps)
        return s, b - mu * s

    s1, t1 = bn_fold(params["bn1_gamma"], params["bn1_beta"],
                     params["bn1_mean"], params["bn1_var"])
    s2, t2 = bn_fold(params["bn2_gamma"], params["bn2_beta"],
                     params["bn2_mean"], params["bn2_var"])

    def lane_vec(v):                     # (c,) -> (1, kcp): tiled over wp, zero padded
        return jnp.zeros((1, kcp), jnp.float32).at[0, :kc].set(jnp.tile(v, wp))

    # conv2's zero padding = interior mask on the conv1 activation, factored into a
    # (r1,1) row mask and (1,kcp) column-masked BN scale/shift vectors.
    col_ok = ((np.arange(kc) // c >= 1) & (np.arange(kc) // c <= w)).astype(np.float32)
    colm = jnp.zeros((1, kcp), jnp.float32).at[0, :kc].set(jnp.asarray(col_ok))
    g_ = np.arange(r1) - 1
    row_ok = (g_ >= 0) & (g_ < m) & ((g_ % hp) >= 1) & ((g_ % hp) <= h)
    rmask = jnp.asarray(row_ok.astype(np.float32)).reshape(r1, 1)

    # ---- AvgPool2x2 as two matmuls ----
    pc = np.zeros((kcp, finp), np.float32)                 # column-pair sums
    eye = np.eye(c, dtype=np.float32)
    for jo in range(wo):
        pc[(2 * jo + 1) * c:(2 * jo + 2) * c, jo * c:(jo + 1) * c] = eye
        pc[(2 * jo + 2) * c:(2 * jo + 3) * c, jo * c:(jo + 1) * c] = eye
    # row pairs + batch select (carries the 0.25 avg factor); rows ordered
    # io-major / batch-minor so each io block is a contiguous 2-row slice.
    rbig = np.zeros((ho * batch, m), np.float32)
    for io in range(ho):
        for nb in range(batch):
            rbig[io * batch + nb, nb * hp + 2 * io + 1] = 0.25
            rbig[io * batch + nb, nb * hp + 2 * io + 2] = 0.25

    # fc1 rows permuted from torch's NCHW flatten order (c, io, jo) to the kernel's
    # pooled layout (io-block, jo, c), zero padded per io block to finp rows.
    w1p = params["fc1_w"].reshape(c, ho, wo, nh1)
    w1p = jnp.transpose(w1p, (1, 2, 0, 3)).reshape(ho, wo * c, nh1)
    fc1w = jnp.zeros((ho, finp, nh1), jnp.float32).at[:, :fin, :].set(w1p)
    fc1w = fc1w.reshape(ho * finp, nh1)

    return dict(
        w1big=bf(w1big), cb1=lane_vec(params["conv1_b"]),
        s1c=lane_vec(s1) * colm, t1c=lane_vec(t1) * colm, rmask=rmask,
        tz2=bf(tz2), cb2=lane_vec(params["conv2_b"]),
        s2c=lane_vec(s2), t2c=lane_vec(t2),
        pc=bf(jnp.asarray(pc)), rbig=bf(jnp.asarray(rbig)),
        fc1_w=bf(fc1w), fc1_b=params["fc1_b"].reshape(1, -1),
        fc2_w=bf(params["fc2_w"]), fc2_b=params["fc2_b"].reshape(1, -1),
        fc3_w=bf(params["fc3_w"]), fc3_b=params["fc3_b"].reshape(1, -1),
    )


# ---------------------------------- forward ----------------------------------

def cnn_forward(x_nchw, prep):
    n, cin, h, w = x_nchw.shape
    hp, wp = h + 2, w + 2
    r1 = n * hp + 2
    r2 = n * hp
    k1p = prep["w1big"].shape[0]
    kcp = prep["tz2"].shape[1]
    finp = prep["pc"].shape[1]
    nh1 = prep["fc1_w"].shape[1]
    nh2 = prep["fc2_w"].shape[1]
    out_dim = prep["fc3_w"].shape[1]

    # Layout glue on the (tiny) input only: NCHW -> zero-padded row-major slab,
    # rows pre-shifted for the 3 conv kernel rows so conv1 is ONE K=k1p matmul.
    xpad = jnp.pad(jnp.transpose(x_nchw, (0, 2, 3, 1)), ((0, 0), (1, 1), (1, 1), (0, 0)))
    x2d = xpad.reshape(n * hp, wp * cin)
    x2d = jnp.pad(x2d, ((2, 2), (0, 0)))                              # (N*Hp+4, Wp*Cin)
    xs = jnp.concatenate([x2d[dy:dy + r1] for dy in range(3)], axis=1)  # (r1, 3*Wp*Cin)
    xs = jnp.pad(xs, ((0, 0), (0, k1p - xs.shape[1]))).astype(jnp.bfloat16)

    args = (xs, prep["w1big"], prep["cb1"], prep["s1c"], prep["t1c"], prep["rmask"],
            prep["tz2"], prep["cb2"], prep["s2c"], prep["t2c"],
            prep["pc"], prep["rbig"],
            prep["fc1_w"], prep["fc1_b"], prep["fc2_w"], prep["fc2_b"],
            prep["fc3_w"], prep["fc3_b"])

    flops = 2 * (r1 * k1p * kcp
                 + 3 * r2 * kcp * kcp
                 + r2 * kcp * finp
                 + prep["rbig"].shape[0] * r2 * finp
                 + n * prep["fc1_w"].shape[0] * nh1
                 + n * nh1 * nh2
                 + n * nh2 * out_dim)
    bytes_accessed = (sum(int(np.prod(a.shape)) * a.dtype.itemsize for a in args)
                      + n * out_dim * 4)

    vspec = pl.BlockSpec(memory_space=pltpu.MemorySpace.VMEM)
    return pl.pallas_call(
        _fused_cnn_kernel,
        out_shape=jax.ShapeDtypeStruct((n, out_dim), jnp.float32),
        in_specs=[vspec] * len(args),
        out_specs=vspec,
        scratch_shapes=[pltpu.VMEM((r1, kcp), jnp.float32),
                        pltpu.VMEM((n, prep["fc1_w"].shape[0]), jnp.float32)],
        compiler_params=pltpu.CompilerParams(vmem_limit_bytes=32 * 1024 * 1024),
        cost_estimate=pl.CostEstimate(flops=flops, transcendentals=0,
                                      bytes_accessed=bytes_accessed),
    )(*args)


# ----------------------- deterministic parameter init -----------------------

def init_params(key, inp, hidden, output, h=28, w=28):
    ks = jax.random.split(key, 18)

    def dense(k, fan_in, shape):
        return jax.random.normal(k, shape, jnp.float32) / math.sqrt(fan_in)

    flat = hidden * (h // 2) * (w // 2)
    assert flat == 4 * hidden * 7 * 7, "classifier input size requires 28x28 input"
    return dict(
        conv1_w=dense(ks[0], inp * 9, (hidden, inp, 3, 3)),
        conv1_b=0.05 * jax.random.normal(ks[1], (hidden,), jnp.float32),
        bn1_gamma=1.0 + 0.1 * jax.random.normal(ks[2], (hidden,), jnp.float32),
        bn1_beta=0.1 * jax.random.normal(ks[3], (hidden,), jnp.float32),
        bn1_mean=0.1 * jax.random.normal(ks[4], (hidden,), jnp.float32),
        bn1_var=1.0 + 0.5 * jax.random.uniform(ks[5], (hidden,), jnp.float32),
        conv2_w=dense(ks[6], hidden * 9, (hidden, hidden, 3, 3)),
        conv2_b=0.05 * jax.random.normal(ks[7], (hidden,), jnp.float32),
        bn2_gamma=1.0 + 0.1 * jax.random.normal(ks[8], (hidden,), jnp.float32),
        bn2_beta=0.1 * jax.random.normal(ks[9], (hidden,), jnp.float32),
        bn2_mean=0.1 * jax.random.normal(ks[10], (hidden,), jnp.float32),
        bn2_var=1.0 + 0.5 * jax.random.uniform(ks[11], (hidden,), jnp.float32),
        # Linear weights stored (in, out); equivalent to torch's y = x @ W.T + b.
        fc1_w=dense(ks[12], flat, (flat, 512)),
        fc1_b=0.02 * jax.random.normal(ks[13], (512,), jnp.float32),
        fc2_w=dense(ks[14], 512, (512, 256)),
        fc2_b=0.02 * jax.random.normal(ks[15], (256,), jnp.float32),
        fc3_w=dense(ks[16], 256, (256, output)),
        fc3_b=0.02 * jax.random.normal(ks[17], (output,), jnp.float32),
    )


# ------------------------- pure-JAX reference check -------------------------

def reference_forward(x_nchw, params, eps=1e-5, mxu_dtype=None):
    """Pure-JAX reference.  mxu_dtype=jnp.bfloat16 emulates the kernel's MXU
    operand precision (bf16 operands, f32 accumulation); None = plain f32."""
    cast = (lambda a: a) if mxu_dtype is None else (lambda a: a.astype(mxu_dtype))
    rnd = (lambda a: a) if mxu_dtype is None else (
        lambda a: a.astype(mxu_dtype).astype(jnp.float32))

    def bn(y, g, b, m, v):
        s = g * lax.rsqrt(v + eps)
        return ((y - m[None, :, None, None]) * s[None, :, None, None]
                + b[None, :, None, None])

    dn = ("NCHW", "OIHW", "NCHW")
    y = lax.conv_general_dilated(cast(x_nchw), cast(params["conv1_w"]), (1, 1), "SAME",
                                 dimension_numbers=dn,
                                 preferred_element_type=jnp.float32)
    y = y + params["conv1_b"][None, :, None, None]
    y = bn(jnp.maximum(y, 0.0), params["bn1_gamma"], params["bn1_beta"],
           params["bn1_mean"], params["bn1_var"])
    y = lax.conv_general_dilated(cast(y), cast(params["conv2_w"]), (1, 1), "SAME",
                                 dimension_numbers=dn,
                                 preferred_element_type=jnp.float32)
    y = y + params["conv2_b"][None, :, None, None]
    y = bn(jnp.maximum(y, 0.0), params["bn2_gamma"], params["bn2_beta"],
           params["bn2_mean"], params["bn2_var"])
    # AvgPool2d(2,2), staged cols-then-rows to mirror the kernel's rounding points.
    yb = rnd(y)
    yc = yb[..., 0::2] + yb[..., 1::2]
    ycb = rnd(yc)
    p = 0.25 * (ycb[..., 0::2, :] + ycb[..., 1::2, :])
    f = p.reshape(p.shape[0], -1)
    h1 = jnp.maximum(jnp.dot(cast(f), cast(params["fc1_w"]),
                             preferred_element_type=jnp.float32) + params["fc1_b"], 0.0)
    h2 = jnp.maximum(jnp.dot(cast(h1), cast(params["fc2_w"]),
                             preferred_element_type=jnp.float32) + params["fc2_b"], 0.0)
    return (jnp.dot(cast(h2), cast(params["fc3_w"]),
                    preferred_element_type=jnp.float32) + params["fc3_b"])


# ----------------------------------- main -----------------------------------

if __name__ == "__main__":
    INP, HIDDEN, OUTPUT = 1, 8, 26
    N, H, W = 2, 28, 28  # 28x28 required: hidden*(H/2)*(W/2) == 4*hidden*7*7

    key = jax.random.PRNGKey(0)
    kx, kp = jax.random.split(key)
    x = jax.random.normal(kx, (N, INP, H, W), jnp.float32)
    params = init_params(kp, INP, HIDDEN, OUTPUT, H, W)

    # one-time weight preprocessing (outside the per-call path)
    prep = prepare_inference_params(params, batch=N, h=H, w=W)

    out = jax.jit(cnn_forward)(x, prep)
    out = jax.block_until_ready(out)
    assert out.shape == (N, OUTPUT)

    # (1) tight check vs a reference with identical MXU operand precision (bf16 in,
    #     f32 accumulate) -- validates the kernel math / layout exactly.
    ref_bf16 = reference_forward(x, params, mxu_dtype=jnp.bfloat16)
    diff1 = float(jnp.max(jnp.abs(out - ref_bf16)))
    if not jnp.allclose(out, ref_bf16, rtol=5e-3, atol=5e-3):
        raise AssertionError(f"mismatch vs bf16-operand reference (max abs diff {diff1})")

    # (2) loose precision sanity check vs the plain f32 reference.
    ref_f32 = reference_forward(x, params)
    diff2 = float(jnp.max(jnp.abs(out - ref_f32)))
    if not jnp.allclose(out, ref_f32, rtol=5e-2, atol=5e-2):
        raise AssertionError(f"mismatch vs f32 reference (max abs diff {diff2})")

    print("KERNEL_OK")
</pallas_src>

<mosaic_0001>
module attributes {stable_mosaic.version = 11 : i64} {
  func.func @_fused_cnn_kernel(%arg0: memref<62x128xbf16, #tpu.memory_space<vmem>>, %arg1: memref<128x256xbf16, #tpu.memory_space<vmem>>, %arg2: memref<1x256xf32, #tpu.memory_space<vmem>>, %arg3: memref<1x256xf32, #tpu.memory_space<vmem>>, %arg4: memref<1x256xf32, #tpu.memory_space<vmem>>, %arg5: memref<62x1xf32, #tpu.memory_space<vmem>>, %arg6: memref<3x256x256xbf16, #tpu.memory_space<vmem>>, %arg7: memref<1x256xf32, #tpu.memory_space<vmem>>, %arg8: memref<1x256xf32, #tpu.memory_space<vmem>>, %arg9: memref<1x256xf32, #tpu.memory_space<vmem>>, %arg10: memref<256x128xbf16, #tpu.memory_space<vmem>>, %arg11: memref<28x60xbf16, #tpu.memory_space<vmem>>, %arg12: memref<1792x512xbf16, #tpu.memory_space<vmem>>, %arg13: memref<1x512xf32, #tpu.memory_space<vmem>>, %arg14: memref<512x256xbf16, #tpu.memory_space<vmem>>, %arg15: memref<1x256xf32, #tpu.memory_space<vmem>>, %arg16: memref<256x26xbf16, #tpu.memory_space<vmem>>, %arg17: memref<1x26xf32, #tpu.memory_space<vmem>>, %arg18: memref<2x26xf32, #tpu.memory_space<vmem>>, %arg19: memref<62x256xf32, #tpu.memory_space<vmem>>, %arg20: memref<2x1792xf32, #tpu.memory_space<vmem>>) attributes {dimension_semantics = [], scalar_prefetch = 0 : i64, scratch_operands = 2 : i64, tpu.core_type = #tpu.core_type<tc>} {
    %c0 = arith.constant 0 : index
    %c0_0 = arith.constant 0 : index
    %0 = vector.load %arg0[%c0, %c0_0] : memref<62x128xbf16, #tpu.memory_space<vmem>>, vector<62x128xbf16>
    %c0_1 = arith.constant 0 : index
    %c0_2 = arith.constant 0 : index
    %1 = vector.load %arg1[%c0_1, %c0_2] : memref<128x256xbf16, #tpu.memory_space<vmem>>, vector<128x256xbf16>
    %cst = arith.constant dense<0.000000e+00> : vector<62x256xf32>
    %2 = tpu.matmul %0, %1, %cst {dimension_numbers = #tpu.dot_dimension_numbers<[1], [0], [0], [1], [0, 0, 1, 1], [], []>} : vector<62x128xbf16>, vector<128x256xbf16>, vector<62x256xf32> -> vector<62x256xf32>
    %c0_3 = arith.constant 0 : index
    %c0_4 = arith.constant 0 : index
    %3 = vector.load %arg2[%c0_3, %c0_4] : memref<1x256xf32, #tpu.memory_space<vmem>>, vector<1x256xf32>
    %4 = vector.broadcast %3 : vector<1x256xf32> to vector<62x256xf32>
    %5 = arith.addf %2, %4 : vector<62x256xf32>
    %cst_5 = arith.constant 0.000000e+00 : f32
    %6 = vector.broadcast %cst_5 : f32 to vector<62x256xf32>
    %7 = arith.maximumf %5, %6 : vector<62x256xf32>
    %c0_6 = arith.constant 0 : index
    %c0_7 = arith.constant 0 : index
    %8 = vector.load %arg3[%c0_6, %c0_7] : memref<1x256xf32, #tpu.memory_space<vmem>>, vector<1x256xf32>
    %9 = vector.broadcast %8 : vector<1x256xf32> to vector<62x256xf32>
    %10 = arith.mulf %7, %9 : vector<62x256xf32>
    %c0_8 = arith.constant 0 : index
    %c0_9 = arith.constant 0 : index
    %11 = vector.load %arg4[%c0_8, %c0_9] : memref<1x256xf32, #tpu.memory_space<vmem>>, vector<1x256xf32>
    %12 = vector.broadcast %11 : vector<1x256xf32> to vector<62x256xf32>
    %13 = arith.addf %10, %12 : vector<62x256xf32>
    %c0_10 = arith.constant 0 : index
    %c0_11 = arith.constant 0 : index
    %14 = vector.load %arg5[%c0_10, %c0_11] : memref<62x1xf32, #tpu.memory_space<vmem>>, vector<62x1xf32>
    %15 = vector.broadcast %14 : vector<62x1xf32> to vector<62x256xf32>
    %16 = arith.mulf %13, %15 : vector<62x256xf32>
    %c0_12 = arith.constant 0 : index
    %c0_13 = arith.constant 0 : index
    %17 = vector.load %arg19[%c0_12, %c0_13] : memref<62x256xf32, #tpu.memory_space<vmem>>, vector<62x256xf32>
    tpu.vector_store %arg19[%c0_12, %c0_13], %16 {strides = array<i32>} : memref<62x256xf32, #tpu.memory_space<vmem>>, vector<62x256xf32>,
    %c0_14 = arith.constant 0 : index
    %c0_15 = arith.constant 0 : index
    %18 = vector.load %arg19[%c0_14, %c0_15] : memref<62x256xf32, #tpu.memory_space<vmem>>, vector<60x256xf32>
    %19 = arith.truncf %18 : vector<60x256xf32> to vector<60x256xbf16>
    %c0_16 = arith.constant 0 : index
    %c0_17 = arith.constant 0 : index
    %c0_18 = arith.constant 0 : index
    %20 = vector.load %arg6[%c0_16, %c0_17, %c0_18] : memref<3x256x256xbf16, #tpu.memory_space<vmem>>, vector<1x256x256xbf16>
    %21 = vector.shape_cast %20 : vector<1x256x256xbf16> to vector<256x256xbf16>
    %cst_19 = arith.constant dense<0.000000e+00> : vector<60x256xf32>
    %22 = tpu.matmul %19, %21, %cst_19 {dimension_numbers = #tpu.dot_dimension_numbers<[1], [0], [0], [1], [0, 0, 1, 1], [], []>} : vector<60x256xbf16>, vector<256x256xbf16>, vector<60x256xf32> -> vector<60x256xf32>
    %c1 = arith.constant 1 : index
    %c0_20 = arith.constant 0 : index
    %23 = vector.load %arg19[%c1, %c0_20] : memref<62x256xf32, #tpu.memory_space<vmem>>, vector<60x256xf32>
    %24 = arith.truncf %23 : vector<60x256xf32> to vector<60x256xbf16>
    %c1_21 = arith.constant 1 : index
    %c0_22 = arith.constant 0 : index
    %c0_23 = arith.constant 0 : index
    %25 = vector.load %arg6[%c1_21, %c0_22, %c0_23] : memref<3x256x256xbf16, #tpu.memory_space<vmem>>, vector<1x256x256xbf16>
    %26 = vector.shape_cast %25 : vector<1x256x256xbf16> to vector<256x256xbf16>
    %cst_24 = arith.constant dense<0.000000e+00> : vector<60x256xf32>
    %27 = tpu.matmul %24, %26, %cst_24 {dimension_numbers = #tpu.dot_dimension_numbers<[1], [0], [0], [1], [0, 0, 1, 1], [], []>} : vector<60x256xbf16>, vector<256x256xbf16>, vector<60x256xf32> -> vector<60x256xf32>
    %28 = arith.addf %22, %27 : vector<60x256xf32>
    %c2 = arith.constant 2 : index
    %c0_25 = arith.constant 0 : index
    %29 = vector.load %arg19[%c2, %c0_25] : memref<62x256xf32, #tpu.memory_space<vmem>>, vector<60x256xf32>
    %30 = arith.truncf %29 : vector<60x256xf32> to vector<60x256xbf16>
    %c2_26 = arith.constant 2 : index
    %c0_27 = arith.constant 0 : index
    %c0_28 = arith.constant 0 : index
    %31 = vector.load %arg6[%c2_26, %c0_27, %c0_28] : memref<3x256x256xbf16, #tpu.memory_space<vmem>>, vector<1x256x256xbf16>
    %32 = vector.shape_cast %31 : vector<1x256x256xbf16> to vector<256x256xbf16>
    %cst_29 = arith.constant dense<0.000000e+00> : vector<60x256xf32>
    %33 = tpu.matmul %30, %32, %cst_29 {dimension_numbers = #tpu.dot_dimension_numbers<[1], [0], [0], [1], [0, 0, 1, 1], [], []>} : vector<60x256xbf16>, vector<256x256xbf16>, vector<60x256xf32> -> vector<60x256xf32>
    %34 = arith.addf %28, %33 : vector<60x256xf32>
    %c0_30 = arith.constant 0 : index
    %c0_31 = arith.constant 0 : index
    %35 = vector.load %arg7[%c0_30, %c0_31] : memref<1x256xf32, #tpu.memory_space<vmem>>, vector<1x256xf32>
    %36 = vector.broadcast %35 : vector<1x256xf32> to vector<60x256xf32>
    %37 = arith.addf %34, %36 : vector<60x256xf32>
    %cst_32 = arith.constant 0.000000e+00 : f32
    %38 = vector.broadcast %cst_32 : f32 to vector<60x256xf32>
    %39 = arith.maximumf %37, %38 : vector<60x256xf32>
    %c0_33 = arith.constant 0 : index
    %c0_34 = arith.constant 0 : index
    %40 = vector.load %arg8[%c0_33, %c0_34] : memref<1x256xf32, #tpu.memory_space<vmem>>, vector<1x256xf32>
    %41 = vector.broadcast %40 : vector<1x256xf32> to vector<60x256xf32>
    %42 = arith.mulf %39, %41 : vector<60x256xf32>
    %c0_35 = arith.constant 0 : index
    %c0_36 = arith.constant 0 : index
    %43 = vector.load %arg9[%c0_35, %c0_36] : memref<1x256xf32, #tpu.memory_space<vmem>>, vector<1x256xf32>
    %44 = vector.broadcast %43 : vector<1x256xf32> to vector<60x256xf32>
    %45 = arith.addf %42, %44 : vector<60x256xf32>
    %46 = arith.truncf %45 : vector<60x256xf32> to vector<60x256xbf16>
    %c0_37 = arith.constant 0 : index
    %c0_38 = arith.constant 0 : index
    %47 = vector.load %arg10[%c0_37, %c0_38] : memref<256x128xbf16, #tpu.memory_space<vmem>>, vector<256x128xbf16>
    %cst_39 = arith.constant dense<0.000000e+00> : vector<60x128xf32>
    %48 = tpu.matmul %46, %47, %cst_39 {dimension_numbers = #tpu.dot_dimension_numbers<[1], [0], [0], [1], [0, 0, 1, 1], [], []>} : vector<60x256xbf16>, vector<256x128xbf16>, vector<60x128xf32> -> vector<60x128xf32>
    %c0_40 = arith.constant 0 : index
    %c0_41 = arith.constant 0 : index
    %49 = vector.load %arg11[%c0_40, %c0_41] : memref<28x60xbf16, #tpu.memory_space<vmem>>, vector<28x60xbf16>
    %50 = arith.truncf %48 : vector<60x128xf32> to vector<60x128xbf16>
    %cst_42 = arith.constant dense<0.000000e+00> : vector<28x128xf32>
    %51 = tpu.matmul %49, %50, %cst_42 {dimension_numbers = #tpu.dot_dimension_numbers<[1], [0], [0], [1], [0, 0, 1, 1], [], []>} : vector<28x60xbf16>, vector<60x128xbf16>, vector<28x128xf32> -> vector<28x128xf32>
    %52 = vector.extract_strided_slice %51 {offsets = [0, 0], sizes = [2, 128], strides = [1, 1]} : vector<28x128xf32> to vector<2x128xf32>
    %c0_43 = arith.constant 0 : index
    %c0_44 = arith.constant 0 : index
    %53 = vector.load %arg20[%c0_43, %c0_44] : memref<2x1792xf32, #tpu.memory_space<vmem>>, vector<2x128xf32>
    tpu.vector_store %arg20[%c0_43, %c0_44], %52 {strides = array<i32>} : memref<2x1792xf32, #tpu.memory_space<vmem>>, vector<2x128xf32>,
    %54 = vector.extract_strided_slice %51 {offsets = [2, 0], sizes = [2, 128], strides = [1, 1]} : vector<28x128xf32> to vector<2x128xf32>
    %c0_45 = arith.constant 0 : index
    %c128 = arith.constant 128 : index
    %55 = vector.load %arg20[%c0_45, %c128] : memref<2x1792xf32, #tpu.memory_space<vmem>>, vector<2x128xf32>
    tpu.vector_store %arg20[%c0_45, %c128], %54 {strides = array<i32>} : memref<2x1792xf32, #tpu.memory_space<vmem>>, vector<2x128xf32>,
    %56 = vector.extract_strided_slice %51 {offsets = [4, 0], sizes = [2, 128], strides = [1, 1]} : vector<28x128xf32> to vector<2x128xf32>
    %c0_46 = arith.constant 0 : index
    %c256 = arith.constant 256 : index
    %57 = vector.load %arg20[%c0_46, %c256] : memref<2x1792xf32, #tpu.memory_space<vmem>>, vector<2x128xf32>
    tpu.vector_store %arg20[%c0_46, %c256], %56 {strides = array<i32>} : memref<2x1792xf32, #tpu.memory_space<vmem>>, vector<2x128xf32>,
    %58 = vector.extract_strided_slice %51 {offsets = [6, 0], sizes = [2, 128], strides = [1, 1]} : vector<28x128xf32> to vector<2x128xf32>
    %c0_47 = arith.constant 0 : index
    %c384 = arith.constant 384 : index
    %59 = vector.load %arg20[%c0_47, %c384] : memref<2x1792xf32, #tpu.memory_space<vmem>>, vector<2x128xf32>
    tpu.vector_store %arg20[%c0_47, %c384], %58 {strides = array<i32>} : memref<2x1792xf32, #tpu.memory_space<vmem>>, vector<2x128xf32>,
    %60 = vector.extract_strided_slice %51 {offsets = [8, 0], sizes = [2, 128], strides = [1, 1]} : vector<28x128xf32> to vector<2x128xf32>
    %c0_48 = arith.constant 0 : index
    %c512 = arith.constant 512 : index
    %61 = vector.load %arg20[%c0_48, %c512] : memref<2x1792xf32, #tpu.memory_space<vmem>>, vector<2x128xf32>
    tpu.vector_store %arg20[%c0_48, %c512], %60 {strides = array<i32>} : memref<2x1792xf32, #tpu.memory_space<vmem>>, vector<2x128xf32>,
    %62 = vector.extract_strided_slice %51 {offsets = [10, 0], sizes = [2, 128], strides = [1, 1]} : vector<28x128xf32> to vector<2x128xf32>
    %c0_49 = arith.constant 0 : index
    %c640 = arith.constant 640 : index
    %63 = vector.load %arg20[%c0_49, %c640] : memref<2x1792xf32, #tpu.memory_space<vmem>>, vector<2x128xf32>
    tpu.vector_store %arg20[%c0_49, %c640], %62 {strides = array<i32>} : memref<2x1792xf32, #tpu.memory_space<vmem>>, vector<2x128xf32>,
    %64 = vector.extract_strided_slice %51 {offsets = [12, 0], sizes = [2, 128], strides = [1, 1]} : vector<28x128xf32> to vector<2x128xf32>
    %c0_50 = arith.constant 0 : index
    %c768 = arith.constant 768 : index
    %65 = vector.load %arg20[%c0_50, %c768] : memref<2x1792xf32, #tpu.memory_space<vmem>>, vector<2x128xf32>
    tpu.vector_store %arg20[%c0_50, %c768], %64 {strides = array<i32>} : memref<2x1792xf32, #tpu.memory_space<vmem>>, vector<2x128xf32>,
    %66 = vector.extract_strided_slice %51 {offsets = [14, 0], sizes = [2, 128], strides = [1, 1]} : vector<28x128xf32> to vector<2x128xf32>
    %c0_51 = arith.constant 0 : index
    %c896 = arith.constant 896 : index
    %67 = vector.load %arg20[%c0_51, %c896] : memref<2x1792xf32, #tpu.memory_space<vmem>>, vector<2x128xf32>
    tpu.vector_store %arg20[%c0_51, %c896], %66 {strides = array<i32>} : memref<2x1792xf32, #tpu.memory_space<vmem>>, vector<2x128xf32>,
    %68 = vector.extract_strided_slice %51 {offsets = [16, 0], sizes = [2, 128], strides = [1, 1]} : vector<28x128xf32> to vector<2x128xf32>
    %c0_52 = arith.constant 0 : index
    %c1024 = arith.constant 1024 : index
    %69 = vector.load %arg20[%c0_52, %c1024] : memref<2x1792xf32, #tpu.memory_space<vmem>>, vector<2x128xf32>
    tpu.vector_store %arg20[%c0_52, %c1024], %68 {strides = array<i32>} : memref<2x1792xf32, #tpu.memory_space<vmem>>, vector<2x128xf32>,
    %70 = vector.extract_strided_slice %51 {offsets = [18, 0], sizes = [2, 128], strides = [1, 1]} : vector<28x128xf32> to vector<2x128xf32>
    %c0_53 = arith.constant 0 : index
    %c1152 = arith.constant 1152 : index
    %71 = vector.load %arg20[%c0_53, %c1152] : memref<2x1792xf32, #tpu.memory_space<vmem>>, vector<2x128xf32>
    tpu.vector_store %arg20[%c0_53, %c1152], %70 {strides = array<i32>} : memref<2x1792xf32, #tpu.memory_space<vmem>>, vector<2x128xf32>,
    %72 = vector.extract_strided_slice %51 {offsets = [20, 0], sizes = [2, 128], strides = [1, 1]} : vector<28x128xf32> to vector<2x128xf32>
    %c0_54 = arith.constant 0 : index
    %c1280 = arith.constant 1280 : index
    %73 = vector.load %arg20[%c0_54, %c1280] : memref<2x1792xf32, #tpu.memory_space<vmem>>, vector<2x128xf32>
    tpu.vector_store %arg20[%c0_54, %c1280], %72 {strides = array<i32>} : memref<2x1792xf32, #tpu.memory_space<vmem>>, vector<2x128xf32>,
    %74 = vector.extract_strided_slice %51 {offsets = [22, 0], sizes = [2, 128], strides = [1, 1]} : vector<28x128xf32> to vector<2x128xf32>
    %c0_55 = arith.constant 0 : index
    %c1408 = arith.constant 1408 : index
    %75 = vector.load %arg20[%c0_55, %c1408] : memref<2x1792xf32, #tpu.memory_space<vmem>>, vector<2x128xf32>
    tpu.vector_store %arg20[%c0_55, %c1408], %74 {strides = array<i32>} : memref<2x1792xf32, #tpu.memory_space<vmem>>, vector<2x128xf32>,
    %76 = vector.extract_strided_slice %51 {offsets = [24, 0], sizes = [2, 128], strides = [1, 1]} : vector<28x128xf32> to vector<2x128xf32>
    %c0_56 = arith.constant 0 : index
    %c1536 = arith.constant 1536 : index
    %77 = vector.load %arg20[%c0_56, %c1536] : memref<2x1792xf32, #tpu.memory_space<vmem>>, vector<2x128xf32>
    tpu.vector_store %arg20[%c0_56, %c1536], %76 {strides = array<i32>} : memref<2x1792xf32, #tpu.memory_space<vmem>>, vector<2x128xf32>,
    %78 = vector.extract_strided_slice %51 {offsets = [26, 0], sizes = [2, 128], strides = [1, 1]} : vector<28x128xf32> to vector<2x128xf32>
    %c0_57 = arith.constant 0 : index
    %c1664 = arith.constant 1664 : index
    %79 = vector.load %arg20[%c0_57, %c1664] : memref<2x1792xf32, #tpu.memory_space<vmem>>, vector<2x128xf32>
    tpu.vector_store %arg20[%c0_57, %c1664], %78 {strides = array<i32>} : memref<2x1792xf32, #tpu.memory_space<vmem>>, vector<2x128xf32>,
    %c0_58 = arith.constant 0 : index
    %c0_59 = arith.constant 0 : index
    %80 = vector.load %arg20[%c0_58, %c0_59] : memref<2x1792xf32, #tpu.memory_space<vmem>>, vector<2x1792xf32>
    %81 = arith.truncf %80 : vector<2x1792xf32> to vector<2x1792xbf16>
    %c0_60 = arith.constant 0 : index
    %c0_61 = arith.constant 0 : index
    %82 = vector.load %arg12[%c0_60, %c0_61] : memref<1792x512xbf16, #tpu.memory_space<vmem>>, vector<1792x512xbf16>
    %cst_62 = arith.constant dense<0.000000e+00> : vector<2x512xf32>
    %83 = tpu.matmul %81, %82, %cst_62 {dimension_numbers = #tpu.dot_dimension_numbers<[1], [0], [0], [1], [0, 0, 1, 1], [], []>} : vector<2x1792xbf16>, vector<1792x512xbf16>, vector<2x512xf32> -> vector<2x512xf32>
    %c0_63 = arith.constant 0 : index
    %c0_64 = arith.constant 0 : index
    %84 = vector.load %arg13[%c0_63, %c0_64] : memref<1x512xf32, #tpu.memory_space<vmem>>, vector<1x512xf32>
    %85 = vector.broadcast %84 : vector<1x512xf32> to vector<2x512xf32>
    %86 = arith.addf %83, %85 : vector<2x512xf32>
    %cst_65 = arith.constant 0.000000e+00 : f32
    %87 = vector.broadcast %cst_65 : f32 to vector<2x512xf32>
    %88 = arith.maximumf %86, %87 : vector<2x512xf32>
    %89 = arith.truncf %88 : vector<2x512xf32> to vector<2x512xbf16>
    %c0_66 = arith.constant 0 : index
    %c0_67 = arith.constant 0 : index
    %90 = vector.load %arg14[%c0_66, %c0_67] : memref<512x256xbf16, #tpu.memory_space<vmem>>, vector<512x256xbf16>
    %cst_68 = arith.constant dense<0.000000e+00> : vector<2x256xf32>
    %91 = tpu.matmul %89, %90, %cst_68 {dimension_numbers = #tpu.dot_dimension_numbers<[1], [0], [0], [1], [0, 0, 1, 1], [], []>} : vector<2x512xbf16>, vector<512x256xbf16>, vector<2x256xf32> -> vector<2x256xf32>
    %c0_69 = arith.constant 0 : index
    %c0_70 = arith.constant 0 : index
    %92 = vector.load %arg15[%c0_69, %c0_70] : memref<1x256xf32, #tpu.memory_space<vmem>>, vector<1x256xf32>
    %93 = vector.broadcast %92 : vector<1x256xf32> to vector<2x256xf32>
    %94 = arith.addf %91, %93 : vector<2x256xf32>
    %cst_71 = arith.constant 0.000000e+00 : f32
    %95 = vector.broadcast %cst_71 : f32 to vector<2x256xf32>
    %96 = arith.maximumf %94, %95 : vector<2x256xf32>
    %97 = arith.truncf %96 : vector<2x256xf32> to vector<2x256xbf16>
    %c0_72 = arith.constant 0 : index
    %c0_73 = arith.constant 0 : index
    %98 = vector.load %arg16[%c0_72, %c0_73] : memref<256x26xbf16, #tpu.memory_space<vmem>>, vector<256x26xbf16>
    %cst_74 = arith.constant dense<0.000000e+00> : vector<2x26xf32>
    %99 = tpu.matmul %97, %98, %cst_74 {dimension_numbers = #tpu.dot_dimension_numbers<[1], [0], [0], [1], [0, 0, 1, 1], [], []>} : vector<2x256xbf16>, vector<256x26xbf16>, vector<2x26xf32> -> vector<2x26xf32>
    %c0_75 = arith.constant 0 : index
    %c0_76 = arith.constant 0 : index
    %100 = vector.load %arg17[%c0_75, %c0_76] : memref<1x26xf32, #tpu.memory_space<vmem>>, vector<1x26xf32>
    %101 = vector.broadcast %100 : vector<1x26xf32> to vector<2x26xf32>
    %102 = arith.addf %99, %101 : vector<2x26xf32>
    %c0_77 = arith.constant 0 : index
    %c0_78 = arith.constant 0 : index
    %103 = vector.load %arg18[%c0_77, %c0_78] : memref<2x26xf32, #tpu.memory_space<vmem>>, vector<2x26xf32>
    tpu.vector_store %arg18[%c0_77, %c0_78], %102 {strides = array<i32>} : memref<2x26xf32, #tpu.memory_space<vmem>>, vector<2x26xf32>,
    return
  }
}

</mosaic_0001>

<llo_original>
// kernel: cnn_forward.1
$region0: #{cnn_forward.1}
  #allocation0 [shape = 'u32[]', space=smem, size = 0x4, offset = 0x4, fixed_abs, tag = 'smem constant byte address 0x4 - core index']
  #allocation1 [shape = 'u32[72,128]{1,0:T(1,128)}', space=vmem, size = 0x9000, scoped, tag = 'internal scratch']
  #allocation2 [shape = 'f32[62,256]{1,0:T(8,128)}', space=vmem, size = 0x10000, scoped, tag = 'scratch operand']
  #allocation3 [shape = 'f32[2,1792]{1,0:T(2,128)}', space=vmem, size = 0x3800, scoped, tag = 'scratch operand']
  %s0 = inlined_call_operand.vmem [shape: bf16[62,128], index: 0, kind: input, shape index: {}]
  %s1 = inlined_call_operand.hbm [shape: bf16[128,256], index: 1, kind: input, shape index: {}]
  %s2 = inlined_call_operand.hbm [shape: f32[1,256], index: 2, kind: input, shape index: {}]
  %s3 = inlined_call_operand.hbm [shape: f32[1,256], index: 3, kind: input, shape index: {}]
  %s4 = inlined_call_operand.hbm [shape: f32[1,256], index: 4, kind: input, shape index: {}]
  %s5 = inlined_call_operand.vmem [shape: f32[62,1], index: 5, kind: input, shape index: {}]
  %s6 = inlined_call_operand.hbm [shape: bf16[3,256,256], index: 6, kind: input, shape index: {}]
  %s7 = inlined_call_operand.hbm [shape: f32[1,256], index: 7, kind: input, shape index: {}]
  %s8 = inlined_call_operand.hbm [shape: f32[1,256], index: 8, kind: input, shape index: {}]
  %s9 = inlined_call_operand.hbm [shape: f32[1,256], index: 9, kind: input, shape index: {}]
  %s10 = inlined_call_operand.hbm [shape: bf16[256,128], index: 10, kind: input, shape index: {}]
  %s11 = inlined_call_operand.hbm [shape: bf16[28,60], index: 11, kind: input, shape index: {}]
  %s12 = inlined_call_operand.hbm [shape: bf16[1792,512], index: 12, kind: input, shape index: {}]
  %s13 = inlined_call_operand.hbm [shape: f32[1,512], index: 13, kind: input, shape index: {}]
  %s14 = inlined_call_operand.hbm [shape: bf16[512,256], index: 14, kind: input, shape index: {}]
  %s15 = inlined_call_operand.hbm [shape: f32[1,256], index: 15, kind: input, shape index: {}]
  %s16 = inlined_call_operand.vmem [shape: bf16[256,26], index: 16, kind: input, shape index: {}]
  %s17 = inlined_call_operand.hbm [shape: f32[1,26], index: 17, kind: input, shape index: {}]
  %s18 = inlined_call_operand.hbm [shape: f32[2,26], index: 18, kind: output, shape index: {}]
  %s19 = sld [smem:[#allocation0]]
  $region142: #{cnn_forward.1} parent=0
    _
  %s21 = ssub.s32 1, %s19
  %s22 = scalar_select 0, %s21, %s19
  $region1: #{cnn_forward.1} parent=0
    #allocation4 [shape = 'u8[65536]{0}', space=vmem, size = 0x10000, scoped, tag = 'input window, operand 1, single buffered']
    #allocation5 [shape = 's32[1]{0}', space=sflag, size = 0x4, scoped, tag = 'scoped memory for cnn_forward.1']
    #allocation6 [shape = 's32[1]{0}', space=sflag, size = 0x4, scoped, tag = 'scoped memory for cnn_forward.1']
    #allocation7 [shape = 'u8[1024]{0}', space=vmem, size = 0x400, scoped, tag = 'input window, operand 2, single buffered']
    #allocation8 [shape = 's32[1]{0}', space=sflag, size = 0x4, scoped, tag = 'scoped memory for cnn_forward.1']
    #allocation9 [shape = 'u8[1024]{0}', space=vmem, size = 0x400, scoped, tag = 'input window, operand 3, single buffered']
    #allocation10 [shape = 'u8[1024]{0}', space=vmem, size = 0x400, scoped, tag = 'input window, operand 4, single buffered']
    #allocation11 [shape = 's32[1]{0}', space=sflag, size = 0x4, scoped, tag = 'scoped memory for cnn_forward.1']
    #allocation12 [shape = 'u8[393216]{0}', space=vmem, size = 0x60000, scoped, tag = 'input window, operand 6, single buffered']
    #allocation13 [shape = 'u8[1024]{0}', space=vmem, size = 0x400, scoped, tag = 'input window, operand 7, single buffered']
    #allocation14 [shape = 's32[1]{0}', space=sflag, size = 0x4, scoped, tag = 'scoped memory for cnn_forward.1']
    #allocation15 [shape = 'u8[1024]{0}', space=vmem, size = 0x400, scoped, tag = 'input window, operand 8, single buffered']
    #allocation16 [shape = 'u8[1024]{0}', space=vmem, size = 0x400, scoped, tag = 'input window, operand 9, single buffered']
    #allocation17 [shape = 's32[1]{0}', space=sflag, size = 0x4, scoped, tag = 'scoped memory for cnn_forward.1']
    #allocation18 [shape = 'u8[65536]{0}', space=vmem, size = 0x10000, scoped, tag = 'input window, operand 10, single buffered']
    #allocation19 [shape = 'u8[8192]{0}', space=vmem, size = 0x2000, scoped, tag = 'input window, operand 11, single buffered']
    #allocation20 [shape = 's32[1]{0}', space=sflag, size = 0x4, scoped, tag = 'scoped memory for cnn_forward.1']
    #allocation21 [shape = 'u8[1835008]{0}', space=vmem, size = 0x1c0000, scoped, tag = 'input window, operand 12, single buffered']
    #allocation22 [shape = 'u8[2048]{0}', space=vmem, size = 0x800, scoped, tag = 'input window, operand 13, single buffered']
    #allocation23 [shape = 's32[1]{0}', space=sflag, size = 0x4, scoped, tag = 'scoped memory for cnn_forward.1']
    #allocation24 [shape = 'u8[262144]{0}', space=vmem, size = 0x40000, scoped, tag = 'input window, operand 14, single buffered']
    #allocation25 [shape = 'u8[1024]{0}', space=vmem, size = 0x400, scoped, tag = 'input window, operand 15, single buffered']
    #allocation26 [shape = 's32[1]{0}', space=sflag, size = 0x4, scoped, tag = 'scoped memory for cnn_forward.1']
    #allocation27 [shape = 'u8[512]{0}', space=vmem, size = 0x400, scoped, tag = 'input window, operand 17, single buffered']
    #allocation28 [shape = 'u8[1024]{0}', space=vmem, size = 0x400, scoped, tag = 'output window, operand 0, single buffered']
    %23 = vsyncpa [#allocation5], 0
    %24 = vsyncpa [#allocation8], 0
    %25 = vsyncpa [#allocation11], 0
    %26 = vsyncpa [#allocation14], 0
    %27 = vsyncpa [#allocation17], 0
    %28 = vsyncpa [#allocation20], 0
    %29 = vsyncpa [#allocation23], 0
    %30 = vsyncpa [#allocation26], 0
    %31 = vsyncpa [#allocation6], 0
    // Predicated region
    $region2: #{cnn_forward.1} parent=1 // pred_check
      _
    $region3: #{cnn_forward.1} parent=1 // pred_check_branch
      %33 = sbr.rel (0) target = $region5
    $region4: #{cnn_forward.1} parent=1 // pred_region
      _
    $region5: #{cnn_forward.1} parent=1 // pred_fallthru
      _
    // Predicated region
    $region6: #{cnn_forward.1} parent=1 // pred_check
      _
    $region7: #{cnn_forward.1} parent=1 // pred_check_branch
      %35 = sbr.rel (0) target = $region9
    $region8: #{cnn_forward.1} parent=1 // pred_region
      %37 = vsyncadd [#allocation5], 0
      %s38 = sshll.u32 %s1, 4
      %s39 = int_to_ptr.hbm [resolvable:$true] %s38
      %s40 = sshll.u32 [#allocation4], 4
      %s41 = int_to_ptr.vmem [resolvable:$true] %s40
      %46 = dma.hbm_to_vmem [thread:$0]  %s39, 2048, %s41, [#allocation5], 128, 128, 8
    $region9: #{cnn_forward.1} parent=1 // pred_fallthru
      _
    // Predicated region
    $region10: #{cnn_forward.1} parent=1 // pred_check
      _
    $region11: #{cnn_forward.1} parent=1 // pred_check_branch
      %48 = sbr.rel (0) target = $region13
    $region12: #{cnn_forward.1} parent=1 // pred_region
      %50 = vsyncadd [#allocation8], 0
      %s52 = sshll.u32 %s2, 4
      %s53 = int_to_ptr.hbm [resolvable:$true] %s52
      %s54 = sshll.u32 [#allocation7], 4
      %s55 = int_to_ptr.vmem [resolvable:$true] %s54
      %57 = dma.hbm_to_vmem [thread:$0]  %s53, 32, %s55, [#allocation8]
    $region13: #{cnn_forward.1} parent=1 // pred_fallthru
      _
    // Predicated region
    $region14: #{cnn_forward.1} parent=1 // pred_check
      _
    $region15: #{cnn_forward.1} parent=1 // pred_check_branch
      %59 = sbr.rel (0) target = $region17
    $region16: #{cnn_forward.1} parent=1 // pred_region
      %61 = vsyncadd [#allocation8], 0
      %s63 = sshll.u32 %s3, 4
      %s64 = int_to_ptr.hbm [resolvable:$true] %s63
      %s65 = sshll.u32 [#allocation9], 4
      %s66 = int_to_ptr.vmem [resolvable:$true] %s65
      %68 = dma.hbm_to_vmem [thread:$0]  %s64, 32, %s66, [#allocation8]
    $region17: #{cnn_forward.1} parent=1 // pred_fallthru
      _
    // Predicated region
    $region18: #{cnn_forward.1} parent=1 // pred_check
      _
    $region19: #{cnn_forward.1} parent=1 // pred_check_branch
      %70 = sbr.rel (0) target = $region21
    $region20: #{cnn_forward.1} parent=1 // pred_region
      %72 = vsyncadd [#allocation11], 0
      %s74 = sshll.u32 %s4, 4
      %s75 = int_to_ptr.hbm [resolvable:$true] %s74
      %s76 = sshll.u32 [#allocation10], 4
      %s77 = int_to_ptr.vmem [resolvable:$true] %s76
      %79 = dma.hbm_to_vmem [thread:$0]  %s75, 32, %s77, [#allocation11]
    $region21: #{cnn_forward.1} parent=1 // pred_fallthru
      _
    // Predicated region
    $region22: #{cnn_forward.1} parent=1 // pred_check
      _
    $region23: #{cnn_forward.1} parent=1 // pred_check_branch
      %81 = sbr.rel (0) target = $region25
    $region24: #{cnn_forward.1} parent=1 // pred_region
      _
    $region25: #{cnn_forward.1} parent=1 // pred_fallthru
      _
    // Predicated region
    $region26: #{cnn_forward.1} parent=1 // pred_check
      _
    $region27: #{cnn_forward.1} parent=1 // pred_check_branch
      %83 = sbr.rel (0) target = $region29
    $region28: #{cnn_forward.1} parent=1 // pred_region
      %85 = vsyncadd [#allocation11], 0
      %s86 = sshll.u32 %s6, 4
      %s87 = int_to_ptr.hbm [resolvable:$true] %s86
      %s88 = sshll.u32 [#allocation12], 4
      %s89 = int_to_ptr.vmem [resolvable:$true] %s88
      %94 = dma.hbm_to_vmem [thread:$0]  %s87, 12288, %s89, [#allocation11], 128, 128, 8
    $region29: #{cnn_forward.1} parent=1 // pred_fallthru
      _
    // Predicated region
    $region30: #{cnn_forward.1} parent=1 // pred_check
      _
    $region31: #{cnn_forward.1} parent=1 // pred_check_branch
      %96 = sbr.rel (0) target = $region33
    $region32: #{cnn_forward.1} parent=1 // pred_region
      %98 = vsyncadd [#allocation14], 0
      %s100 = sshll.u32 %s7, 4
      %s101 = int_to_ptr.hbm [resolvable:$true] %s100
      %s102 = sshll.u32 [#allocation13], 4
      %s103 = int_to_ptr.vmem [resolvable:$true] %s102
      %105 = dma.hbm_to_vmem [thread:$0]  %s101, 32, %s103, [#allocation14]
    $region33: #{cnn_forward.1} parent=1 // pred_fallthru
      _
    // Predicated region
    $region34: #{cnn_forward.1} parent=1 // pred_check
      _
    $region35: #{cnn_forward.1} parent=1 // pred_check_branch
      %107 = sbr.rel (0) target = $region37
    $region36: #{cnn_forward.1} parent=1 // pred_region
      %109 = vsyncadd [#allocation14], 0
      %s111 = sshll.u32 %s8, 4
      %s112 = int_to_ptr.hbm [resolvable:$true] %s111
      %s113 = sshll.u32 [#allocation15], 4
      %s114 = int_to_ptr.vmem [resolvable:$true] %s113
      %116 = dma.hbm_to_vmem [thread:$0]  %s112, 32, %s114, [#allocation14]
    $region37: #{cnn_forward.1} parent=1 // pred_fallthru
      _
    // Predicated region
    $region38: #{cnn_forward.1} parent=1 // pred_check
      _
    $region39: #{cnn_forward.1} parent=1 // pred_check_branch
      %118 = sbr.rel (0) target = $region41
    $region40: #{cnn_forward.1} parent=1 // pred_region
      %120 = vsyncadd [#allocation17], 0
      %s122 = sshll.u32 %s9, 4
      %s123 = int_to_ptr.hbm [resolvable:$true] %s122
      %s124 = sshll.u32 [#allocation16], 4
      %s125 = int_to_ptr.vmem [resolvable:$true] %s124
      %127 = dma.hbm_to_vmem [thread:$0]  %s123, 32, %s125, [#allocation17]
    $region41: #{cnn_forward.1} parent=1 // pred_fallthru
      _
    // Predicated region
    $region42: #{cnn_forward.1} parent=1 // pred_check
      _
    $region43: #{cnn_forward.1} parent=1 // pred_check_branch
      %129 = sbr.rel (0) target = $region45
    $region44: #{cnn_forward.1} parent=1 // pred_region
      %131 = vsyncadd [#allocation17], 0
      %s132 = sshll.u32 %s10, 4
      %s133 = int_to_ptr.hbm [resolvable:$true] %s132
      %s134 = sshll.u32 [#allocation18], 4
      %s135 = int_to_ptr.vmem [resolvable:$true] %s134
      %140 = dma.hbm_to_vmem [thread:$0]  %s133, 2048, %s135, [#allocation17], 64, 64, 4
    $region45: #{cnn_forward.1} parent=1 // pred_fallthru
      _
    // Predicated region
    $region46: #{cnn_forward.1} parent=1 // pred_check
      _
    $region47: #{cnn_forward.1} parent=1 // pred_check_branch
      %142 = sbr.rel (0) target = $region49
    $region48: #{cnn_forward.1} parent=1 // pred_region
      %144 = vsyncadd [#allocation20], 0
      %s145 = sshll.u32 %s11, 4
      %s146 = int_to_ptr.hbm [resolvable:$true] %s145
      %s147 = sshll.u32 [#allocation19], 4
      %s148 = int_to_ptr.vmem [resolvable:$true] %s147
      %153 = dma.hbm_to_vmem [thread:$0]  %s146, 256, %s148, [#allocation20], 64, 64, 4
    $region49: #{cnn_forward.1} parent=1 // pred_fallthru
      _
    // Predicated region
    $region50: #{cnn_forward.1} parent=1 // pred_check
      _
    $region51: #{cnn_forward.1} parent=1 // pred_check_branch
      %155 = sbr.rel (0) target = $region53
    $region52: #{cnn_forward.1} parent=1 // pred_region
      %157 = vsyncadd [#allocation20], 0
      %s158 = sshll.u32 %s12, 4
      %s159 = int_to_ptr.hbm [resolvable:$true] %s158
      %s160 = sshll.u32 [#allocation21], 4
      %s161 = int_to_ptr.vmem [resolvable:$true] %s160
      %166 = dma.hbm_to_vmem [thread:$0]  %s159, 57344, %s161, [#allocation20], 256, 256, 16
    $region53: #{cnn_forward.1} parent=1 // pred_fallthru
      _
    // Predicated region
    $region54: #{cnn_forward.1} parent=1 // pred_check
      _
    $region55: #{cnn_forward.1} parent=1 // pred_check_branch
      %168 = sbr.rel (0) target = $region57
    $region56: #{cnn_forward.1} parent=1 // pred_region
      %170 = vsyncadd [#allocation23], 0
      %s172 = sshll.u32 %s13, 4
      %s173 = int_to_ptr.hbm [resolvable:$true] %s172
      %s174 = sshll.u32 [#allocation22], 4
      %s175 = int_to_ptr.vmem [resolvable:$true] %s174
      %177 = dma.hbm_to_vmem [thread:$0]  %s173, 64, %s175, [#allocation23]
    $region57: #{cnn_forward.1} parent=1 // pred_fallthru
      _
    // Predicated region
    $region58: #{cnn_forward.1} parent=1 // pred_check
      _
    $region59: #{cnn_forward.1} parent=1 // pred_check_branch
      %179 = sbr.rel (0) target = $region61
    $region60: #{cnn_forward.1} parent=1 // pred_region
      %181 = vsyncadd [#allocation23], 0
      %s182 = sshll.u32 %s14, 4
      %s183 = int_to_ptr.hbm [resolvable:$true] %s182
      %s184 = sshll.u32 [#allocation24], 4
      %s185 = int_to_ptr.vmem [resolvable:$true] %s184
      %190 = dma.hbm_to_vmem [thread:$0]  %s183, 8192, %s185, [#allocation23], 128, 128, 8
    $region61: #{cnn_forward.1} parent=1 // pred_fallthru
      _
    // Predicated region
    $region62: #{cnn_forward.1} parent=1 // pred_check
      _
    $region63: #{cnn_forward.1} parent=1 // pred_check_branch
      %192 = sbr.rel (0) target = $region65
    $region64: #{cnn_forward.1} parent=1 // pred_region
      %194 = vsyncadd [#allocation26], 0
      %s196 = sshll.u32 %s15, 4
      %s197 = int_to_ptr.hbm [resolvable:$true] %s196
      %s198 = sshll.u32 [#allocation25], 4
      %s199 = int_to_ptr.vmem [resolvable:$true] %s198
      %201 = dma.hbm_to_vmem [thread:$0]  %s197, 32, %s199, [#allocation26]
    $region65: #{cnn_forward.1} parent=1 // pred_fallthru
      _
    // Predicated region
    $region66: #{cnn_forward.1} parent=1 // pred_check
      _
    $region67: #{cnn_forward.1} parent=1 // pred_check_branch
      %203 = sbr.rel (0) target = $region69
    $region68: #{cnn_forward.1} parent=1 // pred_region
      _
    $region69: #{cnn_forward.1} parent=1 // pred_fallthru
      _
    // Predicated region
    $region70: #{cnn_forward.1} parent=1 // pred_check
      _
    $region71: #{cnn_forward.1} parent=1 // pred_check_branch
      %205 = sbr.rel (0) target = $region73
    $region72: #{cnn_forward.1} parent=1 // pred_region
      %207 = vsyncadd [#allocation26], 0
      %s209 = sshll.u32 %s17, 4
      %s210 = int_to_ptr.hbm [resolvable:$true] %s209
      %s211 = sshll.u32 [#allocation27], 4
      %s212 = int_to_ptr.vmem [resolvable:$true] %s211
      %214 = dma.hbm_to_vmem [thread:$0]  %s210, 16, %s212, [#allocation26]
    $region73: #{cnn_forward.1} parent=1 // pred_fallthru
      _
    // Predicated region
    $region74: #{cnn_forward.1} parent=1 // pred_check
      _
    $region75: #{cnn_forward.1} parent=1 // pred_check_branch
      %216 = sbr.rel (0) target = $region77
    $region76: #{cnn_forward.1} parent=1 // pred_region
      %218 = dma.done [#allocation5], 2048
    $region77: #{cnn_forward.1} parent=1 // pred_fallthru
      _
    // Predicated region
    $region78: #{cnn_forward.1} parent=1 // pred_check
      _
    $region79: #{cnn_forward.1} parent=1 // pred_check_branch
      %220 = sbr.rel (0) target = $region81
    $region80: #{cnn_forward.1} parent=1 // pred_region
      %222 = dma.done [#allocation8], 32
    $region81: #{cnn_forward.1} parent=1 // pred_fallthru
      _
    // Predicated region
    $region82: #{cnn_forward.1} parent=1 // pred_check
      _
    $region83: #{cnn_forward.1} parent=1 // pred_check_branch
      %224 = sbr.rel (0) target = $region85
    $region84: #{cnn_forward.1} parent=1 // pred_region
      %226 = dma.done [#allocation8], 32
    $region85: #{cnn_forward.1} parent=1 // pred_fallthru
      _
    // Predicated region
    $region86: #{cnn_forward.1} parent=1 // pred_check
      _
    $region87: #{cnn_forward.1} parent=1 // pred_check_branch
      %228 = sbr.rel (0) target = $region89
    $region88: #{cnn_forward.1} parent=1 // pred_region
      %230 = dma.done [#allocation11], 32
    $region89: #{cnn_forward.1} parent=1 // pred_fallthru
      _
    // Predicated region
    $region90: #{cnn_forward.1} parent=1 // pred_check
      _
    $region91: #{cnn_forward.1} parent=1 // pred_check_branch
      %232 = sbr.rel (0) target = $region93
    $region92: #{cnn_forward.1} parent=1 // pred_region
      %234 = dma.done [#allocation11], 12288
    $region93: #{cnn_forward.1} parent=1 // pred_fallthru
      _
    // Predicated region
    $region94: #{cnn_forward.1} parent=1 // pred_check
      _
    $region95: #{cnn_forward.1} parent=1 // pred_check_branch
      %236 = sbr.rel (0) target = $region97
    $region96: #{cnn_forward.1} parent=1 // pred_region
      %238 = dma.done [#allocation14], 32
    $region97: #{cnn_forward.1} parent=1 // pred_fallthru
      _
    // Predicated region
    $region98: #{cnn_forward.1} parent=1 // pred_check
      _
    $region99: #{cnn_forward.1} parent=1 // pred_check_branch
      %240 = sbr.rel (0) target = $region101
    $region100: #{cnn_forward.1} parent=1 // pred_region
      %242 = dma.done [#allocation14], 32
    $region101: #{cnn_forward.1} parent=1 // pred_fallthru
      _
    // Predicated region
    $region102: #{cnn_forward.1} parent=1 // pred_check
      _
    $region103: #{cnn_forward.1} parent=1 // pred_check_branch
      %244 = sbr.rel (0) target = $region105
    $region104: #{cnn_forward.1} parent=1 // pred_region
      %246 = dma.done [#allocation17], 32
    $region105: #{cnn_forward.1} parent=1 // pred_fallthru
      _
    // Predicated region
    $region106: #{cnn_forward.1} parent=1 // pred_check
      _
    $region107: #{cnn_forward.1} parent=1 // pred_check_branch
      %248 = sbr.rel (0) target = $region109
    $region108: #{cnn_forward.1} parent=1 // pred_region
      %250 = dma.done [#allocation17], 2048
    $region109: #{cnn_forward.1} parent=1 // pred_fallthru
      _
    // Predicated region
    $region110: #{cnn_forward.1} parent=1 // pred_check
      _
    $region111: #{cnn_forward.1} parent=1 // pred_check_branch
      %252 = sbr.rel (0) target = $region113
    $region112: #{cnn_forward.1} parent=1 // pred_region
      %254 = dma.done [#allocation20], 256
    $region113: #{cnn_forward.1} parent=1 // pred_fallthru
      _
    // Predicated region
    $region114: #{cnn_forward.1} parent=1 // pred_check
      _
    $region115: #{cnn_forward.1} parent=1 // pred_check_branch
      %256 = sbr.rel (0) target = $region117
    $region116: #{cnn_forward.1} parent=1 // pred_region
      %258 = dma.done [#allocation20], 57344
    $region117: #{cnn_forward.1} parent=1 // pred_fallthru
      _
    // Predicated region
    $region118: #{cnn_forward.1} parent=1 // pred_check
      _
    $region119: #{cnn_forward.1} parent=1 // pred_check_branch
      %260 = sbr.rel (0) target = $region121
    $region120: #{cnn_forward.1} parent=1 // pred_region
      %262 = dma.done [#allocation23], 64
    $region121: #{cnn_forward.1} parent=1 // pred_fallthru
      _
    // Predicated region
    $region122: #{cnn_forward.1} parent=1 // pred_check
      _
    $region123: #{cnn_forward.1} parent=1 // pred_check_branch
      %264 = sbr.rel (0) target = $region125
    $region124: #{cnn_forward.1} parent=1 // pred_region
      %266 = dma.done [#allocation23], 8192
    $region125: #{cnn_forward.1} parent=1 // pred_fallthru
      _
    // Predicated region
    $region126: #{cnn_forward.1} parent=1 // pred_check
      _
    $region127: #{cnn_forward.1} parent=1 // pred_check_branch
      %268 = sbr.rel (0) target = $region129
    $region128: #{cnn_forward.1} parent=1 // pred_region
      %270 = dma.done [#allocation26], 32
    $region129: #{cnn_forward.1} parent=1 // pred_fallthru
      _
    // Predicated region
    $region130: #{cnn_forward.1} parent=1 // pred_check
      _
    $region131: #{cnn_forward.1} parent=1 // pred_check_branch
      %272 = sbr.rel (0) target = $region133
    $region132: #{cnn_forward.1} parent=1 // pred_region
      %274 = dma.done [#allocation26], 16
    $region133: #{cnn_forward.1} parent=1 // pred_fallthru
      _
    %v276 = vld [vmem:[%s0] sm:$0xf]
    %v277 = vld [vmem:[%s0 + $0x4] sm:$0xf]
    %v278 = vld [vmem:[%s0 + $0x8] sm:$0xf]
    %v279 = vld [vmem:[%s0 + $0xc] sm:$0xf]
    %v280 = vld [vmem:[%s0 + $0x10] sm:$0xf]
    %v281 = vld [vmem:[%s0 + $0x14] sm:$0xf]
    %v282 = vld [vmem:[%s0 + $0x18] sm:$0xf]
    %v283 = vld [vmem:[%s0 + $0x1c] sm:$0x7]
    %v284 = vld [vmem:[#allocation4] sm:$0xff]
    %v285 = vld [vmem:[#allocation4 + $0x8] sm:$0xff]
    %v286 = vld [vmem:[#allocation4 + $0x10] sm:$0xff]
    %v287 = vld [vmem:[#allocation4 + $0x18] sm:$0xff]
    %v288 = vld [vmem:[#allocation4 + $0x20] sm:$0xff]
    %v289 = vld [vmem:[#allocation4 + $0x28] sm:$0xff]
    %v290 = vld [vmem:[#allocation4 + $0x30] sm:$0xff]
    %v291 = vld [vmem:[#allocation4 + $0x38] sm:$0xff]
    %v292 = vld [vmem:[#allocation4 + $0x40] sm:$0xff]
    %v293 = vld [vmem:[#allocation4 + $0x48] sm:$0xff]
    %v294 = vld [vmem:[#allocation4 + $0x50] sm:$0xff]
    %v295 = vld [vmem:[#allocation4 + $0x58] sm:$0xff]
    %v296 = vld [vmem:[#allocation4 + $0x60] sm:$0xff]
    %v297 = vld [vmem:[#allocation4 + $0x68] sm:$0xff]
    %v298 = vld [vmem:[#allocation4 + $0x70] sm:$0xff]
    %v299 = vld [vmem:[#allocation4 + $0x78] sm:$0xff]
    %v300 = vld [vmem:[#allocation7] sm:$0x3]
    %v302 = vperm.slane %v300, 0
    %v303 = vperm.slane %v300, 1
    %v314 = vunpack.c.l.b16 %v276
    %v315 = vunpack.c.l.b16 %v277
    %v316 = vunpack.c.l.b16 %v278
    %v317 = vunpack.c.l.b16 %v279
    %v318 = vunpack.c.l.b16 %v280
    %v319 = vunpack.c.l.b16 %v281
    %v320 = vunpack.c.l.b16 %v282
    %v321 = vunpack.c.l.b16 %v283
    %v322 = vpack.c.b16 %v315, %v314
    %v323 = vpack.c.b16 %v317, %v316
    %v324 = vpack.c.b16 %v319, %v318
    %v325 = vpack.c.b16 %v321, %v320
    %v346 = vunpack.c.l.b16 %v284
    %v347 = vunpack.c.h.b16 %v284
    %v348 = vunpack.c.l.b16 %v285
    %v349 = vunpack.c.h.b16 %v285
    %v350 = vunpack.c.l.b16 %v286
    %v351 = vunpack.c.h.b16 %v286
    %v352 = vunpack.c.l.b16 %v287
    %v353 = vunpack.c.h.b16 %v287
    %v354 = vunpack.c.l.b16 %v288
    %v355 = vunpack.c.h.b16 %v288
    %v356 = vunpack.c.l.b16 %v289
    %v357 = vunpack.c.h.b16 %v289
    %v358 = vunpack.c.l.b16 %v290
    %v359 = vunpack.c.h.b16 %v290
    %v360 = vunpack.c.l.b16 %v291
    %v361 = vunpack.c.h.b16 %v291
    %v362 = vunpack.c.l.b16 %v292
    %v363 = vunpack.c.h.b16 %v292
    %v364 = vunpack.c.l.b16 %v293
    %v365 = vunpack.c.h.b16 %v293
    %v366 = vunpack.c.l.b16 %v294
    %v367 = vunpack.c.h.b16 %v294
    %v368 = vunpack.c.l.b16 %v295
    %v369 = vunpack.c.h.b16 %v295
    %v370 = vunpack.c.l.b16 %v296
    %v371 = vunpack.c.h.b16 %v296
    %v372 = vunpack.c.l.b16 %v297
    %v373 = vunpack.c.h.b16 %v297
    %v374 = vunpack.c.l.b16 %v298
    %v375 = vunpack.c.h.b16 %v298
    %v376 = vunpack.c.l.b16 %v299
    %v377 = vunpack.c.h.b16 %v299
    %v378 = vpack.c.b16 %v348, %v346
    %v379 = vpack.c.b16 %v349, %v347
    %v380 = vpack.c.b16 %v352, %v350
    %v381 = vpack.c.b16 %v353, %v351
    %v382 = vpack.c.b16 %v356, %v354
    %v383 = vpack.c.b16 %v357, %v355
    %v384 = vpack.c.b16 %v360, %v358
    %v385 = vpack.c.b16 %v361, %v359
    %v386 = vpack.c.b16 %v364, %v362
    %v387 = vpack.c.b16 %v365, %v363
    %v388 = vpack.c.b16 %v368, %v366
    %v389 = vpack.c.b16 %v369, %v367
    %v390 = vpack.c.b16 %v372, %v370
    %v391 = vpack.c.b16 %v373, %v371
    %v392 = vpack.c.b16 %v376, %v374
    %v393 = vpack.c.b16 %v377, %v375
    %410 = vmatpush.bf16.msra.mxu0 %v392
    %411 = vmatpush.bf16.msra.mxu0 %v390
    %412 = vmatpush.bf16.msra.mxu0 %v388
    %413 = vmatpush.bf16.msra.mxu0 %v386
    %414 = vmatpush.bf16.msra.mxu0 %v384
    %415 = vmatpush.bf16.msra.mxu0 %v382
    %416 = vmatpush.bf16.msra.mxu0 %v380
    %417 = vmatpush.bf16.msra.mxu0 %v378
    %418 = vmatmul.bf16.gmra.mxu0 %v322
    %v419 = vpop.f32.mrf.mxu0
    %v420 = vadd.f32 %v302, %v419
    %v421 = vpop.f32.mrf.mxu0
    %v422 = vadd.f32 %v302, %v421
    %423 = vmatmul.bf16.gmra.mxu0 %v323
    %v424 = vpop.f32.mrf.mxu0
    %v425 = vadd.f32 %v302, %v424
    %v426 = vpop.f32.mrf.mxu0
    %v427 = vadd.f32 %v302, %v426
    %428 = vmatmul.bf16.gmra.mxu0 %v324
    %v429 = vpop.f32.mrf.mxu0
    %v430 = vadd.f32 %v302, %v429
    %v431 = vpop.f32.mrf.mxu0
    %v432 = vadd.f32 %v302, %v431
    %433 = vmatmul.bf16.gmra.mxu0 %v325
    %v434 = vpop.f32.mrf.mxu0
    %v435 = vadd.f32 %v302, %v434
    %v436 = vpop.f32.mrf.mxu0
    %v437 = vadd.f32 %v302, %v436
    %438 = vdwg.mxu0
    %439 = vmatpush.bf16.msra.mxu0 %v393
    %440 = vmatpush.bf16.msra.mxu0 %v391
    %441 = vmatpush.bf16.msra.mxu0 %v389
    %442 = vmatpush.bf16.msra.mxu0 %v387
    %443 = vmatpush.bf16.msra.mxu0 %v385
    %444 = vmatpush.bf16.msra.mxu0 %v383
    %445 = vmatpush.bf16.msra.mxu0 %v381
    %446 = vmatpush.bf16.msra.mxu0 %v379
    %447 = vmatmul.bf16.gmra.mxu0 %v322
    %v448 = vpop.f32.mrf.mxu0
    %v449 = vadd.f32 %v303, %v448
    %v450 = vpop.f32.mrf.mxu0
    %v451 = vadd.f32 %v303, %v450
    %452 = vmatmul.bf16.gmra.mxu0 %v323
    %v453 = vpop.f32.mrf.mxu0
    %v454 = vadd.f32 %v303, %v453
    %v455 = vpop.f32.mrf.mxu0
    %v456 = vadd.f32 %v303, %v455
    %457 = vmatmul.bf16.gmra.mxu0 %v324
    %v458 = vpop.f32.mrf.mxu0
    %v459 = vadd.f32 %v303, %v458
    %v460 = vpop.f32.mrf.mxu0
    %v461 = vadd.f32 %v303, %v460
    %462 = vmatmul.bf16.gmra.mxu0 %v325
    %v463 = vpop.f32.mrf.mxu0
    %v464 = vadd.f32 %v303, %v463
    %v465 = vpop.f32.mrf.mxu0
    %v466 = vadd.f32 %v303, %v465
    %467 = vdwg.mxu0
    %v468 = vmax.f32 %v420, 0.0
    %v469 = vmax.f32 %v449, 0.0
    %v470 = vmax.f32 %v422, 0.0
    %v471 = vmax.f32 %v451, 0.0
    %v472 = vmax.f32 %v425, 0.0
    %v473 = vmax.f32 %v454, 0.0
    %v474 = vmax.f32 %v427, 0.0
    %v475 = vmax.f32 %v456, 0.0
    %v476 = vmax.f32 %v430, 0.0
    %v477 = vmax.f32 %v459, 0.0
    %v478 = vmax.f32 %v432, 0.0
    %v479 = vmax.f32 %v461, 0.0
    %v480 = vmax.f32 %v435, 0.0
    %v481 = vmax.f32 %v464, 0.0
    %v482 = vmax.f32 %v437, 0.0
    %v483 = vmax.f32 %v466, 0.0
    %v484 = vld [vmem:[#allocation9] sm:$0x3]
    %v486 = vperm.slane %v484, 0
    %v487 = vperm.slane %v484, 1
    %v490 = vmul.f32 %v468, %v486
    %v491 = vmul.f32 %v469, %v487
    %v492 = vmul.f32 %v470, %v486
    %v493 = vmul.f32 %v471, %v487
    %v494 = vmul.f32 %v472, %v486
    %v495 = vmul.f32 %v473, %v487
    %v496 = vmul.f32 %v474, %v486
    %v497 = vmul.f32 %v475, %v487
    %v498 = vmul.f32 %v476, %v486
    %v499 = vmul.f32 %v477, %v487
    %v500 = vmul.f32 %v478, %v486
    %v501 = vmul.f32 %v479, %v487
    %v502 = vmul.f32 %v480, %v486
    %v503 = vmul.f32 %v481, %v487
    %v504 = vmul.f32 %v482, %v486
    %v505 = vmul.f32 %v483, %v487
    %v506 = vld [vmem:[#allocation10] sm:$0x3]
    %v508 = vperm.slane %v506, 0
    %v509 = vperm.slane %v506, 1
    %v512 = vadd.f32 %v490, %v508
    %v513 = vadd.f32 %v491, %v509
    %v514 = vadd.f32 %v492, %v508
    %v515 = vadd.f32 %v493, %v509
    %v516 = vadd.f32 %v494, %v508
    %v517 = vadd.f32 %v495, %v509
    %v518 = vadd.f32 %v496, %v508
    %v519 = vadd.f32 %v497, %v509
    %v520 = vadd.f32 %v498, %v508
    %v521 = vadd.f32 %v499, %v509
    %v522 = vadd.f32 %v500, %v508
    %v523 = vadd.f32 %v501, %v509
    %v524 = vadd.f32 %v502, %v508
    %v525 = vadd.f32 %v503, %v509
    %v526 = vadd.f32 %v504, %v508
    %v527 = vadd.f32 %v505, %v509
    %v528 = vld [vmem:[%s5] sm:$0xff]
    %v529 = vld [vmem:[%s5 + $0x8] sm:$0xff]
    %v530 = vld [vmem:[%s5 + $0x10] sm:$0xff]
    %v531 = vld [vmem:[%s5 + $0x18] sm:$0xff]
    %v532 = vld [vmem:[%s5 + $0x20] sm:$0xff]
    %v533 = vld [vmem:[%s5 + $0x28] sm:$0xff]
    %v534 = vld [vmem:[%s5 + $0x30] sm:$0xff]
    %v535 = vld [vmem:[%s5 + $0x38] sm:$0x3f]
    %537 = vset.pattern.permute.xlu0 0
    %538 = vperm.xlu0 %537, %v528
    %v539 = vpop.permute.xlu0 %538
    %542 = vset.pattern.permute.xlu0 0
    %543 = vperm.xlu0 %542, %v529
    %v544 = vpop.permute.xlu0 %543
    %547 = vset.pattern.permute.xlu0 0
    %548 = vperm.xlu0 %547, %v530
    %v549 = vpop.permute.xlu0 %548
    %552 = vset.pattern.permute.xlu0 0
    %553 = vperm.xlu0 %552, %v531
    %v554 = vpop.permute.xlu0 %553
    %557 = vset.pattern.permute.xlu0 0
    %558 = vperm.xlu0 %557, %v532
    %v559 = vpop.permute.xlu0 %558
    %562 = vset.pattern.permute.xlu0 0
    %563 = vperm.xlu0 %562, %v533
    %v564 = vpop.permute.xlu0 %563
    %567 = vset.pattern.permute.xlu0 0
    %568 = vperm.xlu0 %567, %v534
    %v569 = vpop.permute.xlu0 %568
    %572 = vset.pattern.permute.xlu0 0
    %573 = vperm.xlu0 %572, %v535
    %v574 = vpop.permute.xlu0 %573
    %v576 = vmul.f32 %v512, %v539
    %v577 = vmul.f32 %v513, %v539
    %v578 = vmul.f32 %v514, %v544
    %v579 = vmul.f32 %v515, %v544
    %v580 = vmul.f32 %v516, %v549
    %v581 = vmul.f32 %v517, %v549
    %v582 = vmul.f32 %v518, %v554
    %v583 = vmul.f32 %v519, %v554
    %v584 = vmul.f32 %v520, %v559
    %v585 = vmul.f32 %v521, %v559
    %v586 = vmul.f32 %v522, %v564
    %v587 = vmul.f32 %v523, %v564
    %v588 = vmul.f32 %v524, %v569
    %v589 = vmul.f32 %v525, %v569
    %v590 = vmul.f32 %v526, %v574
    %v591 = vmul.f32 %v527, %v574
    %592 = vst [vmem:[#allocation2] sm:$0xff] %v576
    %593 = vst [vmem:[#allocation2 + $0x8] sm:$0xff] %v577
    %594 = vst [vmem:[#allocation2 + $0x10] sm:$0xff] %v578
    %595 = vst [vmem:[#allocation2 + $0x18] sm:$0xff] %v579
    %596 = vst [vmem:[#allocation2 + $0x20] sm:$0xff] %v580
    %597 = vst [vmem:[#allocation2 + $0x28] sm:$0xff] %v581
    %598 = vst [vmem:[#allocation2 + $0x30] sm:$0xff] %v582
    %599 = vst [vmem:[#allocation2 + $0x38] sm:$0xff] %v583
    %600 = vst [vmem:[#allocation2 + $0x40] sm:$0xff] %v584
    %601 = vst [vmem:[#allocation2 + $0x48] sm:$0xff] %v585
    %602 = vst [vmem:[#allocation2 + $0x50] sm:$0xff] %v586
    %603 = vst [vmem:[#allocation2 + $0x58] sm:$0xff] %v587
    %604 = vst [vmem:[#allocation2 + $0x60] sm:$0xff] %v588
    %605 = vst [vmem:[#allocation2 + $0x68] sm:$0xff] %v589
    %606 = vst [vmem:[#allocation2 + $0x70] sm:$0x3f] %v590
    %607 = vst [vmem:[#allocation2 + $0x78] sm:$0x3f] %v591
    %v608 = vld [vmem:[#allocation2] sm:$0xff]
    %v609 = vld [vmem:[#allocation2 + $0x8] sm:$0xff]
    %v610 = vld [vmem:[#allocation2 + $0x10] sm:$0xff]
    %v611 = vld [vmem:[#allocation2 + $0x18] sm:$0xff]
    %v612 = vld [vmem:[#allocation2 + $0x20] sm:$0xff]
    %v613 = vld [vmem:[#allocation2 + $0x28] sm:$0xff]
    %v614 = vld [vmem:[#allocation2 + $0x30] sm:$0xff]
    %v615 = vld [vmem:[#allocation2 + $0x38] sm:$0xff]
    %v616 = vld [vmem:[#allocation2 + $0x40] sm:$0xff]
    %v617 = vld [vmem:[#allocation2 + $0x48] sm:$0xff]
    %v618 = vld [vmem:[#allocation2 + $0x50] sm:$0xff]
    %v619 = vld [vmem:[#allocation2 + $0x58] sm:$0xff]
    %v620 = vld [vmem:[#allocation2 + $0x60] sm:$0xff]
    %v621 = vld [vmem:[#allocation2 + $0x68] sm:$0xff]
    %v622 = vld [vmem:[#allocation2 + $0x70] sm:$0xf]
    %v623 = vld [vmem:[#allocation2 + $0x78] sm:$0xf]
    %v624 = vpack.c.bf16 %v610, %v608
    %v625 = vpack.c.bf16 %v611, %v609
    %v626 = vpack.c.bf16 %v614, %v612
    %v627 = vpack.c.bf16 %v615, %v613
    %v628 = vpack.c.bf16 %v618, %v616
    %v629 = vpack.c.bf16 %v619, %v617
    %v630 = vpack.c.bf16 %v622, %v620
    %v631 = vpack.c.bf16 %v623, %v621
    %v632 = vld [vmem:[#allocation12] sm:$0xff]
    %v633 = vld [vmem:[#allocation12 + $0x8] sm:$0xff]
    %v634 = vld [vmem:[#allocation12 + $0x10] sm:$0xff]
    %v635 = vld [vmem:[#allocation12 + $0x18] sm:$0xff]
    %v636 = vld [vmem:[#allocation12 + $0x20] sm:$0xff]
    %v637 = vld [vmem:[#allocation12 + $0x28] sm:$0xff]
    %v638 = vld [vmem:[#allocation12 + $0x30] sm:$0xff]
    %v639 = vld [vmem:[#allocation12 + $0x38] sm:$0xff]
    %v640 = vld [vmem:[#allocation12 + $0x40] sm:$0xff]
    %v641 = vld [vmem:[#allocation12 + $0x48] sm:$0xff]
    %v642 = vld [vmem:[#allocation12 + $0x50] sm:$0xff]
    %v643 = vld [vmem:[#allocation12 + $0x58] sm:$0xff]
    %v644 = vld [vmem:[#allocation12 + $0x60] sm:$0xff]
    %v645 = vld [vmem:[#allocation12 + $0x68] sm:$0xff]
    %v646 = vld [vmem:[#allocation12 + $0x70] sm:$0xff]
    %v647 = vld [vmem:[#allocation12 + $0x78] sm:$0xff]
    %v648 = vld [vmem:[#allocation12 + $0x80] sm:$0xff]
    %v649 = vld [vmem:[#allocation12 + $0x88] sm:$0xff]
    %v650 = vld [vmem:[#allocation12 + $0x90] sm:$0xff]
    %v651 = vld [vmem:[#allocation12 + $0x98] sm:$0xff]
    %v652 = vld [vmem:[#allocation12 + $0xa0] sm:$0xff]
    %v653 = vld [vmem:[#allocation12 + $0xa8] sm:$0xff]
    %v654 = vld [vmem:[#allocation12 + $0xb0] sm:$0xff]
    %v655 = vld [vmem:[#allocation12 + $0xb8] sm:$0xff]
    %v656 = vld [vmem:[#allocation12 + $0xc0] sm:$0xff]
    %v657 = vld [vmem:[#allocation12 + $0xc8] sm:$0xff]
    %v658 = vld [vmem:[#allocation12 + $0xd0] sm:$0xff]
    %v659 = vld [vmem:[#allocation12 + $0xd8] sm:$0xff]
    %v660 = vld [vmem:[#allocation12 + $0xe0] sm:$0xff]
    %v661 = vld [vmem:[#allocation12 + $0xe8] sm:$0xff]
    %v662 = vld [vmem:[#allocation12 + $0xf0] sm:$0xff]
    %v663 = vld [vmem:[#allocation12 + $0xf8] sm:$0xff]
    %v664 = vld [vmem:[#allocation2] sm:$0xfe]
    %v665 = vld [vmem:[#allocation2 + $0x8] sm:$0xfe]
    %v666 = vld [vmem:[#allocation2 + $0x70] sm:$0x1f]
    %v667 = vld [vmem:[#allocation2 + $0x78] sm:$0x1f]
    %v668 = vpack.c.bf16 %v610, %v664
    %v669 = vpack.c.bf16 %v611, %v665
    %v670 = vpack.c.bf16 %v666, %v620
    %v671 = vpack.c.bf16 %v667, %v621
    %s672 = scalar_lea.vmem [#allocation12], 256
    %v673 = vld [vmem:[%s672] sm:$0xff]
    %v674 = vld [vmem:[%s672 + $0x8] sm:$0xff]
    %v675 = vld [vmem:[%s672 + $0x10] sm:$0xff]
    %v676 = vld [vmem:[%s672 + $0x18] sm:$0xff]
    %v677 = vld [vmem:[%s672 + $0x20] sm:$0xff]
    %v678 = vld [vmem:[%s672 + $0x28] sm:$0xff]
    %v679 = vld [vmem:[%s672 + $0x30] sm:$0xff]
    %v680 = vld [vmem:[%s672 + $0x38] sm:$0xff]
    %v681 = vld [vmem:[%s672 + $0x40] sm:$0xff]
    %v682 = vld [vmem:[%s672 + $0x48] sm:$0xff]
    %v683 = vld [vmem:[%s672 + $0x50] sm:$0xff]
    %v684 = vld [vmem:[%s672 + $0x58] sm:$0xff]
    %v685 = vld [vmem:[%s672 + $0x60] sm:$0xff]
    %v686 = vld [vmem:[%s672 + $0x68] sm:$0xff]
    %v687 = vld [vmem:[%s672 + $0x70] sm:$0xff]
    %v688 = vld [vmem:[%s672 + $0x78] sm:$0xff]
    %v689 = vld [vmem:[%s672 + $0x80] sm:$0xff]
    %v690 = vld [vmem:[%s672 + $0x88] sm:$0xff]
    %v691 = vld [vmem:[%s672 + $0x90] sm:$0xff]
    %v692 = vld [vmem:[%s672 + $0x98] sm:$0xff]
    %v693 = vld [vmem:[%s672 + $0xa0] sm:$0xff]
    %v694 = vld [vmem:[%s672 + $0xa8] sm:$0xff]
    %v695 = vld [vmem:[%s672 + $0xb0] sm:$0xff]
    %v696 = vld [vmem:[%s672 + $0xb8] sm:$0xff]
    %v697 = vld [vmem:[%s672 + $0xc0] sm:$0xff]
    %v698 = vld [vmem:[%s672 + $0xc8] sm:$0xff]
    %v699 = vld [vmem:[%s672 + $0xd0] sm:$0xff]
    %v700 = vld [vmem:[%s672 + $0xd8] sm:$0xff]
    %v701 = vld [vmem:[%s672 + $0xe0] sm:$0xff]
    %v702 = vld [vmem:[%s672 + $0xe8] sm:$0xff]
    %v703 = vld [vmem:[%s672 + $0xf0] sm:$0xff]
    %v704 = vld [vmem:[%s672 + $0xf8] sm:$0xff]
    %vm705 = vsmask.f32 7424
    %v707 = vshrl.u32 %v668, 16
    %v709 = vshll.u32 %v668, 16
    %v711 = vrot.slane %v709, 1
    %v712 = vor.u32 %v707, %v711
    %v714 = vshll.u32 %v626, 16
    %v716 = vrot.slane %v714, 1
    %v717 = vsel %vm705, %v712, %v716
    %v719 = vshrl.u32 %v669, 16
    %v721 = vshll.u32 %v669, 16
    %v723 = vrot.slane %v721, 1
    %v724 = vor.u32 %v719, %v723
    %v726 = vshll.u32 %v627, 16
    %v728 = vrot.slane %v726, 1
    %v729 = vsel %vm705, %v724, %v728
    %v730 = vshrl.u32 %v626, 16
    %v732 = vor.u32 %v730, %v716
    %v734 = vshll.u32 %v628, 16
    %v736 = vrot.slane %v734, 1
    %v737 = vsel %vm705, %v732, %v736
    %v738 = vshrl.u32 %v627, 16
    %v740 = vor.u32 %v738, %v728
    %v742 = vshll.u32 %v629, 16
    %v744 = vrot.slane %v742, 1
    %v745 = vsel %vm705, %v740, %v744
    %v746 = vshrl.u32 %v628, 16
    %v748 = vor.u32 %v746, %v736
    %v750 = vshll.u32 %v670, 16
    %v752 = vrot.slane %v750, 1
    %v753 = vsel %vm705, %v748, %v752
    %v754 = vshrl.u32 %v629, 16
    %v756 = vor.u32 %v754, %v744
    %v758 = vshll.u32 %v671, 16
    %v760 = vrot.slane %v758, 1
    %v761 = vsel %vm705, %v756, %v760
    %v762 = vshrl.u32 %v670, 16
    %v764 = vor.u32 %v762, %v752
    %v765 = vshrl.u32 %v671, 16
    %v767 = vor.u32 %v765, %v760
    %v808 = vunpack.c.l.b16 %v673
    %v809 = vunpack.c.h.b16 %v673
    %v810 = vunpack.c.l.b16 %v674
    %v811 = vunpack.c.h.b16 %v674
    %v812 = vunpack.c.l.b16 %v675
    %v813 = vunpack.c.h.b16 %v675
    %v814 = vunpack.c.l.b16 %v676
    %v815 = vunpack.c.h.b16 %v676
    %v816 = vunpack.c.l.b16 %v677
    %v817 = vunpack.c.h.b16 %v677
    %v818 = vunpack.c.l.b16 %v678
    %v819 = vunpack.c.h.b16 %v678
    %v820 = vunpack.c.l.b16 %v679
    %v821 = vunpack.c.h.b16 %v679
    %v822 = vunpack.c.l.b16 %v680
    %v823 = vunpack.c.h.b16 %v680
    %v824 = vunpack.c.l.b16 %v681
    %v825 = vunpack.c.h.b16 %v681
    %v826 = vunpack.c.l.b16 %v682
    %v827 = vunpack.c.h.b16 %v682
    %v828 = vunpack.c.l.b16 %v683
    %v829 = vunpack.c.h.b16 %v683
    %v830 = vunpack.c.l.b16 %v684
    %v831 = vunpack.c.h.b16 %v684
    %v832 = vunpack.c.l.b16 %v685
    %v833 = vunpack.c.h.b16 %v685
    %v834 = vunpack.c.l.b16 %v686
    %v835 = vunpack.c.h.b16 %v686
    %v836 = vunpack.c.l.b16 %v687
    %v837 = vunpack.c.h.b16 %v687
    %v838 = vunpack.c.l.b16 %v688
    %v839 = vunpack.c.h.b16 %v688
    %v840 = vunpack.c.l.b16 %v689
    %v841 = vunpack.c.h.b16 %v689
    %v842 = vunpack.c.l.b16 %v690
    %v843 = vunpack.c.h.b16 %v690
    %v844 = vunpack.c.l.b16 %v691
    %v845 = vunpack.c.h.b16 %v691
    %v846 = vunpack.c.l.b16 %v692
    %v847 = vunpack.c.h.b16 %v692
    %v848 = vunpack.c.l.b16 %v693
    %v849 = vunpack.c.h.b16 %v693
    %v850 = vunpack.c.l.b16 %v694
    %v851 = vunpack.c.h.b16 %v694
    %v852 = vunpack.c.l.b16 %v695
    %v853 = vunpack.c.h.b16 %v695
    %v854 = vunpack.c.l.b16 %v696
    %v855 = vunpack.c.h.b16 %v696
    %v856 = vunpack.c.l.b16 %v697
    %v857 = vunpack.c.h.b16 %v697
    %v858 = vunpack.c.l.b16 %v698
    %v859 = vunpack.c.h.b16 %v698
    %v860 = vunpack.c.l.b16 %v699
    %v861 = vunpack.c.h.b16 %v699
    %v862 = vunpack.c.l.b16 %v700
    %v863 = vunpack.c.h.b16 %v700
    %v864 = vunpack.c.l.b16 %v701
    %v865 = vunpack.c.h.b16 %v701
    %v866 = vunpack.c.l.b16 %v702
    %v867 = vunpack.c.h.b16 %v702
    %v868 = vunpack.c.l.b16 %v703
    %v869 = vunpack.c.h.b16 %v703
    %v870 = vunpack.c.l.b16 %v704
    %v871 = vunpack.c.h.b16 %v704
    %v872 = vpack.c.b16 %v810, %v808
    %v873 = vpack.c.b16 %v811, %v809
    %v874 = vpack.c.b16 %v814, %v812
    %v875 = vpack.c.b16 %v815, %v813
    %v876 = vpack.c.b16 %v818, %v816
    %v877 = vpack.c.b16 %v819, %v817
    %v878 = vpack.c.b16 %v822, %v820
    %v879 = vpack.c.b16 %v823, %v821
    %v880 = vpack.c.b16 %v826, %v824
    %v881 = vpack.c.b16 %v827, %v825
    %v882 = vpack.c.b16 %v830, %v828
    %v883 = vpack.c.b16 %v831, %v829
    %v884 = vpack.c.b16 %v834, %v832
    %v885 = vpack.c.b16 %v835, %v833
    %v886 = vpack.c.b16 %v838, %v836
    %v887 = vpack.c.b16 %v839, %v837
    %v888 = vpack.c.b16 %v842, %v840
    %v889 = vpack.c.b16 %v843, %v841
    %v890 = vpack.c.b16 %v846, %v844
    %v891 = vpack.c.b16 %v847, %v845
    %v892 = vpack.c.b16 %v850, %v848
    %v893 = vpack.c.b16 %v851, %v849
    %v894 = vpack.c.b16 %v854, %v852
    %v895 = vpack.c.b16 %v855, %v853
    %v896 = vpack.c.b16 %v858, %v856
    %v897 = vpack.c.b16 %v859, %v857
    %v898 = vpack.c.b16 %v862, %v860
    %v899 = vpack.c.b16 %v863, %v861
    %v900 = vpack.c.b16 %v866, %v864
    %v901 = vpack.c.b16 %v867, %v865
    %v902 = vpack.c.b16 %v870, %v868
    %v903 = vpack.c.b16 %v871, %v869
    %936 = vmatpush.bf16.msra.mxu0 %v886
    %937 = vmatpush.bf16.msra.mxu0 %v884
    %938 = vmatpush.bf16.msra.mxu0 %v882
    %939 = vmatpush.bf16.msra.mxu0 %v880
    %940 = vmatpush.bf16.msra.mxu0 %v878
    %941 = vmatpush.bf16.msra.mxu0 %v876
    %942 = vmatpush.bf16.msra.mxu0 %v874
    %943 = vmatpush.bf16.msra.mxu0 %v872
    %944 = vmatmul.bf16.gmra.mxu0 %v717
    %v945 = vpop.f32.mrf.mxu0
    %v946 = vadd.f32 0.0, %v945
    %v947 = vpop.f32.mrf.mxu0
    %v948 = vadd.f32 0.0, %v947
    %949 = vmatmul.bf16.gmra.mxu0 %v737
    %v950 = vpop.f32.mrf.mxu0
    %v951 = vadd.f32 0.0, %v950
    %v952 = vpop.f32.mrf.mxu0
    %v953 = vadd.f32 0.0, %v952
    %954 = vmatmul.bf16.gmra.mxu0 %v753
    %v955 = vpop.f32.mrf.mxu0
    %v956 = vadd.f32 0.0, %v955
    %v957 = vpop.f32.mrf.mxu0
    %v958 = vadd.f32 0.0, %v957
    %959 = vmatmul.bf16.gmra.mxu0 %v764
    %v960 = vpop.f32.mrf.mxu0
    %v961 = vadd.f32 0.0, %v960
    %v962 = vpop.f32.mrf.mxu0
    %v963 = vadd.f32 0.0, %v962
    %964 = vdwg.mxu0
    %965 = vmatpush.bf16.msra.mxu0 %v902
    %966 = vmatpush.bf16.msra.mxu0 %v900
    %967 = vmatpush.bf16.msra.mxu0 %v898
    %968 = vmatpush.bf16.msra.mxu0 %v896
    %969 = vmatpush.bf16.msra.mxu0 %v894
    %970 = vmatpush.bf16.msra.mxu0 %v892
    %971 = vmatpush.bf16.msra.mxu0 %v890
    %972 = vmatpush.bf16.msra.mxu0 %v888
    %973 = vmatmul.bf16.gmra.mxu0 %v729
    %v974 = vpop.f32.mrf.mxu0
    %v975 = vadd.f32 %v946, %v974
    %v976 = vpop.f32.mrf.mxu0
    %v977 = vadd.f32 %v948, %v976
    %978 = vmatmul.bf16.gmra.mxu0 %v745
    %v979 = vpop.f32.mrf.mxu0
    %v980 = vadd.f32 %v951, %v979
    %v981 = vpop.f32.mrf.mxu0
    %v982 = vadd.f32 %v953, %v981
    %983 = vmatmul.bf16.gmra.mxu0 %v761
    %v984 = vpop.f32.mrf.mxu0
    %v985 = vadd.f32 %v956, %v984
    %v986 = vpop.f32.mrf.mxu0
    %v987 = vadd.f32 %v958, %v986
    %988 = vmatmul.bf16.gmra.mxu0 %v767
    %v989 = vpop.f32.mrf.mxu0
    %v990 = vadd.f32 %v961, %v989
    %v991 = vpop.f32.mrf.mxu0
    %v992 = vadd.f32 %v963, %v991
    %993 = vdwg.mxu0
    %994 = vmatpush.bf16.msra.mxu0 %v887
    %995 = vmatpush.bf16.msra.mxu0 %v885
    %996 = vmatpush.bf16.msra.mxu0 %v883
    %997 = vmatpush.bf16.msra.mxu0 %v881
    %998 = vmatpush.bf16.msra.mxu0 %v879
    %999 = vmatpush.bf16.msra.mxu0 %v877
    %1000 = vmatpush.bf16.msra.mxu0 %v875
    %1001 = vmatpush.bf16.msra.mxu0 %v873
    %1002 = vmatmul.bf16.gmra.mxu0 %v717
    %v1003 = vpop.f32.mrf.mxu0
    %v1004 = vadd.f32 0.0, %v1003
    %v1005 = vpop.f32.mrf.mxu0
    %v1006 = vadd.f32 0.0, %v1005
    %1007 = vmatmul.bf16.gmra.mxu0 %v737
    %v1008 = vpop.f32.mrf.mxu0
    %v1009 = vadd.f32 0.0, %v1008
    %v1010 = vpop.f32.mrf.mxu0
    %v1011 = vadd.f32 0.0, %v1010
    %1012 = vmatmul.bf16.gmra.mxu0 %v753
    %v1013 = vpop.f32.mrf.mxu0
    %v1014 = vadd.f32 0.0, %v1013
    %v1015 = vpop.f32.mrf.mxu0
    %v1016 = vadd.f32 0.0, %v1015
    %1017 = vmatmul.bf16.gmra.mxu0 %v764
    %v1018 = vpop.f32.mrf.mxu0
    %v1019 = vadd.f32 0.0, %v1018
    %v1020 = vpop.f32.mrf.mxu0
    %v1021 = vadd.f32 0.0, %v1020
    %1022 = vdwg.mxu0
    %1023 = vmatpush.bf16.msra.mxu0 %v903
    %1024 = vmatpush.bf16.msra.mxu0 %v901
    %1025 = vmatpush.bf16.msra.mxu0 %v899
    %1026 = vmatpush.bf16.msra.mxu0 %v897
    %1027 = vmatpush.bf16.msra.mxu0 %v895
    %1028 = vmatpush.bf16.msra.mxu0 %v893
    %1029 = vmatpush.bf16.msra.mxu0 %v891
    %1030 = vmatpush.bf16.msra.mxu0 %v889
    %1031 = vmatmul.bf16.gmra.mxu0 %v729
    %v1032 = vpop.f32.mrf.mxu0
    %v1033 = vadd.f32 %v1004, %v1032
    %v1034 = vpop.f32.mrf.mxu0
    %v1035 = vadd.f32 %v1006, %v1034
    %1036 = vmatmul.bf16.gmra.mxu0 %v745
    %v1037 = vpop.f32.mrf.mxu0
    %v1038 = vadd.f32 %v1009, %v1037
    %v1039 = vpop.f32.mrf.mxu0
    %v1040 = vadd.f32 %v1011, %v1039
    %1041 = vmatmul.bf16.gmra.mxu0 %v761
    %v1042 = vpop.f32.mrf.mxu0
    %v1043 = vadd.f32 %v1014, %v1042
    %v1044 = vpop.f32.mrf.mxu0
    %v1045 = vadd.f32 %v1016, %v1044
    %1046 = vmatmul.bf16.gmra.mxu0 %v767
    %v1047 = vpop.f32.mrf.mxu0
    %v1048 = vadd.f32 %v1019, %v1047
    %v1049 = vpop.f32.mrf.mxu0
    %v1050 = vadd.f32 %v1021, %v1049
    %1051 = vdwg.mxu0
    %v1084 = vunpack.c.l.b16 %v632
    %v1085 = vunpack.c.h.b16 %v632
    %v1086 = vunpack.c.l.b16 %v633
    %v1087 = vunpack.c.h.b16 %v633
    %v1088 = vunpack.c.l.b16 %v634
    %v1089 = vunpack.c.h.b16 %v634
    %v1090 = vunpack.c.l.b16 %v635
    %v1091 = vunpack.c.h.b16 %v635
    %v1092 = vunpack.c.l.b16 %v636
    %v1093 = vunpack.c.h.b16 %v636
    %v1094 = vunpack.c.l.b16 %v637
    %v1095 = vunpack.c.h.b16 %v637
    %v1096 = vunpack.c.l.b16 %v638
    %v1097 = vunpack.c.h.b16 %v638
    %v1098 = vunpack.c.l.b16 %v639
    %v1099 = vunpack.c.h.b16 %v639
    %v1100 = vunpack.c.l.b16 %v640
    %v1101 = vunpack.c.h.b16 %v640
    %v1102 = vunpack.c.l.b16 %v641
    %v1103 = vunpack.c.h.b16 %v641
    %v1104 = vunpack.c.l.b16 %v642
    %v1105 = vunpack.c.h.b16 %v642
    %v1106 = vunpack.c.l.b16 %v643
    %v1107 = vunpack.c.h.b16 %v643
    %v1108 = vunpack.c.l.b16 %v644
    %v1109 = vunpack.c.h.b16 %v644
    %v1110 = vunpack.c.l.b16 %v645
    %v1111 = vunpack.c.h.b16 %v645
    %v1112 = vunpack.c.l.b16 %v646
    %v1113 = vunpack.c.h.b16 %v646
    %v1114 = vunpack.c.l.b16 %v647
    %v1115 = vunpack.c.h.b16 %v647
    %v1116 = vunpack.c.l.b16 %v648
    %v1117 = vunpack.c.h.b16 %v648
    %v1118 = vunpack.c.l.b16 %v649
    %v1119 = vunpack.c.h.b16 %v649
    %v1120 = vunpack.c.l.b16 %v650
    %v1121 = vunpack.c.h.b16 %v650
    %v1122 = vunpack.c.l.b16 %v651
    %v1123 = vunpack.c.h.b16 %v651
    %v1124 = vunpack.c.l.b16 %v652
    %v1125 = vunpack.c.h.b16 %v652
    %v1126 = vunpack.c.l.b16 %v653
    %v1127 = vunpack.c.h.b16 %v653
    %v1128 = vunpack.c.l.b16 %v654
    %v1129 = vunpack.c.h.b16 %v654
    %v1130 = vunpack.c.l.b16 %v655
    %v1131 = vunpack.c.h.b16 %v655
    %v1132 = vunpack.c.l.b16 %v656
    %v1133 = vunpack.c.h.b16 %v656
    %v1134 = vunpack.c.l.b16 %v657
    %v1135 = vunpack.c.h.b16 %v657
    %v1136 = vunpack.c.l.b16 %v658
    %v1137 = vunpack.c.h.b16 %v658
    %v1138 = vunpack.c.l.b16 %v659
    %v1139 = vunpack.c.h.b16 %v659
    %v1140 = vunpack.c.l.b16 %v660
    %v1141 = vunpack.c.h.b16 %v660
    %v1142 = vunpack.c.l.b16 %v661
    %v1143 = vunpack.c.h.b16 %v661
    %v1144 = vunpack.c.l.b16 %v662
    %v1145 = vunpack.c.h.b16 %v662
    %v1146 = vunpack.c.l.b16 %v663
    %v1147 = vunpack.c.h.b16 %v663
    %v1148 = vpack.c.b16 %v1086, %v1084
    %v1149 = vpack.c.b16 %v1087, %v1085
    %v1150 = vpack.c.b16 %v1090, %v1088
    %v1151 = vpack.c.b16 %v1091, %v1089
    %v1152 = vpack.c.b16 %v1094, %v1092
    %v1153 = vpack.c.b16 %v1095, %v1093
    %v1154 = vpack.c.b16 %v1098, %v1096
    %v1155 = vpack.c.b16 %v1099, %v1097
    %v1156 = vpack.c.b16 %v1102, %v1100
    %v1157 = vpack.c.b16 %v1103, %v1101
    %v1158 = vpack.c.b16 %v1106, %v1104
    %v1159 = vpack.c.b16 %v1107, %v1105
    %v1160 = vpack.c.b16 %v1110, %v1108
    %v1161 = vpack.c.b16 %v1111, %v1109
    %v1162 = vpack.c.b16 %v1114, %v1112
    %v1163 = vpack.c.b16 %v1115, %v1113
    %v1164 = vpack.c.b16 %v1118, %v1116
    %v1165 = vpack.c.b16 %v1119, %v1117
    %v1166 = vpack.c.b16 %v1122, %v1120
    %v1167 = vpack.c.b16 %v1123, %v1121
    %v1168 = vpack.c.b16 %v1126, %v1124
    %v1169 = vpack.c.b16 %v1127, %v1125
    %v1170 = vpack.c.b16 %v1130, %v1128
    %v1171 = vpack.c.b16 %v1131, %v1129
    %v1172 = vpack.c.b16 %v1134, %v1132
    %v1173 = vpack.c.b16 %v1135, %v1133
    %v1174 = vpack.c.b16 %v1138, %v1136
    %v1175 = vpack.c.b16 %v1139, %v1137
    %v1176 = vpack.c.b16 %v1142, %v1140
    %v1177 = vpack.c.b16 %v1143, %v1141
    %v1178 = vpack.c.b16 %v1146, %v1144
    %v1179 = vpack.c.b16 %v1147, %v1145
    %1212 = vmatpush.bf16.msra.mxu0 %v1162
    %1213 = vmatpush.bf16.msra.mxu0 %v1160
    %1214 = vmatpush.bf16.msra.mxu0 %v1158
    %1215 = vmatpush.bf16.msra.mxu0 %v1156
    %1216 = vmatpush.bf16.msra.mxu0 %v1154
    %1217 = vmatpush.bf16.msra.mxu0 %v1152
    %1218 = vmatpush.bf16.msra.mxu0 %v1150
    %1219 = vmatpush.bf16.msra.mxu0 %v1148
    %1220 = vmatmul.bf16.gmra.mxu0 %v624
    %v1221 = vpop.f32.mrf.mxu0
    %v1222 = vadd.f32 %v975, %v1221
    %v1223 = vpop.f32.mrf.mxu0
    %v1224 = vadd.f32 %v977, %v1223
    %1225 = vmatmul.bf16.gmra.mxu0 %v626
    %v1226 = vpop.f32.mrf.mxu0
    %v1227 = vadd.f32 %v980, %v1226
    %v1228 = vpop.f32.mrf.mxu0
    %v1229 = vadd.f32 %v982, %v1228
    %1230 = vmatmul.bf16.gmra.mxu0 %v628
    %v1231 = vpop.f32.mrf.mxu0
    %v1232 = vadd.f32 %v985, %v1231
    %v1233 = vpop.f32.mrf.mxu0
    %v1234 = vadd.f32 %v987, %v1233
    %1235 = vmatmul.bf16.gmra.mxu0 %v630
    %v1236 = vpop.f32.mrf.mxu0
    %v1237 = vadd.f32 %v990, %v1236
    %v1238 = vpop.f32.mrf.mxu0
    %v1239 = vadd.f32 %v992, %v1238
    %1240 = vdwg.mxu0
    %1241 = vmatpush.bf16.msra.mxu0 %v1178
    %1242 = vmatpush.bf16.msra.mxu0 %v1176
    %1243 = vmatpush.bf16.msra.mxu0 %v1174
    %1244 = vmatpush.bf16.msra.mxu0 %v1172
    %1245 = vmatpush.bf16.msra.mxu0 %v1170
    %1246 = vmatpush.bf16.msra.mxu0 %v1168
    %1247 = vmatpush.bf16.msra.mxu0 %v1166
    %1248 = vmatpush.bf16.msra.mxu0 %v1164
    %1249 = vmatmul.bf16.gmra.mxu0 %v625
    %v1250 = vpop.f32.mrf.mxu0
    %v1251 = vadd.f32 %v1222, %v1250
    %v1252 = vpop.f32.mrf.mxu0
    %v1253 = vadd.f32 %v1224, %v1252
    %1254 = vmatmul.bf16.gmra.mxu0 %v627
    %v1255 = vpop.f32.mrf.mxu0
    %v1256 = vadd.f32 %v1227, %v1255
    %v1257 = vpop.f32.mrf.mxu0
    %v1258 = vadd.f32 %v1229, %v1257
    %1259 = vmatmul.bf16.gmra.mxu0 %v629
    %v1260 = vpop.f32.mrf.mxu0
    %v1261 = vadd.f32 %v1232, %v1260
    %v1262 = vpop.f32.mrf.mxu0
    %v1263 = vadd.f32 %v1234, %v1262
    %1264 = vmatmul.bf16.gmra.mxu0 %v631
    %v1265 = vpop.f32.mrf.mxu0
    %v1266 = vadd.f32 %v1237, %v1265
    %v1267 = vpop.f32.mrf.mxu0
    %v1268 = vadd.f32 %v1239, %v1267
    %1269 = vdwg.mxu0
    %1270 = vmatpush.bf16.msra.mxu0 %v1163
    %1271 = vmatpush.bf16.msra.mxu0 %v1161
    %1272 = vmatpush.bf16.msra.mxu0 %v1159
    %1273 = vmatpush.bf16.msra.mxu0 %v1157
    %1274 = vmatpush.bf16.msra.mxu0 %v1155
    %1275 = vmatpush.bf16.msra.mxu0 %v1153
    %1276 = vmatpush.bf16.msra.mxu0 %v1151
    %1277 = vmatpush.bf16.msra.mxu0 %v1149
    %1278 = vmatmul.bf16.gmra.mxu0 %v624
    %v1279 = vpop.f32.mrf.mxu0
    %v1280 = vadd.f32 %v1033, %v1279
    %v1281 = vpop.f32.mrf.mxu0
    %v1282 = vadd.f32 %v1035, %v1281
    %1283 = vmatmul.bf16.gmra.mxu0 %v626
    %v1284 = vpop.f32.mrf.mxu0
    %v1285 = vadd.f32 %v1038, %v1284
    %v1286 = vpop.f32.mrf.mxu0
    %v1287 = vadd.f32 %v1040, %v1286
    %1288 = vmatmul.bf16.gmra.mxu0 %v628
    %v1289 = vpop.f32.mrf.mxu0
    %v1290 = vadd.f32 %v1043, %v1289
    %v1291 = vpop.f32.mrf.mxu0
    %v1292 = vadd.f32 %v1045, %v1291
    %1293 = vmatmul.bf16.gmra.mxu0 %v630
    %v1294 = vpop.f32.mrf.mxu0
    %v1295 = vadd.f32 %v1048, %v1294
    %v1296 = vpop.f32.mrf.mxu0
    %v1297 = vadd.f32 %v1050, %v1296
    %1298 = vdwg.mxu0
    %1299 = vmatpush.bf16.msra.mxu0 %v1179
    %1300 = vmatpush.bf16.msra.mxu0 %v1177
    %1301 = vmatpush.bf16.msra.mxu0 %v1175
    %1302 = vmatpush.bf16.msra.mxu0 %v1173
    %1303 = vmatpush.bf16.msra.mxu0 %v1171
    %1304 = vmatpush.bf16.msra.mxu0 %v1169
    %1305 = vmatpush.bf16.msra.mxu0 %v1167
    %1306 = vmatpush.bf16.msra.mxu0 %v1165
    %1307 = vmatmul.bf16.gmra.mxu0 %v625
    %v1308 = vpop.f32.mrf.mxu0
    %v1309 = vadd.f32 %v1280, %v1308
    %v1310 = vpop.f32.mrf.mxu0
    %v1311 = vadd.f32 %v1282, %v1310
    %1312 = vmatmul.bf16.gmra.mxu0 %v627
    %v1313 = vpop.f32.mrf.mxu0
    %v1314 = vadd.f32 %v1285, %v1313
    %v1315 = vpop.f32.mrf.mxu0
    %v1316 = vadd.f32 %v1287, %v1315
    %1317 = vmatmul.bf16.gmra.mxu0 %v629
    %v1318 = vpop.f32.mrf.mxu0
    %v1319 = vadd.f32 %v1290, %v1318
    %v1320 = vpop.f32.mrf.mxu0
    %v1321 = vadd.f32 %v1292, %v1320
    %1322 = vmatmul.bf16.gmra.mxu0 %v631
    %v1323 = vpop.f32.mrf.mxu0
    %v1324 = vadd.f32 %v1295, %v1323
    %v1325 = vpop.f32.mrf.mxu0
    %v1326 = vadd.f32 %v1297, %v1325
    %1327 = vdwg.mxu0
    %v1328 = vld [vmem:[#allocation2] sm:$0xfc]
    %v1329 = vld [vmem:[#allocation2 + $0x8] sm:$0xfc]
    %v1330 = vld [vmem:[#allocation2 + $0x70] sm:$0x3f]
    %v1331 = vld [vmem:[#allocation2 + $0x78] sm:$0x3f]
    %v1332 = vpack.c.bf16 %v610, %v1328
    %v1333 = vpack.c.bf16 %v611, %v1329
    %v1334 = vpack.c.bf16 %v1330, %v620
    %v1335 = vpack.c.bf16 %v1331, %v621
    %s1336 = scalar_lea.vmem [#allocation12], 512
    %v1337 = vld [vmem:[%s1336] sm:$0xff]
    %v1338 = vld [vmem:[%s1336 + $0x8] sm:$0xff]
    %v1339 = vld [vmem:[%s1336 + $0x10] sm:$0xff]
    %v1340 = vld [vmem:[%s1336 + $0x18] sm:$0xff]
    %v1341 = vld [vmem:[%s1336 + $0x20] sm:$0xff]
    %v1342 = vld [vmem:[%s1336 + $0x28] sm:$0xff]
    %v1343 = vld [vmem:[%s1336 + $0x30] sm:$0xff]
    %v1344 = vld [vmem:[%s1336 + $0x38] sm:$0xff]
    %v1345 = vld [vmem:[%s1336 + $0x40] sm:$0xff]
    %v1346 = vld [vmem:[%s1336 + $0x48] sm:$0xff]
    %v1347 = vld [vmem:[%s1336 + $0x50] sm:$0xff]
    %v1348 = vld [vmem:[%s1336 + $0x58] sm:$0xff]
    %v1349 = vld [vmem:[%s1336 + $0x60] sm:$0xff]
    %v1350 = vld [vmem:[%s1336 + $0x68] sm:$0xff]
    %v1351 = vld [vmem:[%s1336 + $0x70] sm:$0xff]
    %v1352 = vld [vmem:[%s1336 + $0x78] sm:$0xff]
    %v1353 = vld [vmem:[%s1336 + $0x80] sm:$0xff]
    %v1354 = vld [vmem:[%s1336 + $0x88] sm:$0xff]
    %v1355 = vld [vmem:[%s1336 + $0x90] sm:$0xff]
    %v1356 = vld [vmem:[%s1336 + $0x98] sm:$0xff]
    %v1357 = vld [vmem:[%s1336 + $0xa0] sm:$0xff]
    %v1358 = vld [vmem:[%s1336 + $0xa8] sm:$0xff]
    %v1359 = vld [vmem:[%s1336 + $0xb0] sm:$0xff]
    %v1360 = vld [vmem:[%s1336 + $0xb8] sm:$0xff]
    %v1361 = vld [vmem:[%s1336 + $0xc0] sm:$0xff]
    %v1362 = vld [vmem:[%s1336 + $0xc8] sm:$0xff]
    %v1363 = vld [vmem:[%s1336 + $0xd0] sm:$0xff]
    %v1364 = vld [vmem:[%s1336 + $0xd8] sm:$0xff]
    %v1365 = vld [vmem:[%s1336 + $0xe0] sm:$0xff]
    %v1366 = vld [vmem:[%s1336 + $0xe8] sm:$0xff]
    %v1367 = vld [vmem:[%s1336 + $0xf0] sm:$0xff]
    %v1368 = vld [vmem:[%s1336 + $0xf8] sm:$0xff]
    %vm1377 = vcmask 1046528
    %v1378 = vrot.slane %v1332, 1
    %v1379 = vrot.slane %v626, 1
    %v1380 = vsel %vm1377, %v1378, %v1379
    %v1381 = vrot.slane %v1333, 1
    %v1382 = vrot.slane %v627, 1
    %v1383 = vsel %vm1377, %v1381, %v1382
    %v1384 = vrot.slane %v628, 1
    %v1385 = vsel %vm1377, %v1379, %v1384
    %v1386 = vrot.slane %v629, 1
    %v1387 = vsel %vm1377, %v1382, %v1386
    %v1388 = vrot.slane %v1334, 1
    %v1389 = vsel %vm1377, %v1384, %v1388
    %v1390 = vrot.slane %v1335, 1
    %v1391 = vsel %vm1377, %v1386, %v1390
    %v1432 = vunpack.c.l.b16 %v1337
    %v1433 = vunpack.c.h.b16 %v1337
    %v1434 = vunpack.c.l.b16 %v1338
    %v1435 = vunpack.c.h.b16 %v1338
    %v1436 = vunpack.c.l.b16 %v1339
    %v1437 = vunpack.c.h.b16 %v1339
    %v1438 = vunpack.c.l.b16 %v1340
    %v1439 = vunpack.c.h.b16 %v1340
    %v1440 = vunpack.c.l.b16 %v1341
    %v1441 = vunpack.c.h.b16 %v1341
    %v1442 = vunpack.c.l.b16 %v1342
    %v1443 = vunpack.c.h.b16 %v1342
    %v1444 = vunpack.c.l.b16 %v1343
    %v1445 = vunpack.c.h.b16 %v1343
    %v1446 = vunpack.c.l.b16 %v1344
    %v1447 = vunpack.c.h.b16 %v1344
    %v1448 = vunpack.c.l.b16 %v1345
    %v1449 = vunpack.c.h.b16 %v1345
    %v1450 = vunpack.c.l.b16 %v1346
    %v1451 = vunpack.c.h.b16 %v1346
    %v1452 = vunpack.c.l.b16 %v1347
    %v1453 = vunpack.c.h.b16 %v1347
    %v1454 = vunpack.c.l.b16 %v1348
    %v1455 = vunpack.c.h.b16 %v1348
    %v1456 = vunpack.c.l.b16 %v1349
    %v1457 = vunpack.c.h.b16 %v1349
    %v1458 = vunpack.c.l.b16 %v1350
    %v1459 = vunpack.c.h.b16 %v1350
    %v1460 = vunpack.c.l.b16 %v1351
    %v1461 = vunpack.c.h.b16 %v1351
    %v1462 = vunpack.c.l.b16 %v1352
    %v1463 = vunpack.c.h.b16 %v1352
    %v1464 = vunpack.c.l.b16 %v1353
    %v1465 = vunpack.c.h.b16 %v1353
    %v1466 = vunpack.c.l.b16 %v1354
    %v1467 = vunpack.c.h.b16 %v1354
    %v1468 = vunpack.c.l.b16 %v1355
    %v1469 = vunpack.c.h.b16 %v1355
    %v1470 = vunpack.c.l.b16 %v1356
    %v1471 = vunpack.c.h.b16 %v1356
    %v1472 = vunpack.c.l.b16 %v1357
    %v1473 = vunpack.c.h.b16 %v1357
    %v1474 = vunpack.c.l.b16 %v1358
    %v1475 = vunpack.c.h.b16 %v1358
    %v1476 = vunpack.c.l.b16 %v1359
    %v1477 = vunpack.c.h.b16 %v1359
    %v1478 = vunpack.c.l.b16 %v1360
    %v1479 = vunpack.c.h.b16 %v1360
    %v1480 = vunpack.c.l.b16 %v1361
    %v1481 = vunpack.c.h.b16 %v1361
    %v1482 = vunpack.c.l.b16 %v1362
    %v1483 = vunpack.c.h.b16 %v1362
    %v1484 = vunpack.c.l.b16 %v1363
    %v1485 = vunpack.c.h.b16 %v1363
    %v1486 = vunpack.c.l.b16 %v1364
    %v1487 = vunpack.c.h.b16 %v1364
    %v1488 = vunpack.c.l.b16 %v1365
    %v1489 = vunpack.c.h.b16 %v1365
    %v1490 = vunpack.c.l.b16 %v1366
    %v1491 = vunpack.c.h.b16 %v1366
    %v1492 = vunpack.c.l.b16 %v1367
    %v1493 = vunpack.c.h.b16 %v1367
    %v1494 = vunpack.c.l.b16 %v1368
    %v1495 = vunpack.c.h.b16 %v1368
    %v1496 = vpack.c.b16 %v1434, %v1432
    %v1497 = vpack.c.b16 %v1435, %v1433
    %v1498 = vpack.c.b16 %v1438, %v1436
    %v1499 = vpack.c.b16 %v1439, %v1437
    %v1500 = vpack.c.b16 %v1442, %v1440
    %v1501 = vpack.c.b16 %v1443, %v1441
    %v1502 = vpack.c.b16 %v1446, %v1444
    %v1503 = vpack.c.b16 %v1447, %v1445
    %v1504 = vpack.c.b16 %v1450, %v1448
    %v1505 = vpack.c.b16 %v1451, %v1449
    %v1506 = vpack.c.b16 %v1454, %v1452
    %v1507 = vpack.c.b16 %v1455, %v1453
    %v1508 = vpack.c.b16 %v1458, %v1456
    %v1509 = vpack.c.b16 %v1459, %v1457
    %v1510 = vpack.c.b16 %v1462, %v1460
    %v1511 = vpack.c.b16 %v1463, %v1461
    %v1512 = vpack.c.b16 %v1466, %v1464
    %v1513 = vpack.c.b16 %v1467, %v1465
    %v1514 = vpack.c.b16 %v1470, %v1468
    %v1515 = vpack.c.b16 %v1471, %v1469
    %v1516 = vpack.c.b16 %v1474, %v1472
    %v1517 = vpack.c.b16 %v1475, %v1473
    %v1518 = vpack.c.b16 %v1478, %v1476
    %v1519 = vpack.c.b16 %v1479, %v1477
    %v1520 = vpack.c.b16 %v1482, %v1480
    %v1521 = vpack.c.b16 %v1483, %v1481
    %v1522 = vpack.c.b16 %v1486, %v1484
    %v1523 = vpack.c.b16 %v1487, %v1485
    %v1524 = vpack.c.b16 %v1490, %v1488
    %v1525 = vpack.c.b16 %v1491, %v1489
    %v1526 = vpack.c.b16 %v1494, %v1492
    %v1527 = vpack.c.b16 %v1495, %v1493
    %1560 = vmatpush.bf16.msra.mxu0 %v1510
    %1561 = vmatpush.bf16.msra.mxu0 %v1508
    %1562 = vmatpush.bf16.msra.mxu0 %v1506
    %1563 = vmatpush.bf16.msra.mxu0 %v1504
    %1564 = vmatpush.bf16.msra.mxu0 %v1502
    %1565 = vmatpush.bf16.msra.mxu0 %v1500
    %1566 = vmatpush.bf16.msra.mxu0 %v1498
    %1567 = vmatpush.bf16.msra.mxu0 %v1496
    %1568 = vmatmul.bf16.gmra.mxu0 %v1380
    %v1569 = vpop.f32.mrf.mxu0
    %v1570 = vadd.f32 0.0, %v1569
    %v1571 = vpop.f32.mrf.mxu0
    %v1572 = vadd.f32 0.0, %v1571
    %1573 = vmatmul.bf16.gmra.mxu0 %v1385
    %v1574 = vpop.f32.mrf.mxu0
    %v1575 = vadd.f32 0.0, %v1574
    %v1576 = vpop.f32.mrf.mxu0
    %v1577 = vadd.f32 0.0, %v1576
    %1578 = vmatmul.bf16.gmra.mxu0 %v1389
    %v1579 = vpop.f32.mrf.mxu0
    %v1580 = vadd.f32 0.0, %v1579
    %v1581 = vpop.f32.mrf.mxu0
    %v1582 = vadd.f32 0.0, %v1581
    %1583 = vmatmul.bf16.gmra.mxu0 %v1388
    %v1584 = vpop.f32.mrf.mxu0
    %v1585 = vadd.f32 0.0, %v1584
    %v1586 = vpop.f32.mrf.mxu0
    %v1587 = vadd.f32 0.0, %v1586
    %1588 = vdwg.mxu0
    %1589 = vmatpush.bf16.msra.mxu0 %v1526
    %1590 = vmatpush.bf16.msra.mxu0 %v1524
    %1591 = vmatpush.bf16.msra.mxu0 %v1522
    %1592 = vmatpush.bf16.msra.mxu0 %v1520
    %1593 = vmatpush.bf16.msra.mxu0 %v1518
    %1594 = vmatpush.bf16.msra.mxu0 %v1516
    %1595 = vmatpush.bf16.msra.mxu0 %v1514
    %1596 = vmatpush.bf16.msra.mxu0 %v1512
    %1597 = vmatmul.bf16.gmra.mxu0 %v1383
    %v1598 = vpop.f32.mrf.mxu0
    %v1599 = vadd.f32 %v1570, %v1598
    %v1600 = vpop.f32.mrf.mxu0
    %v1601 = vadd.f32 %v1572, %v1600
    %1602 = vmatmul.bf16.gmra.mxu0 %v1387
    %v1603 = vpop.f32.mrf.mxu0
    %v1604 = vadd.f32 %v1575, %v1603
    %v1605 = vpop.f32.mrf.mxu0
    %v1606 = vadd.f32 %v1577, %v1605
    %1607 = vmatmul.bf16.gmra.mxu0 %v1391
    %v1608 = vpop.f32.mrf.mxu0
    %v1609 = vadd.f32 %v1580, %v1608
    %v1610 = vpop.f32.mrf.mxu0
    %v1611 = vadd.f32 %v1582, %v1610
    %1612 = vmatmul.bf16.gmra.mxu0 %v1390
    %v1613 = vpop.f32.mrf.mxu0
    %v1614 = vadd.f32 %v1585, %v1613
    %v1615 = vpop.f32.mrf.mxu0
    %v1616 = vadd.f32 %v1587, %v1615
    %1617 = vdwg.mxu0
    %1618 = vmatpush.bf16.msra.mxu0 %v1511
    %1619 = vmatpush.bf16.msra.mxu0 %v1509
    %1620 = vmatpush.bf16.msra.mxu0 %v1507
    %1621 = vmatpush.bf16.msra.mxu0 %v1505
    %1622 = vmatpush.bf16.msra.mxu0 %v1503
    %1623 = vmatpush.bf16.msra.mxu0 %v1501
    %1624 = vmatpush.bf16.msra.mxu0 %v1499
    %1625 = vmatpush.bf16.msra.mxu0 %v1497
    %1626 = vmatmul.bf16.gmra.mxu0 %v1380
    %v1627 = vpop.f32.mrf.mxu0
    %v1628 = vadd.f32 0.0, %v1627
    %v1629 = vpop.f32.mrf.mxu0
    %v1630 = vadd.f32 0.0, %v1629
    %1631 = vmatmul.bf16.gmra.mxu0 %v1385
    %v1632 = vpop.f32.mrf.mxu0
    %v1633 = vadd.f32 0.0, %v1632
    %v1634 = vpop.f32.mrf.mxu0
    %v1635 = vadd.f32 0.0, %v1634
    %1636 = vmatmul.bf16.gmra.mxu0 %v1389
    %v1637 = vpop.f32.mrf.mxu0
    %v1638 = vadd.f32 0.0, %v1637
    %v1639 = vpop.f32.mrf.mxu0
    %v1640 = vadd.f32 0.0, %v1639
    %1641 = vmatmul.bf16.gmra.mxu0 %v1388
    %v1642 = vpop.f32.mrf.mxu0
    %v1643 = vadd.f32 0.0, %v1642
    %v1644 = vpop.f32.mrf.mxu0
    %v1645 = vadd.f32 0.0, %v1644
    %1646 = vdwg.mxu0
    %1647 = vmatpush.bf16.msra.mxu0 %v1527
    %1648 = vmatpush.bf16.msra.mxu0 %v1525
    %1649 = vmatpush.bf16.msra.mxu0 %v1523
    %1650 = vmatpush.bf16.msra.mxu0 %v1521
    %1651 = vmatpush.bf16.msra.mxu0 %v1519
    %1652 = vmatpush.bf16.msra.mxu0 %v1517
    %1653 = vmatpush.bf16.msra.mxu0 %v1515
    %1654 = vmatpush.bf16.msra.mxu0 %v1513
    %1655 = vmatmul.bf16.gmra.mxu0 %v1383
    %v1656 = vpop.f32.mrf.mxu0
    %v1657 = vadd.f32 %v1628, %v1656
    %v1658 = vpop.f32.mrf.mxu0
    %v1659 = vadd.f32 %v1630, %v1658
    %1660 = vmatmul.bf16.gmra.mxu0 %v1387
    %v1661 = vpop.f32.mrf.mxu0
    %v1662 = vadd.f32 %v1633, %v1661
    %v1663 = vpop.f32.mrf.mxu0
    %v1664 = vadd.f32 %v1635, %v1663
    %1665 = vmatmul.bf16.gmra.mxu0 %v1391
    %v1666 = vpop.f32.mrf.mxu0
    %v1667 = vadd.f32 %v1638, %v1666
    %v1668 = vpop.f32.mrf.mxu0
    %v1669 = vadd.f32 %v1640, %v1668
    %1670 = vmatmul.bf16.gmra.mxu0 %v1390
    %v1671 = vpop.f32.mrf.mxu0
    %v1672 = vadd.f32 %v1643, %v1671
    %v1673 = vpop.f32.mrf.mxu0
    %v1674 = vadd.f32 %v1645, %v1673
    %1675 = vdwg.mxu0
    %v1676 = vadd.f32 %v1251, %v1599
    %v1677 = vadd.f32 %v1309, %v1657
    %v1678 = vadd.f32 %v1253, %v1601
    %v1679 = vadd.f32 %v1311, %v1659
    %v1680 = vadd.f32 %v1256, %v1604
    %v1681 = vadd.f32 %v1314, %v1662
    %v1682 = vadd.f32 %v1258, %v1606
    %v1683 = vadd.f32 %v1316, %v1664
    %v1684 = vadd.f32 %v1261, %v1609
    %v1685 = vadd.f32 %v1319, %v1667
    %v1686 = vadd.f32 %v1263, %v1611
    %v1687 = vadd.f32 %v1321, %v1669
    %v1688 = vadd.f32 %v1266, %v1614
    %v1689 = vadd.f32 %v1324, %v1672
    %v1690 = vadd.f32 %v1268, %v1616
    %v1691 = vadd.f32 %v1326, %v1674
    %v1692 = vld [vmem:[#allocation13] sm:$0x3]
    %v1694 = vperm.slane %v1692, 0
    %v1695 = vperm.slane %v1692, 1
    %v1698 = vadd.f32 %v1676, %v1694
    %v1699 = vadd.f32 %v1677, %v1695
    %v1700 = vadd.f32 %v1678, %v1694
    %v1701 = vadd.f32 %v1679, %v1695
    %v1702 = vadd.f32 %v1680, %v1694
    %v1703 = vadd.f32 %v1681, %v1695
    %v1704 = vadd.f32 %v1682, %v1694
    %v1705 = vadd.f32 %v1683, %v1695
    %v1706 = vadd.f32 %v1684, %v1694
    %v1707 = vadd.f32 %v1685, %v1695
    %v1708 = vadd.f32 %v1686, %v1694
    %v1709 = vadd.f32 %v1687, %v1695
    %v1710 = vadd.f32 %v1688, %v1694
    %v1711 = vadd.f32 %v1689, %v1695
    %v1712 = vadd.f32 %v1690, %v1694
    %v1713 = vadd.f32 %v1691, %v1695
    %v1714 = vmax.f32 %v1698, 0.0
    %v1715 = vmax.f32 %v1699, 0.0
    %v1716 = vmax.f32 %v1700, 0.0
    %v1717 = vmax.f32 %v1701, 0.0
    %v1718 = vmax.f32 %v1702, 0.0
    %v1719 = vmax.f32 %v1703, 0.0
    %v1720 = vmax.f32 %v1704, 0.0
    %v1721 = vmax.f32 %v1705, 0.0
    %v1722 = vmax.f32 %v1706, 0.0
    %v1723 = vmax.f32 %v1707, 0.0
    %v1724 = vmax.f32 %v1708, 0.0
    %v1725 = vmax.f32 %v1709, 0.0
    %v1726 = vmax.f32 %v1710, 0.0
    %v1727 = vmax.f32 %v1711, 0.0
    %v1728 = vmax.f32 %v1712, 0.0
    %v1729 = vmax.f32 %v1713, 0.0
    %v1730 = vld [vmem:[#allocation15] sm:$0x3]
    %v1732 = vperm.slane %v1730, 0
    %v1733 = vperm.slane %v1730, 1
    %v1736 = vmul.f32 %v1714, %v1732
    %v1737 = vmul.f32 %v1715, %v1733
    %v1738 = vmul.f32 %v1716, %v1732
    %v1739 = vmul.f32 %v1717, %v1733
    %v1740 = vmul.f32 %v1718, %v1732
    %v1741 = vmul.f32 %v1719, %v1733
    %v1742 = vmul.f32 %v1720, %v1732
    %v1743 = vmul.f32 %v1721, %v1733
    %v1744 = vmul.f32 %v1722, %v1732
    %v1745 = vmul.f32 %v1723, %v1733
    %v1746 = vmul.f32 %v1724, %v1732
    %v1747 = vmul.f32 %v1725, %v1733
    %v1748 = vmul.f32 %v1726, %v1732
    %v1749 = vmul.f32 %v1727, %v1733
    %v1750 = vmul.f32 %v1728, %v1732
    %v1751 = vmul.f32 %v1729, %v1733
    %v1752 = vld [vmem:[#allocation16] sm:$0x3]
    %v1754 = vperm.slane %v1752, 0
    %v1755 = vperm.slane %v1752, 1
    %v1758 = vadd.f32 %v1736, %v1754
    %v1759 = vadd.f32 %v1737, %v1755
    %v1760 = vadd.f32 %v1738, %v1754
    %v1761 = vadd.f32 %v1739, %v1755
    %v1762 = vadd.f32 %v1740, %v1754
    %v1763 = vadd.f32 %v1741, %v1755
    %v1764 = vadd.f32 %v1742, %v1754
    %v1765 = vadd.f32 %v1743, %v1755
    %v1766 = vadd.f32 %v1744, %v1754
    %v1767 = vadd.f32 %v1745, %v1755
    %v1768 = vadd.f32 %v1746, %v1754
    %v1769 = vadd.f32 %v1747, %v1755
    %v1770 = vadd.f32 %v1748, %v1754
    %v1771 = vadd.f32 %v1749, %v1755
    %v1772 = vadd.f32 %v1750, %v1754
    %v1773 = vadd.f32 %v1751, %v1755
    %v1774 = vpack.c.bf16 %v1760, %v1758
    %v1775 = vpack.c.bf16 %v1761, %v1759
    %v1776 = vpack.c.bf16 %v1764, %v1762
    %v1777 = vpack.c.bf16 %v1765, %v1763
    %v1778 = vpack.c.bf16 %v1768, %v1766
    %v1779 = vpack.c.bf16 %v1769, %v1767
    %v1780 = vpack.c.bf16 %v1772, %v1770
    %v1781 = vpack.c.bf16 %v1773, %v1771
    %v1782 = vld [vmem:[#allocation18] sm:$0xf]
    %v1783 = vld [vmem:[#allocation18 + $0x4] sm:$0xf]
    %v1784 = vld [vmem:[#allocation18 + $0x8] sm:$0xf]
    %v1785 = vld [vmem:[#allocation18 + $0xc] sm:$0xf]
    %v1786 = vld [vmem:[#allocation18 + $0x10] sm:$0xf]
    %v1787 = vld [vmem:[#allocation18 + $0x14] sm:$0xf]
    %v1788 = vld [vmem:[#allocation18 + $0x18] sm:$0xf]
    %v1789 = vld [vmem:[#allocation18 + $0x1c] sm:$0xf]
    %v1790 = vld [vmem:[#allocation18 + $0x20] sm:$0xf]
    %v1791 = vld [vmem:[#allocation18 + $0x24] sm:$0xf]
    %v1792 = vld [vmem:[#allocation18 + $0x28] sm:$0xf]
    %v1793 = vld [vmem:[#allocation18 + $0x2c] sm:$0xf]
    %v1794 = vld [vmem:[#allocation18 + $0x30] sm:$0xf]
    %v1795 = vld [vmem:[#allocation18 + $0x34] sm:$0xf]
    %v1796 = vld [vmem:[#allocation18 + $0x38] sm:$0xf]
    %v1797 = vld [vmem:[#allocation18 + $0x3c] sm:$0xf]
    %v1798 = vld [vmem:[#allocation18 + $0x40] sm:$0xf]
    %v1799 = vld [vmem:[#allocation18 + $0x44] sm:$0xf]
    %v1800 = vld [vmem:[#allocation18 + $0x48] sm:$0xf]
    %v1801 = vld [vmem:[#allocation18 + $0x4c] sm:$0xf]
    %v1802 = vld [vmem:[#allocation18 + $0x50] sm:$0xf]
    %v1803 = vld [vmem:[#allocation18 + $0x54] sm:$0xf]
    %v1804 = vld [vmem:[#allocation18 + $0x58] sm:$0xf]
    %v1805 = vld [vmem:[#allocation18 + $0x5c] sm:$0xf]
    %v1806 = vld [vmem:[#allocation18 + $0x60] sm:$0xf]
    %v1807 = vld [vmem:[#allocation18 + $0x64] sm:$0xf]
    %v1808 = vld [vmem:[#allocation18 + $0x68] sm:$0xf]
    %v1809 = vld [vmem:[#allocation18 + $0x6c] sm:$0xf]
    %v1810 = vld [vmem:[#allocation18 + $0x70] sm:$0xf]
    %v1811 = vld [vmem:[#allocation18 + $0x74] sm:$0xf]
    %v1812 = vld [vmem:[#allocation18 + $0x78] sm:$0xf]
    %v1813 = vld [vmem:[#allocation18 + $0x7c] sm:$0xf]
    %v1846 = vunpack.c.l.b16 %v1782
    %v1847 = vunpack.c.l.b16 %v1783
    %v1848 = vunpack.c.l.b16 %v1784
    %v1849 = vunpack.c.l.b16 %v1785
    %v1850 = vunpack.c.l.b16 %v1786
    %v1851 = vunpack.c.l.b16 %v1787
    %v1852 = vunpack.c.l.b16 %v1788
    %v1853 = vunpack.c.l.b16 %v1789
    %v1854 = vunpack.c.l.b16 %v1790
    %v1855 = vunpack.c.l.b16 %v1791
    %v1856 = vunpack.c.l.b16 %v1792
    %v1857 = vunpack.c.l.b16 %v1793
    %v1858 = vunpack.c.l.b16 %v1794
    %v1859 = vunpack.c.l.b16 %v1795
    %v1860 = vunpack.c.l.b16 %v1796
    %v1861 = vunpack.c.l.b16 %v1797
    %v1862 = vunpack.c.l.b16 %v1798
    %v1863 = vunpack.c.l.b16 %v1799
    %v1864 = vunpack.c.l.b16 %v1800
    %v1865 = vunpack.c.l.b16 %v1801
    %v1866 = vunpack.c.l.b16 %v1802
    %v1867 = vunpack.c.l.b16 %v1803
    %v1868 = vunpack.c.l.b16 %v1804
    %v1869 = vunpack.c.l.b16 %v1805
    %v1870 = vunpack.c.l.b16 %v1806
    %v1871 = vunpack.c.l.b16 %v1807
    %v1872 = vunpack.c.l.b16 %v1808
    %v1873 = vunpack.c.l.b16 %v1809
    %v1874 = vunpack.c.l.b16 %v1810
    %v1875 = vunpack.c.l.b16 %v1811
    %v1876 = vunpack.c.l.b16 %v1812
    %v1877 = vunpack.c.l.b16 %v1813
    %v1878 = vpack.c.b16 %v1847, %v1846
    %v1879 = vpack.c.b16 %v1849, %v1848
    %v1880 = vpack.c.b16 %v1851, %v1850
    %v1881 = vpack.c.b16 %v1853, %v1852
    %v1882 = vpack.c.b16 %v1855, %v1854
    %v1883 = vpack.c.b16 %v1857, %v1856
    %v1884 = vpack.c.b16 %v1859, %v1858
    %v1885 = vpack.c.b16 %v1861, %v1860
    %v1886 = vpack.c.b16 %v1863, %v1862
    %v1887 = vpack.c.b16 %v1865, %v1864
    %v1888 = vpack.c.b16 %v1867, %v1866
    %v1889 = vpack.c.b16 %v1869, %v1868
    %v1890 = vpack.c.b16 %v1871, %v1870
    %v1891 = vpack.c.b16 %v1873, %v1872
    %v1892 = vpack.c.b16 %v1875, %v1874
    %v1893 = vpack.c.b16 %v1877, %v1876
    %1910 = vmatpush.bf16.msra.mxu0 %v1885
    %1911 = vmatpush.bf16.msra.mxu0 %v1884
    %1912 = vmatpush.bf16.msra.mxu0 %v1883
    %1913 = vmatpush.bf16.msra.mxu0 %v1882
    %1914 = vmatpush.bf16.msra.mxu0 %v1881
    %1915 = vmatpush.bf16.msra.mxu0 %v1880
    %1916 = vmatpush.bf16.msra.mxu0 %v1879
    %1917 = vmatpush.bf16.msra.mxu0 %v1878
    %1918 = vmatmul.bf16.gmra.mxu0 %v1774
    %v1919 = vpop.f32.mrf.mxu0
    %v1920 = vadd.f32 0.0, %v1919
    %v1921 = vpop.f32.mrf.mxu0
    %v1922 = vadd.f32 0.0, %v1921
    %1923 = vmatmul.bf16.gmra.mxu0 %v1776
    %v1924 = vpop.f32.mrf.mxu0
    %v1925 = vadd.f32 0.0, %v1924
    %v1926 = vpop.f32.mrf.mxu0
    %v1927 = vadd.f32 0.0, %v1926
    %1928 = vmatmul.bf16.gmra.mxu0 %v1778
    %v1929 = vpop.f32.mrf.mxu0
    %v1930 = vadd.f32 0.0, %v1929
    %v1931 = vpop.f32.mrf.mxu0
    %v1932 = vadd.f32 0.0, %v1931
    %1933 = vmatmul.bf16.gmra.mxu0 %v1780
    %v1934 = vpop.f32.mrf.mxu0
    %v1935 = vadd.f32 0.0, %v1934
    %v1936 = vpop.f32.mrf.mxu0
    %v1937 = vadd.f32 0.0, %v1936
    %1938 = vdwg.mxu0
    %1939 = vmatpush.bf16.msra.mxu0 %v1893
    %1940 = vmatpush.bf16.msra.mxu0 %v1892
    %1941 = vmatpush.bf16.msra.mxu0 %v1891
    %1942 = vmatpush.bf16.msra.mxu0 %v1890
    %1943 = vmatpush.bf16.msra.mxu0 %v1889
    %1944 = vmatpush.bf16.msra.mxu0 %v1888
    %1945 = vmatpush.bf16.msra.mxu0 %v1887
    %1946 = vmatpush.bf16.msra.mxu0 %v1886
    %1947 = vmatmul.bf16.gmra.mxu0 %v1775
    %v1948 = vpop.f32.mrf.mxu0
    %v1949 = vadd.f32 %v1920, %v1948
    %v1950 = vpop.f32.mrf.mxu0
    %v1951 = vadd.f32 %v1922, %v1950
    %1952 = vmatmul.bf16.gmra.mxu0 %v1777
    %v1953 = vpop.f32.mrf.mxu0
    %v1954 = vadd.f32 %v1925, %v1953
    %v1955 = vpop.f32.mrf.mxu0
    %v1956 = vadd.f32 %v1927, %v1955
    %1957 = vmatmul.bf16.gmra.mxu0 %v1779
    %v1958 = vpop.f32.mrf.mxu0
    %v1959 = vadd.f32 %v1930, %v1958
    %v1960 = vpop.f32.mrf.mxu0
    %v1961 = vadd.f32 %v1932, %v1960
    %1962 = vmatmul.bf16.gmra.mxu0 %v1781
    %v1963 = vpop.f32.mrf.mxu0
    %v1964 = vadd.f32 %v1935, %v1963
    %v1965 = vpop.f32.mrf.mxu0
    %v1966 = vadd.f32 %v1937, %v1965
    %1967 = vdwg.mxu0
    %v1968 = vld [vmem:[#allocation19] sm:$0xf]
    %v1969 = vld [vmem:[#allocation19 + $0x4] sm:$0xf]
    %v1970 = vld [vmem:[#allocation19 + $0x8] sm:$0xf]
    %v1971 = vld [vmem:[#allocation19 + $0xc] sm:$0x3]
    %v1972 = vpack.c.bf16 %v1951, %v1949
    %v1973 = vpack.c.bf16 %v1956, %v1954
    %v1974 = vpack.c.bf16 %v1961, %v1959
    %v1975 = vpack.c.bf16 %v1966, %v1964
    %v1980 = vunpack.c.l.b16 %v1968
    %v1981 = vunpack.c.l.b16 %v1969
    %v1982 = vunpack.c.l.b16 %v1970
    %v1983 = vunpack.c.l.b16 %v1971
    %v1984 = vpack.c.b16 %v1981, %v1980
    %v1985 = vpack.c.b16 %v1983, %v1982
    %vm1986 = vcmask 490496
    %v1988 = vsel %vm1986, %v1984, 0
    %v1991 = vsel %vm1986, %v1985, 0
    %vm1993 = vcmask 1045504
    %v1995 = vsel %vm1993, %v1975, 0
    %1997 = vmatpush.bf16.msra.mxu0 0
    %1998 = vmatpush.bf16.msra.mxu0 0
    %1999 = vmatpush.bf16.msra.mxu0 0
    %2000 = vmatpush.bf16.msra.mxu0 0
    %2001 = vmatpush.bf16.msra.mxu0 %v1995
    %2002 = vmatpush.bf16.msra.mxu0 %v1974
    %2003 = vmatpush.bf16.msra.mxu0 %v1973
    %2004 = vmatpush.bf16.msra.mxu0 %v1972
    %2005 = vmatmul.bf16.gmra.mxu0 %v1988
    %v2006 = vpop.f32.mrf.mxu0
    %v2007 = vadd.f32 0.0, %v2006
    %v2008 = vpop.f32.mrf.mxu0
    %v2009 = vadd.f32 0.0, %v2008
    %2010 = vmatmul.bf16.gmra.mxu0 %v1991
    %v2011 = vpop.f32.mrf.mxu0
    %v2012 = vadd.f32 0.0, %v2011
    %v2013 = vpop.f32.mrf.mxu0
    %v2014 = vadd.f32 0.0, %v2013
    %2015 = vdwg.mxu0
    %2016 = vst [vmem:[#allocation3] sm:$0x3] %v2007
    %2018 = vst.sshfl [vmem:[#allocation1] sm:$0xff pattern:$0x73625140] %v2007
    %s2019 = scalar_lea.vmem [#allocation1], 1
    %v2020 = vld [vmem:[%s2019] ss:$4 sm:$0xff]
    %2022 = vst [vmem:[#allocation3 + $0x2] sm:$0x3] %v2020
    %2023 = vst.sshfl [vmem:[#allocation1] sm:$0xff pattern:$0x73625140] %v2007
    %s2024 = scalar_lea.vmem [#allocation1], 2
    %v2025 = vld [vmem:[%s2024] ss:$4 sm:$0xff]
    %2027 = vst [vmem:[#allocation3 + $0x4] sm:$0x3] %v2025
    %2028 = vst.sshfl [vmem:[#allocation1] sm:$0xff pattern:$0x73625140] %v2007
    %s2029 = scalar_lea.vmem [#allocation1], 3
    %v2030 = vld [vmem:[%s2029] ss:$4 sm:$0xff]
    %2032 = vst [vmem:[#allocation3 + $0x6] sm:$0x3] %v2030
    %2033 = vst [vmem:[#allocation3 + $0x8] sm:$0x3] %v2009
    %2035 = vst.sshfl [vmem:[#allocation1] sm:$0xff pattern:$0x73625140] %v2009
    %s2036 = scalar_lea.vmem [#allocation1], 1
    %v2037 = vld [vmem:[%s2036] ss:$4 sm:$0xff]
    %2039 = vst [vmem:[#allocation3 + $0xa] sm:$0x3] %v2037
    %2040 = vst.sshfl [vmem:[#allocation1] sm:$0xff pattern:$0x73625140] %v2009
    %s2041 = scalar_lea.vmem [#allocation1], 2
    %v2042 = vld [vmem:[%s2041] ss:$4 sm:$0xff]
    %2044 = vst [vmem:[#allocation3 + $0xc] sm:$0x3] %v2042
    %2045 = vst.sshfl [vmem:[#allocation1] sm:$0xff pattern:$0x73625140] %v2009
    %s2046 = scalar_lea.vmem [#allocation1], 3
    %v2047 = vld [vmem:[%s2046] ss:$4 sm:$0xff]
    %2049 = vst [vmem:[#allocation3 + $0xe] sm:$0x3] %v2047
    %2050 = vst [vmem:[#allocation3 + $0x10] sm:$0x3] %v2012
    %2052 = vst.sshfl [vmem:[#allocation1] sm:$0xff pattern:$0x73625140] %v2012
    %s2053 = scalar_lea.vmem [#allocation1], 1
    %v2054 = vld [vmem:[%s2053] ss:$4 sm:$0xff]
    %2056 = vst [vmem:[#allocation3 + $0x12] sm:$0x3] %v2054
    %2057 = vst.sshfl [vmem:[#allocation1] sm:$0xff pattern:$0x73625140] %v2012
    %s2058 = scalar_lea.vmem [#allocation1], 2
    %v2059 = vld [vmem:[%s2058] ss:$4 sm:$0xff]
    %2061 = vst [vmem:[#allocation3 + $0x14] sm:$0x3] %v2059
    %2062 = vst.sshfl [vmem:[#allocation1] sm:$0xff pattern:$0x73625140] %v2012
    %s2063 = scalar_lea.vmem [#allocation1], 3
    %v2064 = vld [vmem:[%s2063] ss:$4 sm:$0xff]
    %2066 = vst [vmem:[#allocation3 + $0x16] sm:$0x3] %v2064
    %2067 = vst [vmem:[#allocation3 + $0x18] sm:$0x3] %v2014
    %2069 = vst.sshfl [vmem:[#allocation1] sm:$0xff pattern:$0x73625140] %v2014
    %s2070 = scalar_lea.vmem [#allocation1], 1
    %v2071 = vld [vmem:[%s2070] ss:$4 sm:$0xff]
    %2073 = vst [vmem:[#allocation3 + $0x1a] sm:$0x3] %v2071
    %v2074 = vld [vmem:[#allocation3] sm:$0xff]
    %v2075 = vld [vmem:[#allocation3 + $0x8] sm:$0xff]
    %v2076 = vld [vmem:[#allocation3 + $0x10] sm:$0xff]
    %v2077 = vld [vmem:[#allocation3 + $0x18] sm:$0xf]
    %2082 = vst [vmem:[#allocation1] ss:$4 sm:$0xff] %v2074
    %s2083 = scalar_lea.vmem [#allocation1], 32
    %2084 = vst [vmem:[%s2083] ss:$4 sm:$0xff] %v2075
    %v2085 = vld.sshfl [vmem:[#allocation1] sm:$0xff pattern:$0x73625140]
    %v2086 = vld.sshfl [vmem:[#allocation1 + $0x8] sm:$0xff pattern:$0x73625140]
    %v2087 = vld.sshfl [vmem:[#allocation1 + $0x10] sm:$0xff pattern:$0x73625140]
    %v2088 = vld.sshfl [vmem:[#allocation1 + $0x18] sm:$0xff pattern:$0x73625140]
    %v2089 = vld.sshfl [vmem:[#allocation1 + $0x20] sm:$0xff pattern:$0x73625140]
    %v2090 = vld.sshfl [vmem:[#allocation1 + $0x28] sm:$0xff pattern:$0x73625140]
    %v2091 = vld.sshfl [vmem:[#allocation1 + $0x30] sm:$0xff pattern:$0x73625140]
    %v2092 = vld.sshfl [vmem:[#allocation1 + $0x38] sm:$0xff pattern:$0x73625140]
    %2093 = vst [vmem:[#allocation1] ss:$4 sm:$0xff] %v2076
    %2094 = vst [vmem:[%s2083] ss:$4 sm:$0xff] %v2077
    %v2095 = vld.sshfl [vmem:[#allocation1] sm:$0xff pattern:$0x73625140]
    %v2096 = vld.sshfl [vmem:[#allocation1 + $0x8] sm:$0xff pattern:$0x73625140]
    %v2097 = vld.sshfl [vmem:[#allocation1 + $0x10] sm:$0xff pattern:$0x73625140]
    %v2098 = vld.sshfl [vmem:[#allocation1 + $0x18] sm:$0xff pattern:$0x73625140]
    %v2099 = vld.sshfl [vmem:[#allocation1 + $0x20] sm:$0xff pattern:$0x73625140]
    %v2100 = vld.sshfl [vmem:[#allocation1 + $0x28] sm:$0xff pattern:$0x73625140]
    %v2115 = vpack.c.bf16 %v2085, %v2085
    %v2116 = vpack.c.bf16 %v2086, %v2086
    %v2117 = vpack.c.bf16 %v2087, %v2087
    %v2118 = vpack.c.bf16 %v2088, %v2088
    %v2119 = vpack.c.bf16 %v2089, %v2089
    %v2120 = vpack.c.bf16 %v2090, %v2090
    %v2121 = vpack.c.bf16 %v2091, %v2091
    %v2122 = vpack.c.bf16 %v2092, %v2092
    %v2123 = vpack.c.bf16 %v2095, %v2095
    %v2124 = vpack.c.bf16 %v2096, %v2096
    %v2125 = vpack.c.bf16 %v2097, %v2097
    %v2126 = vpack.c.bf16 %v2098, %v2098
    %v2127 = vpack.c.bf16 %v2099, %v2099
    %v2128 = vpack.c.bf16 %v2100, %v2100
    %v2129 = vld [vmem:[#allocation21] sm:$0xff]
    %v2130 = vld [vmem:[#allocation21 + $0x8] sm:$0xff]
    %v2131 = vld [vmem:[#allocation21 + $0x10] sm:$0xff]
    %v2132 = vld [vmem:[#allocation21 + $0x18] sm:$0xff]
    %v2133 = vld [vmem:[#allocation21 + $0x20] sm:$0xff]
    %v2134 = vld [vmem:[#allocation21 + $0x28] sm:$0xff]
    %v2135 = vld [vmem:[#allocation21 + $0x30] sm:$0xff]
    %v2136 = vld [vmem:[#allocation21 + $0x38] sm:$0xff]
    %v2137 = vld [vmem:[#allocation21 + $0x40] sm:$0xff]
    %v2138 = vld [vmem:[#allocation21 + $0x48] sm:$0xff]
    %v2139 = vld [vmem:[#allocation21 + $0x50] sm:$0xff]
    %v2140 = vld [vmem:[#allocation21 + $0x58] sm:$0xff]
    %v2141 = vld [vmem:[#allocation21 + $0x60] sm:$0xff]
    %v2142 = vld [vmem:[#allocation21 + $0x68] sm:$0xff]
    %v2143 = vld [vmem:[#allocation21 + $0x70] sm:$0xff]
    %v2144 = vld [vmem:[#allocation21 + $0x78] sm:$0xff]
    %v2145 = vld [vmem:[#allocation21 + $0x80] sm:$0xff]
    %v2146 = vld [vmem:[#allocation21 + $0x88] sm:$0xff]
    %v2147 = vld [vmem:[#allocation21 + $0x90] sm:$0xff]
    %v2148 = vld [vmem:[#allocation21 + $0x98] sm:$0xff]
    %v2149 = vld [vmem:[#allocation21 + $0xa0] sm:$0xff]
    %v2150 = vld [vmem:[#allocation21 + $0xa8] sm:$0xff]
    %v2151 = vld [vmem:[#allocation21 + $0xb0] sm:$0xff]
    %v2152 = vld [vmem:[#allocation21 + $0xb8] sm:$0xff]
    %v2153 = vld [vmem:[#allocation21 + $0xc0] sm:$0xff]
    %v2154 = vld [vmem:[#allocation21 + $0xc8] sm:$0xff]
    %v2155 = vld [vmem:[#allocation21 + $0xd0] sm:$0xff]
    %v2156 = vld [vmem:[#allocation21 + $0xd8] sm:$0xff]
    %v2157 = vld [vmem:[#allocation21 + $0xe0] sm:$0xff]
    %v2158 = vld [vmem:[#allocation21 + $0xe8] sm:$0xff]
    %v2159 = vld [vmem:[#allocation21 + $0xf0] sm:$0xff]
    %v2160 = vld [vmem:[#allocation21 + $0xf8] sm:$0xff]
    %v2161 = vld [vmem:[#allocation21 + $0x100] sm:$0xff]
    %v2162 = vld [vmem:[#allocation21 + $0x108] sm:$0xff]
    %v2163 = vld [vmem:[#allocation21 + $0x110] sm:$0xff]
    %v2164 = vld [vmem:[#allocation21 + $0x118] sm:$0xff]
    %v2165 = vld [vmem:[#allocation21 + $0x120] sm:$0xff]
    %v2166 = vld [vmem:[#allocation21 + $0x128] sm:$0xff]
    %v2167 = vld [vmem:[#allocation21 + $0x130] sm:$0xff]
    %v2168 = vld [vmem:[#allocation21 + $0x138] sm:$0xff]
    %v2169 = vld [vmem:[#allocation21 + $0x140] sm:$0xff]
    %v2170 = vld [vmem:[#allocation21 + $0x148] sm:$0xff]
    %v2171 = vld [vmem:[#allocation21 + $0x150] sm:$0xff]
    %v2172 = vld [vmem:[#allocation21 + $0x158] sm:$0xff]
    %v2173 = vld [vmem:[#allocation21 + $0x160] sm:$0xff]
    %v2174 = vld [vmem:[#allocation21 + $0x168] sm:$0xff]
    %v2175 = vld [vmem:[#allocation21 + $0x170] sm:$0xff]
    %v2176 = vld [vmem:[#allocation21 + $0x178] sm:$0xff]
    %v2177 = vld [vmem:[#allocation21 + $0x180] sm:$0xff]
    %v2178 = vld [vmem:[#allocation21 + $0x188] sm:$0xff]
    %v2179 = vld [vmem:[#allocation21 + $0x190] sm:$0xff]
    %v2180 = vld [vmem:[#allocation21 + $0x198] sm:$0xff]
    %v2181 = vld [vmem:[#allocation21 + $0x1a0] sm:$0xff]
    %v2182 = vld [vmem:[#allocation21 + $0x1a8] sm:$0xff]
    %v2183 = vld [vmem:[#allocation21 + $0x1b0] sm:$0xff]
    %v2184 = vld [vmem:[#allocation21 + $0x1b8] sm:$0xff]
    %v2185 = vld [vmem:[#allocation21 + $0x1c0] sm:$0xff]
    %v2186 = vld [vmem:[#allocation21 + $0x1c8] sm:$0xff]
    %v2187 = vld [vmem:[#allocation21 + $0x1d0] sm:$0xff]
    %v2188 = vld [vmem:[#allocation21 + $0x1d8] sm:$0xff]
    %v2189 = vld [vmem:[#allocation21 + $0x1e0] sm:$0xff]
    %v2190 = vld [vmem:[#allocation21 + $0x1e8] sm:$0xff]
    %v2191 = vld [vmem:[#allocation21 + $0x1f0] sm:$0xff]
    %v2192 = vld [vmem:[#allocation21 + $0x1f8] sm:$0xff]
    %v2193 = vld [vmem:[#allocation21 + $0x200] sm:$0xff]
    %v2194 = vld [vmem:[#allocation21 + $0x208] sm:$0xff]
    %v2195 = vld [vmem:[#allocation21 + $0x210] sm:$0xff]
    %v2196 = vld [vmem:[#allocation21 + $0x218] sm:$0xff]
    %v2197 = vld [vmem:[#allocation21 + $0x220] sm:$0xff]
    %v2198 = vld [vmem:[#allocation21 + $0x228] sm:$0xff]
    %v2199 = vld [vmem:[#allocation21 + $0x230] sm:$0xff]
    %v2200 = vld [vmem:[#allocation21 + $0x238] sm:$0xff]
    %v2201 = vld [vmem:[#allocation21 + $0x240] sm:$0xff]
    %v2202 = vld [vmem:[#allocation21 + $0x248] sm:$0xff]
    %v2203 = vld [vmem:[#allocation21 + $0x250] sm:$0xff]
    %v2204 = vld [vmem:[#allocation21 + $0x258] sm:$0xff]
    %v2205 = vld [vmem:[#allocation21 + $0x260] sm:$0xff]
    %v2206 = vld [vmem:[#allocation21 + $0x268] sm:$0xff]
    %v2207 = vld [vmem:[#allocation21 + $0x270] sm:$0xff]
    %v2208 = vld [vmem:[#allocation21 + $0x278] sm:$0xff]
    %v2209 = vld [vmem:[#allocation21 + $0x280] sm:$0xff]
    %v2210 = vld [vmem:[#allocation21 + $0x288] sm:$0xff]
    %v2211 = vld [vmem:[#allocation21 + $0x290] sm:$0xff]
    %v2212 = vld [vmem:[#allocation21 + $0x298] sm:$0xff]
    %v2213 = vld [vmem:[#allocation21 + $0x2a0] sm:$0xff]
    %v2214 = vld [vmem:[#allocation21 + $0x2a8] sm:$0xff]
    %v2215 = vld [vmem:[#allocation21 + $0x2b0] sm:$0xff]
    %v2216 = vld [vmem:[#allocation21 + $0x2b8] sm:$0xff]
    %v2217 = vld [vmem:[#allocation21 + $0x2c0] sm:$0xff]
    %v2218 = vld [vmem:[#allocation21 + $0x2c8] sm:$0xff]
    %v2219 = vld [vmem:[#allocation21 + $0x2d0] sm:$0xff]
    %v2220 = vld [vmem:[#allocation21 + $0x2d8] sm:$0xff]
    %v2221 = vld [vmem:[#allocation21 + $0x2e0] sm:$0xff]
    %v2222 = vld [vmem:[#allocation21 + $0x2e8] sm:$0xff]
    %v2223 = vld [vmem:[#allocation21 + $0x2f0] sm:$0xff]
    %v2224 = vld [vmem:[#allocation21 + $0x2f8] sm:$0xff]
    %v2225 = vld [vmem:[#allocation21 + $0x300] sm:$0xff]
    %v2226 = vld [vmem:[#allocation21 + $0x308] sm:$0xff]
    %v2227 = vld [vmem:[#allocation21 + $0x310] sm:$0xff]
    %v2228 = vld [vmem:[#allocation21 + $0x318] sm:$0xff]
    %v2229 = vld [vmem:[#allocation21 + $0x320] sm:$0xff]
    %v2230 = vld [vmem:[#allocation21 + $0x328] sm:$0xff]
    %v2231 = vld [vmem:[#allocation21 + $0x330] sm:$0xff]
    %v2232 = vld [vmem:[#allocation21 + $0x338] sm:$0xff]
    %v2233 = vld [vmem:[#allocation21 + $0x340] sm:$0xff]
    %v2234 = vld [vmem:[#allocation21 + $0x348] sm:$0xff]
    %v2235 = vld [vmem:[#allocation21 + $0x350] sm:$0xff]
    %v2236 = vld [vmem:[#allocation21 + $0x358] sm:$0xff]
    %v2237 = vld [vmem:[#allocation21 + $0x360] sm:$0xff]
    %v2238 = vld [vmem:[#allocation21 + $0x368] sm:$0xff]
    %v2239 = vld [vmem:[#allocation21 + $0x370] sm:$0xff]
    %v2240 = vld [vmem:[#allocation21 + $0x378] sm:$0xff]
    %v2241 = vld [vmem:[#allocation21 + $0x380] sm:$0xff]
    %v2242 = vld [vmem:[#allocation21 + $0x388] sm:$0xff]
    %v2243 = vld [vmem:[#allocation21 + $0x390] sm:$0xff]
    %v2244 = vld [vmem:[#allocation21 + $0x398] sm:$0xff]
    %v2245 = vld [vmem:[#allocation21 + $0x3a0] sm:$0xff]
    %v2246 = vld [vmem:[#allocation21 + $0x3a8] sm:$0xff]
    %v2247 = vld [vmem:[#allocation21 + $0x3b0] sm:$0xff]
    %v2248 = vld [vmem:[#allocation21 + $0x3b8] sm:$0xff]
    %v2249 = vld [vmem:[#allocation21 + $0x3c0] sm:$0xff]
    %v2250 = vld [vmem:[#allocation21 + $0x3c8] sm:$0xff]
    %v2251 = vld [vmem:[#allocation21 + $0x3d0] sm:$0xff]
    %v2252 = vld [vmem:[#allocation21 + $0x3d8] sm:$0xff]
    %v2253 = vld [vmem:[#allocation21 + $0x3e0] sm:$0xff]
    %v2254 = vld [vmem:[#allocation21 + $0x3e8] sm:$0xff]
    %v2255 = vld [vmem:[#allocation21 + $0x3f0] sm:$0xff]
    %v2256 = vld [vmem:[#allocation21 + $0x3f8] sm:$0xff]
    %v2257 = vld [vmem:[#allocation21 + $0x400] sm:$0xff]
    %v2258 = vld [vmem:[#allocation21 + $0x408] sm:$0xff]
    %v2259 = vld [vmem:[#allocation21 + $0x410] sm:$0xff]
    %v2260 = vld [vmem:[#allocation21 + $0x418] sm:$0xff]
    %v2261 = vld [vmem:[#allocation21 + $0x420] sm:$0xff]
    %v2262 = vld [vmem:[#allocation21 + $0x428] sm:$0xff]
    %v2263 = vld [vmem:[#allocation21 + $0x430] sm:$0xff]
    %v2264 = vld [vmem:[#allocation21 + $0x438] sm:$0xff]
    %v2265 = vld [vmem:[#allocation21 + $0x440] sm:$0xff]
    %v2266 = vld [vmem:[#allocation21 + $0x448] sm:$0xff]
    %v2267 = vld [vmem:[#allocation21 + $0x450] sm:$0xff]
    %v2268 = vld [vmem:[#allocation21 + $0x458] sm:$0xff]
    %v2269 = vld [vmem:[#allocation21 + $0x460] sm:$0xff]
    %v2270 = vld [vmem:[#allocation21 + $0x468] sm:$0xff]
    %v2271 = vld [vmem:[#allocation21 + $0x470] sm:$0xff]
    %v2272 = vld [vmem:[#allocation21 + $0x478] sm:$0xff]
    %v2273 = vld [vmem:[#allocation21 + $0x480] sm:$0xff]
    %v2274 = vld [vmem:[#allocation21 + $0x488] sm:$0xff]
    %v2275 = vld [vmem:[#allocation21 + $0x490] sm:$0xff]
    %v2276 = vld [vmem:[#allocation21 + $0x498] sm:$0xff]
    %v2277 = vld [vmem:[#allocation21 + $0x4a0] sm:$0xff]
    %v2278 = vld [vmem:[#allocation21 + $0x4a8] sm:$0xff]
    %v2279 = vld [vmem:[#allocation21 + $0x4b0] sm:$0xff]
    %v2280 = vld [vmem:[#allocation21 + $0x4b8] sm:$0xff]
    %v2281 = vld [vmem:[#allocation21 + $0x4c0] sm:$0xff]
    %v2282 = vld [vmem:[#allocation21 + $0x4c8] sm:$0xff]
    %v2283 = vld [vmem:[#allocation21 + $0x4d0] sm:$0xff]
    %v2284 = vld [vmem:[#allocation21 + $0x4d8] sm:$0xff]
    %v2285 = vld [vmem:[#allocation21 + $0x4e0] sm:$0xff]
    %v2286 = vld [vmem:[#allocation21 + $0x4e8] sm:$0xff]
    %v2287 = vld [vmem:[#allocation21 + $0x4f0] sm:$0xff]
    %v2288 = vld [vmem:[#allocation21 + $0x4f8] sm:$0xff]
    %v2289 = vld [vmem:[#allocation21 + $0x500] sm:$0xff]
    %v2290 = vld [vmem:[#allocation21 + $0x508] sm:$0xff]
    %v2291 = vld [vmem:[#allocation21 + $0x510] sm:$0xff]
    %v2292 = vld [vmem:[#allocation21 + $0x518] sm:$0xff]
    %v2293 = vld [vmem:[#allocation21 + $0x520] sm:$0xff]
    %v2294 = vld [vmem:[#allocation21 + $0x528] sm:$0xff]
    %v2295 = vld [vmem:[#allocation21 + $0x530] sm:$0xff]
    %v2296 = vld [vmem:[#allocation21 + $0x538] sm:$0xff]
    %v2297 = vld [vmem:[#allocation21 + $0x540] sm:$0xff]
    %v2298 = vld [vmem:[#allocation21 + $0x548] sm:$0xff]
    %v2299 = vld [vmem:[#allocation21 + $0x550] sm:$0xff]
    %v2300 = vld [vmem:[#allocation21 + $0x558] sm:$0xff]
    %v2301 = vld [vmem:[#allocation21 + $0x560] sm:$0xff]
    %v2302 = vld [vmem:[#allocation21 + $0x568] sm:$0xff]
    %v2303 = vld [vmem:[#allocation21 + $0x570] sm:$0xff]
    %v2304 = vld [vmem:[#allocation21 + $0x578] sm:$0xff]
    %v2305 = vld [vmem:[#allocation21 + $0x580] sm:$0xff]
    %v2306 = vld [vmem:[#allocation21 + $0x588] sm:$0xff]
    %v2307 = vld [vmem:[#allocation21 + $0x590] sm:$0xff]
    %v2308 = vld [vmem:[#allocation21 + $0x598] sm:$0xff]
    %v2309 = vld [vmem:[#allocation21 + $0x5a0] sm:$0xff]
    %v2310 = vld [vmem:[#allocation21 + $0x5a8] sm:$0xff]
    %v2311 = vld [vmem:[#allocation21 + $0x5b0] sm:$0xff]
    %v2312 = vld [vmem:[#allocation21 + $0x5b8] sm:$0xff]
    %v2313 = vld [vmem:[#allocation21 + $0x5c0] sm:$0xff]
    %v2314 = vld [vmem:[#allocation21 + $0x5c8] sm:$0xff]
    %v2315 = vld [vmem:[#allocation21 + $0x5d0] sm:$0xff]
    %v2316 = vld [vmem:[#allocation21 + $0x5d8] sm:$0xff]
    %v2317 = vld [vmem:[#allocation21 + $0x5e0] sm:$0xff]
    %v2318 = vld [vmem:[#allocation21 + $0x5e8] sm:$0xff]
    %v2319 = vld [vmem:[#allocation21 + $0x5f0] sm:$0xff]
    %v2320 = vld [vmem:[#allocation21 + $0x5f8] sm:$0xff]
    %v2321 = vld [vmem:[#allocation21 + $0x600] sm:$0xff]
    %v2322 = vld [vmem:[#allocation21 + $0x608] sm:$0xff]
    %v2323 = vld [vmem:[#allocation21 + $0x610] sm:$0xff]
    %v2324 = vld [vmem:[#allocation21 + $0x618] sm:$0xff]
    %v2325 = vld [vmem:[#allocation21 + $0x620] sm:$0xff]
    %v2326 = vld [vmem:[#allocation21 + $0x628] sm:$0xff]
    %v2327 = vld [vmem:[#allocation21 + $0x630] sm:$0xff]
    %v2328 = vld [vmem:[#allocation21 + $0x638] sm:$0xff]
    %v2329 = vld [vmem:[#allocation21 + $0x640] sm:$0xff]
    %v2330 = vld [vmem:[#allocation21 + $0x648] sm:$0xff]
    %v2331 = vld [vmem:[#allocation21 + $0x650] sm:$0xff]
    %v2332 = vld [vmem:[#allocation21 + $0x658] sm:$0xff]
    %v2333 = vld [vmem:[#allocation21 + $0x660] sm:$0xff]
    %v2334 = vld [vmem:[#allocation21 + $0x668] sm:$0xff]
    %v2335 = vld [vmem:[#allocation21 + $0x670] sm:$0xff]
    %v2336 = vld [vmem:[#allocation21 + $0x678] sm:$0xff]
    %v2337 = vld [vmem:[#allocation21 + $0x680] sm:$0xff]
    %v2338 = vld [vmem:[#allocation21 + $0x688] sm:$0xff]
    %v2339 = vld [vmem:[#allocation21 + $0x690] sm:$0xff]
    %v2340 = vld [vmem:[#allocation21 + $0x698] sm:$0xff]
    %v2341 = vld [vmem:[#allocation21 + $0x6a0] sm:$0xff]
    %v2342 = vld [vmem:[#allocation21 + $0x6a8] sm:$0xff]
    %v2343 = vld [vmem:[#allocation21 + $0x6b0] sm:$0xff]
    %v2344 = vld [vmem:[#allocation21 + $0x6b8] sm:$0xff]
    %v2345 = vld [vmem:[#allocation21 + $0x6c0] sm:$0xff]
    %v2346 = vld [vmem:[#allocation21 + $0x6c8] sm:$0xff]
    %v2347 = vld [vmem:[#allocation21 + $0x6d0] sm:$0xff]
    %v2348 = vld [vmem:[#allocation21 + $0x6d8] sm:$0xff]
    %v2349 = vld [vmem:[#allocation21 + $0x6e0] sm:$0xff]
    %v2350 = vld [vmem:[#allocation21 + $0x6e8] sm:$0xff]
    %v2351 = vld [vmem:[#allocation21 + $0x6f0] sm:$0xff]
    %v2352 = vld [vmem:[#allocation21 + $0x6f8] sm:$0xff]
    %v2353 = vld [vmem:[#allocation21 + $0x700] sm:$0xff]
    %v2354 = vld [vmem:[#allocation21 + $0x708] sm:$0xff]
    %v2355 = vld [vmem:[#allocation21 + $0x710] sm:$0xff]
    %v2356 = vld [vmem:[#allocation21 + $0x718] sm:$0xff]
    %v2357 = vld [vmem:[#allocation21 + $0x720] sm:$0xff]
    %v2358 = vld [vmem:[#allocation21 + $0x728] sm:$0xff]
    %v2359 = vld [vmem:[#allocation21 + $0x730] sm:$0xff]
    %v2360 = vld [vmem:[#allocation21 + $0x738] sm:$0xff]
    %v2361 = vld [vmem:[#allocation21 + $0x740] sm:$0xff]
    %v2362 = vld [vmem:[#allocation21 + $0x748] sm:$0xff]
    %v2363 = vld [vmem:[#allocation21 + $0x750] sm:$0xff]
    %v2364 = vld [vmem:[#allocation21 + $0x758] sm:$0xff]
    %v2365 = vld [vmem:[#allocation21 + $0x760] sm:$0xff]
    %v2366 = vld [vmem:[#allocation21 + $0x768] sm:$0xff]
    %v2367 = vld [vmem:[#allocation21 + $0x770] sm:$0xff]
    %v2368 = vld [vmem:[#allocation21 + $0x778] sm:$0xff]
    %v2369 = vld [vmem:[#allocation21 + $0x780] sm:$0xff]
    %v2370 = vld [vmem:[#allocation21 + $0x788] sm:$0xff]
    %v2371 = vld [vmem:[#allocation21 + $0x790] sm:$0xff]
    %v2372 = vld [vmem:[#allocation21 + $0x798] sm:$0xff]
    %v2373 = vld [vmem:[#allocation21 + $0x7a0] sm:$0xff]
    %v2374 = vld [vmem:[#allocation21 + $0x7a8] sm:$0xff]
    %v2375 = vld [vmem:[#allocation21 + $0x7b0] sm:$0xff]
    %v2376 = vld [vmem:[#allocation21 + $0x7b8] sm:$0xff]
    %v2377 = vld [vmem:[#allocation21 + $0x7c0] sm:$0xff]
    %v2378 = vld [vmem:[#allocation21 + $0x7c8] sm:$0xff]
    %v2379 = vld [vmem:[#allocation21 + $0x7d0] sm:$0xff]
    %v2380 = vld [vmem:[#allocation21 + $0x7d8] sm:$0xff]
    %v2381 = vld [vmem:[#allocation21 + $0x7e0] sm:$0xff]
    %v2382 = vld [vmem:[#allocation21 + $0x7e8] sm:$0xff]
    %v2383 = vld [vmem:[#allocation21 + $0x7f0] sm:$0xff]
    %v2384 = vld [vmem:[#allocation21 + $0x7f8] sm:$0xff]
    %v2385 = vld [vmem:[#allocation21 + $0x800] sm:$0xff]
    %v2386 = vld [vmem:[#allocation21 + $0x808] sm:$0xff]
    %v2387 = vld [vmem:[#allocation21 + $0x810] sm:$0xff]
    %v2388 = vld [vmem:[#allocation21 + $0x818] sm:$0xff]
    %v2389 = vld [vmem:[#allocation21 + $0x820] sm:$0xff]
    %v2390 = vld [vmem:[#allocation21 + $0x828] sm:$0xff]
    %v2391 = vld [vmem:[#allocation21 + $0x830] sm:$0xff]
    %v2392 = vld [vmem:[#allocation21 + $0x838] sm:$0xff]
    %v2393 = vld [vmem:[#allocation21 + $0x840] sm:$0xff]
    %v2394 = vld [vmem:[#allocation21 + $0x848] sm:$0xff]
    %v2395 = vld [vmem:[#allocation21 + $0x850] sm:$0xff]
    %v2396 = vld [vmem:[#allocation21 + $0x858] sm:$0xff]
    %v2397 = vld [vmem:[#allocation21 + $0x860] sm:$0xff]
    %v2398 = vld [vmem:[#allocation21 + $0x868] sm:$0xff]
    %v2399 = vld [vmem:[#allocation21 + $0x870] sm:$0xff]
    %v2400 = vld [vmem:[#allocation21 + $0x878] sm:$0xff]
    %v2401 = vld [vmem:[#allocation21 + $0x880] sm:$0xff]
    %v2402 = vld [vmem:[#allocation21 + $0x888] sm:$0xff]
    %v2403 = vld [vmem:[#allocation21 + $0x890] sm:$0xff]
    %v2404 = vld [vmem:[#allocation21 + $0x898] sm:$0xff]
    %v2405 = vld [vmem:[#allocation21 + $0x8a0] sm:$0xff]
    %v2406 = vld [vmem:[#allocation21 + $0x8a8] sm:$0xff]
    %v2407 = vld [vmem:[#allocation21 + $0x8b0] sm:$0xff]
    %v2408 = vld [vmem:[#allocation21 + $0x8b8] sm:$0xff]
    %v2409 = vld [vmem:[#allocation21 + $0x8c0] sm:$0xff]
    %v2410 = vld [vmem:[#allocation21 + $0x8c8] sm:$0xff]
    %v2411 = vld [vmem:[#allocation21 + $0x8d0] sm:$0xff]
    %v2412 = vld [vmem:[#allocation21 + $0x8d8] sm:$0xff]
    %v2413 = vld [vmem:[#allocation21 + $0x8e0] sm:$0xff]
    %v2414 = vld [vmem:[#allocation21 + $0x8e8] sm:$0xff]
    %v2415 = vld [vmem:[#allocation21 + $0x8f0] sm:$0xff]
    %v2416 = vld [vmem:[#allocation21 + $0x8f8] sm:$0xff]
    %v2417 = vld [vmem:[#allocation21 + $0x900] sm:$0xff]
    %v2418 = vld [vmem:[#allocation21 + $0x908] sm:$0xff]
    %v2419 = vld [vmem:[#allocation21 + $0x910] sm:$0xff]
    %v2420 = vld [vmem:[#allocation21 + $0x918] sm:$0xff]
    %v2421 = vld [vmem:[#allocation21 + $0x920] sm:$0xff]
    %v2422 = vld [vmem:[#allocation21 + $0x928] sm:$0xff]
    %v2423 = vld [vmem:[#allocation21 + $0x930] sm:$0xff]
    %v2424 = vld [vmem:[#allocation21 + $0x938] sm:$0xff]
    %v2425 = vld [vmem:[#allocation21 + $0x940] sm:$0xff]
    %v2426 = vld [vmem:[#allocation21 + $0x948] sm:$0xff]
    %v2427 = vld [vmem:[#allocation21 + $0x950] sm:$0xff]
    %v2428 = vld [vmem:[#allocation21 + $0x958] sm:$0xff]
    %v2429 = vld [vmem:[#allocation21 + $0x960] sm:$0xff]
    %v2430 = vld [vmem:[#allocation21 + $0x968] sm:$0xff]
    %v2431 = vld [vmem:[#allocation21 + $0x970] sm:$0xff]
    %v2432 = vld [vmem:[#allocation21 + $0x978] sm:$0xff]
    %v2433 = vld [vmem:[#allocation21 + $0x980] sm:$0xff]
    %v2434 = vld [vmem:[#allocation21 + $0x988] sm:$0xff]
    %v2435 = vld [vmem:[#allocation21 + $0x990] sm:$0xff]
    %v2436 = vld [vmem:[#allocation21 + $0x998] sm:$0xff]
    %v2437 = vld [vmem:[#allocation21 + $0x9a0] sm:$0xff]
    %v2438 = vld [vmem:[#allocation21 + $0x9a8] sm:$0xff]
    %v2439 = vld [vmem:[#allocation21 + $0x9b0] sm:$0xff]
    %v2440 = vld [vmem:[#allocation21 + $0x9b8] sm:$0xff]
    %v2441 = vld [vmem:[#allocation21 + $0x9c0] sm:$0xff]
    %v2442 = vld [vmem:[#allocation21 + $0x9c8] sm:$0xff]
    %v2443 = vld [vmem:[#allocation21 + $0x9d0] sm:$0xff]
    %v2444 = vld [vmem:[#allocation21 + $0x9d8] sm:$0xff]
    %v2445 = vld [vmem:[#allocation21 + $0x9e0] sm:$0xff]
    %v2446 = vld [vmem:[#allocation21 + $0x9e8] sm:$0xff]
    %v2447 = vld [vmem:[#allocation21 + $0x9f0] sm:$0xff]
    %v2448 = vld [vmem:[#allocation21 + $0x9f8] sm:$0xff]
    %v2449 = vld [vmem:[#allocation21 + $0xa00] sm:$0xff]
    %v2450 = vld [vmem:[#allocation21 + $0xa08] sm:$0xff]
    %v2451 = vld [vmem:[#allocation21 + $0xa10] sm:$0xff]
    %v2452 = vld [vmem:[#allocation21 + $0xa18] sm:$0xff]
    %v2453 = vld [vmem:[#allocation21 + $0xa20] sm:$0xff]
    %v2454 = vld [vmem:[#allocation21 + $0xa28] sm:$0xff]
    %v2455 = vld [vmem:[#allocation21 + $0xa30] sm:$0xff]
    %v2456 = vld [vmem:[#allocation21 + $0xa38] sm:$0xff]
    %v2457 = vld [vmem:[#allocation21 + $0xa40] sm:$0xff]
    %v2458 = vld [vmem:[#allocation21 + $0xa48] sm:$0xff]
    %v2459 = vld [vmem:[#allocation21 + $0xa50] sm:$0xff]
    %v2460 = vld [vmem:[#allocation21 + $0xa58] sm:$0xff]
    %v2461 = vld [vmem:[#allocation21 + $0xa60] sm:$0xff]
    %v2462 = vld [vmem:[#allocation21 + $0xa68] sm:$0xff]
    %v2463 = vld [vmem:[#allocation21 + $0xa70] sm:$0xff]
    %v2464 = vld [vmem:[#allocation21 + $0xa78] sm:$0xff]
    %v2465 = vld [vmem:[#allocation21 + $0xa80] sm:$0xff]
    %v2466 = vld [vmem:[#allocation21 + $0xa88] sm:$0xff]
    %v2467 = vld [vmem:[#allocation21 + $0xa90] sm:$0xff]
    %v2468 = vld [vmem:[#allocation21 + $0xa98] sm:$0xff]
    %v2469 = vld [vmem:[#allocation21 + $0xaa0] sm:$0xff]
    %v2470 = vld [vmem:[#allocation21 + $0xaa8] sm:$0xff]
    %v2471 = vld [vmem:[#allocation21 + $0xab0] sm:$0xff]
    %v2472 = vld [vmem:[#allocation21 + $0xab8] sm:$0xff]
    %v2473 = vld [vmem:[#allocation21 + $0xac0] sm:$0xff]
    %v2474 = vld [vmem:[#allocation21 + $0xac8] sm:$0xff]
    %v2475 = vld [vmem:[#allocation21 + $0xad0] sm:$0xff]
    %v2476 = vld [vmem:[#allocation21 + $0xad8] sm:$0xff]
    %v2477 = vld [vmem:[#allocation21 + $0xae0] sm:$0xff]
    %v2478 = vld [vmem:[#allocation21 + $0xae8] sm:$0xff]
    %v2479 = vld [vmem:[#allocation21 + $0xaf0] sm:$0xff]
    %v2480 = vld [vmem:[#allocation21 + $0xaf8] sm:$0xff]
    %v2481 = vld [vmem:[#allocation21 + $0xb00] sm:$0xff]
    %v2482 = vld [vmem:[#allocation21 + $0xb08] sm:$0xff]
    %v2483 = vld [vmem:[#allocation21 + $0xb10] sm:$0xff]
    %v2484 = vld [vmem:[#allocation21 + $0xb18] sm:$0xff]
    %v2485 = vld [vmem:[#allocation21 + $0xb20] sm:$0xff]
    %v2486 = vld [vmem:[#allocation21 + $0xb28] sm:$0xff]
    %v2487 = vld [vmem:[#allocation21 + $0xb30] sm:$0xff]
    %v2488 = vld [vmem:[#allocation21 + $0xb38] sm:$0xff]
    %v2489 = vld [vmem:[#allocation21 + $0xb40] sm:$0xff]
    %v2490 = vld [vmem:[#allocation21 + $0xb48] sm:$0xff]
    %v2491 = vld [vmem:[#allocation21 + $0xb50] sm:$0xff]
    %v2492 = vld [vmem:[#allocation21 + $0xb58] sm:$0xff]
    %v2493 = vld [vmem:[#allocation21 + $0xb60] sm:$0xff]
    %v2494 = vld [vmem:[#allocation21 + $0xb68] sm:$0xff]
    %v2495 = vld [vmem:[#allocation21 + $0xb70] sm:$0xff]
    %v2496 = vld [vmem:[#allocation21 + $0xb78] sm:$0xff]
    %v2497 = vld [vmem:[#allocation21 + $0xb80] sm:$0xff]
    %v2498 = vld [vmem:[#allocation21 + $0xb88] sm:$0xff]
    %v2499 = vld [vmem:[#allocation21 + $0xb90] sm:$0xff]
    %v2500 = vld [vmem:[#allocation21 + $0xb98] sm:$0xff]
    %v2501 = vld [vmem:[#allocation21 + $0xba0] sm:$0xff]
    %v2502 = vld [vmem:[#allocation21 + $0xba8] sm:$0xff]
    %v2503 = vld [vmem:[#allocation21 + $0xbb0] sm:$0xff]
    %v2504 = vld [vmem:[#allocation21 + $0xbb8] sm:$0xff]
    %v2505 = vld [vmem:[#allocation21 + $0xbc0] sm:$0xff]
    %v2506 = vld [vmem:[#allocation21 + $0xbc8] sm:$0xff]
    %v2507 = vld [vmem:[#allocation21 + $0xbd0] sm:$0xff]
    %v2508 = vld [vmem:[#allocation21 + $0xbd8] sm:$0xff]
    %v2509 = vld [vmem:[#allocation21 + $0xbe0] sm:$0xff]
    %v2510 = vld [vmem:[#allocation21 + $0xbe8] sm:$0xff]
    %v2511 = vld [vmem:[#allocation21 + $0xbf0] sm:$0xff]
    %v2512 = vld [vmem:[#allocation21 + $0xbf8] sm:$0xff]
    %v2513 = vld [vmem:[#allocation21 + $0xc00] sm:$0xff]
    %v2514 = vld [vmem:[#allocation21 + $0xc08] sm:$0xff]
    %v2515 = vld [vmem:[#allocation21 + $0xc10] sm:$0xff]
    %v2516 = vld [vmem:[#allocation21 + $0xc18] sm:$0xff]
    %v2517 = vld [vmem:[#allocation21 + $0xc20] sm:$0xff]
    %v2518 = vld [vmem:[#allocation21 + $0xc28] sm:$0xff]
    %v2519 = vld [vmem:[#allocation21 + $0xc30] sm:$0xff]
    %v2520 = vld [vmem:[#allocation21 + $0xc38] sm:$0xff]
    %v2521 = vld [vmem:[#allocation21 + $0xc40] sm:$0xff]
    %v2522 = vld [vmem:[#allocation21 + $0xc48] sm:$0xff]
    %v2523 = vld [vmem:[#allocation21 + $0xc50] sm:$0xff]
    %v2524 = vld [vmem:[#allocation21 + $0xc58] sm:$0xff]
    %v2525 = vld [vmem:[#allocation21 + $0xc60] sm:$0xff]
    %v2526 = vld [vmem:[#allocation21 + $0xc68] sm:$0xff]
    %v2527 = vld [vmem:[#allocation21 + $0xc70] sm:$0xff]
    %v2528 = vld [vmem:[#allocation21 + $0xc78] sm:$0xff]
    %v2529 = vld [vmem:[#allocation21 + $0xc80] sm:$0xff]
    %v2530 = vld [vmem:[#allocation21 + $0xc88] sm:$0xff]
    %v2531 = vld [vmem:[#allocation21 + $0xc90] sm:$0xff]
    %v2532 = vld [vmem:[#allocation21 + $0xc98] sm:$0xff]
    %v2533 = vld [vmem:[#allocation21 + $0xca0] sm:$0xff]
    %v2534 = vld [vmem:[#allocation21 + $0xca8] sm:$0xff]
    %v2535 = vld [vmem:[#allocation21 + $0xcb0] sm:$0xff]
    %v2536 = vld [vmem:[#allocation21 + $0xcb8] sm:$0xff]
    %v2537 = vld [vmem:[#allocation21 + $0xcc0] sm:$0xff]
    %v2538 = vld [vmem:[#allocation21 + $0xcc8] sm:$0xff]
    %v2539 = vld [vmem:[#allocation21 + $0xcd0] sm:$0xff]
    %v2540 = vld [vmem:[#allocation21 + $0xcd8] sm:$0xff]
    %v2541 = vld [vmem:[#allocation21 + $0xce0] sm:$0xff]
    %v2542 = vld [vmem:[#allocation21 + $0xce8] sm:$0xff]
    %v2543 = vld [vmem:[#allocation21 + $0xcf0] sm:$0xff]
    %v2544 = vld [vmem:[#allocation21 + $0xcf8] sm:$0xff]
    %v2545 = vld [vmem:[#allocation21 + $0xd00] sm:$0xff]
    %v2546 = vld [vmem:[#allocation21 + $0xd08] sm:$0xff]
    %v2547 = vld [vmem:[#allocation21 + $0xd10] sm:$0xff]
    %v2548 = vld [vmem:[#allocation21 + $0xd18] sm:$0xff]
    %v2549 = vld [vmem:[#allocation21 + $0xd20] sm:$0xff]
    %v2550 = vld [vmem:[#allocation21 + $0xd28] sm:$0xff]
    %v2551 = vld [vmem:[#allocation21 + $0xd30] sm:$0xff]
    %v2552 = vld [vmem:[#allocation21 + $0xd38] sm:$0xff]
    %v2553 = vld [vmem:[#allocation21 + $0xd40] sm:$0xff]
    %v2554 = vld [vmem:[#allocation21 + $0xd48] sm:$0xff]
    %v2555 = vld [vmem:[#allocation21 + $0xd50] sm:$0xff]
    %v2556 = vld [vmem:[#allocation21 + $0xd58] sm:$0xff]
    %v2557 = vld [vmem:[#allocation21 + $0xd60] sm:$0xff]
    %v2558 = vld [vmem:[#allocation21 + $0xd68] sm:$0xff]
    %v2559 = vld [vmem:[#allocation21 + $0xd70] sm:$0xff]
    %v2560 = vld [vmem:[#allocation21 + $0xd78] sm:$0xff]
    %v2561 = vld [vmem:[#allocation21 + $0xd80] sm:$0xff]
    %v2562 = vld [vmem:[#allocation21 + $0xd88] sm:$0xff]
    %v2563 = vld [vmem:[#allocation21 + $0xd90] sm:$0xff]
    %v2564 = vld [vmem:[#allocation21 + $0xd98] sm:$0xff]
    %v2565 = vld [vmem:[#allocation21 + $0xda0] sm:$0xff]
    %v2566 = vld [vmem:[#allocation21 + $0xda8] sm:$0xff]
    %v2567 = vld [vmem:[#allocation21 + $0xdb0] sm:$0xff]
    %v2568 = vld [vmem:[#allocation21 + $0xdb8] sm:$0xff]
    %v2569 = vld [vmem:[#allocation21 + $0xdc0] sm:$0xff]
    %v2570 = vld [vmem:[#allocation21 + $0xdc8] sm:$0xff]
    %v2571 = vld [vmem:[#allocation21 + $0xdd0] sm:$0xff]
    %v2572 = vld [vmem:[#allocation21 + $0xdd8] sm:$0xff]
    %v2573 = vld [vmem:[#allocation21 + $0xde0] sm:$0xff]
    %v2574 = vld [vmem:[#allocation21 + $0xde8] sm:$0xff]
    %v2575 = vld [vmem:[#allocation21 + $0xdf0] sm:$0xff]
    %v2576 = vld [vmem:[#allocation21 + $0xdf8] sm:$0xff]
    %v2577 = vld [vmem:[#allocation22] sm:$0xf]
    %v2579 = vperm.slane %v2577, 0
    %v2580 = vperm.slane %v2577, 1
    %v2581 = vperm.slane %v2577, 2
    %v2582 = vperm.slane %v2577, 3
    %v3035 = vunpack.c.l.b16 %v2129
    %v3036 = vunpack.c.h.b16 %v2129
    %v3037 = vunpack.c.l.b16 %v2130
    %v3038 = vunpack.c.h.b16 %v2130
    %v3039 = vunpack.c.l.b16 %v2131
    %v3040 = vunpack.c.h.b16 %v2131
    %v3041 = vunpack.c.l.b16 %v2132
    %v3042 = vunpack.c.h.b16 %v2132
    %v3043 = vunpack.c.l.b16 %v2133
    %v3044 = vunpack.c.h.b16 %v2133
    %v3045 = vunpack.c.l.b16 %v2134
    %v3046 = vunpack.c.h.b16 %v2134
    %v3047 = vunpack.c.l.b16 %v2135
    %v3048 = vunpack.c.h.b16 %v2135
    %v3049 = vunpack.c.l.b16 %v2136
    %v3050 = vunpack.c.h.b16 %v2136
    %v3051 = vunpack.c.l.b16 %v2137
    %v3052 = vunpack.c.h.b16 %v2137
    %v3053 = vunpack.c.l.b16 %v2138
    %v3054 = vunpack.c.h.b16 %v2138
    %v3055 = vunpack.c.l.b16 %v2139
    %v3056 = vunpack.c.h.b16 %v2139
    %v3057 = vunpack.c.l.b16 %v2140
    %v3058 = vunpack.c.h.b16 %v2140
    %v3059 = vunpack.c.l.b16 %v2141
    %v3060 = vunpack.c.h.b16 %v2141
    %v3061 = vunpack.c.l.b16 %v2142
    %v3062 = vunpack.c.h.b16 %v2142
    %v3063 = vunpack.c.l.b16 %v2143
    %v3064 = vunpack.c.h.b16 %v2143
    %v3065 = vunpack.c.l.b16 %v2144
    %v3066 = vunpack.c.h.b16 %v2144
    %v3067 = vunpack.c.l.b16 %v2145
    %v3068 = vunpack.c.h.b16 %v2145
    %v3069 = vunpack.c.l.b16 %v2146
    %v3070 = vunpack.c.h.b16 %v2146
    %v3071 = vunpack.c.l.b16 %v2147
    %v3072 = vunpack.c.h.b16 %v2147
    %v3073 = vunpack.c.l.b16 %v2148
    %v3074 = vunpack.c.h.b16 %v2148
    %v3075 = vunpack.c.l.b16 %v2149
    %v3076 = vunpack.c.h.b16 %v2149
    %v3077 = vunpack.c.l.b16 %v2150
    %v3078 = vunpack.c.h.b16 %v2150
    %v3079 = vunpack.c.l.b16 %v2151
    %v3080 = vunpack.c.h.b16 %v2151
    %v3081 = vunpack.c.l.b16 %v2152
    %v3082 = vunpack.c.h.b16 %v2152
    %v3083 = vunpack.c.l.b16 %v2153
    %v3084 = vunpack.c.h.b16 %v2153
    %v3085 = vunpack.c.l.b16 %v2154
    %v3086 = vunpack.c.h.b16 %v2154
    %v3087 = vunpack.c.l.b16 %v2155
    %v3088 = vunpack.c.h.b16 %v2155
    %v3089 = vunpack.c.l.b16 %v2156
    %v3090 = vunpack.c.h.b16 %v2156
    %v3091 = vunpack.c.l.b16 %v2157
    %v3092 = vunpack.c.h.b16 %v2157
    %v3093 = vunpack.c.l.b16 %v2158
    %v3094 = vunpack.c.h.b16 %v2158
    %v3095 = vunpack.c.l.b16 %v2159
    %v3096 = vunpack.c.h.b16 %v2159
    %v3097 = vunpack.c.l.b16 %v2160
    %v3098 = vunpack.c.h.b16 %v2160
    %v3099 = vunpack.c.l.b16 %v2161
    %v3100 = vunpack.c.h.b16 %v2161
    %v3101 = vunpack.c.l.b16 %v2162
    %v3102 = vunpack.c.h.b16 %v2162
    %v3103 = vunpack.c.l.b16 %v2163
    %v3104 = vunpack.c.h.b16 %v2163
    %v3105 = vunpack.c.l.b16 %v2164
    %v3106 = vunpack.c.h.b16 %v2164
    %v3107 = vunpack.c.l.b16 %v2165
    %v3108 = vunpack.c.h.b16 %v2165
    %v3109 = vunpack.c.l.b16 %v2166
    %v3110 = vunpack.c.h.b16 %v2166
    %v3111 = vunpack.c.l.b16 %v2167
    %v3112 = vunpack.c.h.b16 %v2167
    %v3113 = vunpack.c.l.b16 %v2168
    %v3114 = vunpack.c.h.b16 %v2168
    %v3115 = vunpack.c.l.b16 %v2169
    %v3116 = vunpack.c.h.b16 %v2169
    %v3117 = vunpack.c.l.b16 %v2170
    %v3118 = vunpack.c.h.b16 %v2170
    %v3119 = vunpack.c.l.b16 %v2171
    %v3120 = vunpack.c.h.b16 %v2171
    %v3121 = vunpack.c.l.b16 %v2172
    %v3122 = vunpack.c.h.b16 %v2172
    %v3123 = vunpack.c.l.b16 %v2173
    %v3124 = vunpack.c.h.b16 %v2173
    %v3125 = vunpack.c.l.b16 %v2174
    %v3126 = vunpack.c.h.b16 %v2174
    %v3127 = vunpack.c.l.b16 %v2175
    %v3128 = vunpack.c.h.b16 %v2175
    %v3129 = vunpack.c.l.b16 %v2176
    %v3130 = vunpack.c.h.b16 %v2176
    %v3131 = vunpack.c.l.b16 %v2177
    %v3132 = vunpack.c.h.b16 %v2177
    %v3133 = vunpack.c.l.b16 %v2178
    %v3134 = vunpack.c.h.b16 %v2178
    %v3135 = vunpack.c.l.b16 %v2179
    %v3136 = vunpack.c.h.b16 %v2179
    %v3137 = vunpack.c.l.b16 %v2180
    %v3138 = vunpack.c.h.b16 %v2180
    %v3139 = vunpack.c.l.b16 %v2181
    %v3140 = vunpack.c.h.b16 %v2181
    %v3141 = vunpack.c.l.b16 %v2182
    %v3142 = vunpack.c.h.b16 %v2182
    %v3143 = vunpack.c.l.b16 %v2183
    %v3144 = vunpack.c.h.b16 %v2183
    %v3145 = vunpack.c.l.b16 %v2184
    %v3146 = vunpack.c.h.b16 %v2184
    %v3147 = vunpack.c.l.b16 %v2185
    %v3148 = vunpack.c.h.b16 %v2185
    %v3149 = vunpack.c.l.b16 %v2186
    %v3150 = vunpack.c.h.b16 %v2186
    %v3151 = vunpack.c.l.b16 %v2187
    %v3152 = vunpack.c.h.b16 %v2187
    %v3153 = vunpack.c.l.b16 %v2188
    %v3154 = vunpack.c.h.b16 %v2188
    %v3155 = vunpack.c.l.b16 %v2189
    %v3156 = vunpack.c.h.b16 %v2189
    %v3157 = vunpack.c.l.b16 %v2190
    %v3158 = vunpack.c.h.b16 %v2190
    %v3159 = vunpack.c.l.b16 %v2191
    %v3160 = vunpack.c.h.b16 %v2191
    %v3161 = vunpack.c.l.b16 %v2192
    %v3162 = vunpack.c.h.b16 %v2192
    %v3163 = vunpack.c.l.b16 %v2193
    %v3164 = vunpack.c.h.b16 %v2193
    %v3165 = vunpack.c.l.b16 %v2194
    %v3166 = vunpack.c.h.b16 %v2194
    %v3167 = vunpack.c.l.b16 %v2195
    %v3168 = vunpack.c.h.b16 %v2195
    %v3169 = vunpack.c.l.b16 %v2196
    %v3170 = vunpack.c.h.b16 %v2196
    %v3171 = vunpack.c.l.b16 %v2197
    %v3172 = vunpack.c.h.b16 %v2197
    %v3173 = vunpack.c.l.b16 %v2198
    %v3174 = vunpack.c.h.b16 %v2198
    %v3175 = vunpack.c.l.b16 %v2199
    %v3176 = vunpack.c.h.b16 %v2199
    %v3177 = vunpack.c.l.b16 %v2200
    %v3178 = vunpack.c.h.b16 %v2200
    %v3179 = vunpack.c.l.b16 %v2201
    %v3180 = vunpack.c.h.b16 %v2201
    %v3181 = vunpack.c.l.b16 %v2202
    %v3182 = vunpack.c.h.b16 %v2202
    %v3183 = vunpack.c.l.b16 %v2203
    %v3184 = vunpack.c.h.b16 %v2203
    %v3185 = vunpack.c.l.b16 %v2204
    %v3186 = vunpack.c.h.b16 %v2204
    %v3187 = vunpack.c.l.b16 %v2205
    %v3188 = vunpack.c.h.b16 %v2205
    %v3189 = vunpack.c.l.b16 %v2206
    %v3190 = vunpack.c.h.b16 %v2206
    %v3191 = vunpack.c.l.b16 %v2207
    %v3192 = vunpack.c.h.b16 %v2207
    %v3193 = vunpack.c.l.b16 %v2208
    %v3194 = vunpack.c.h.b16 %v2208
    %v3195 = vunpack.c.l.b16 %v2209
    %v3196 = vunpack.c.h.b16 %v2209
    %v3197 = vunpack.c.l.b16 %v2210
    %v3198 = vunpack.c.h.b16 %v2210
    %v3199 = vunpack.c.l.b16 %v2211
    %v3200 = vunpack.c.h.b16 %v2211
    %v3201 = vunpack.c.l.b16 %v2212
    %v3202 = vunpack.c.h.b16 %v2212
    %v3203 = vunpack.c.l.b16 %v2213
    %v3204 = vunpack.c.h.b16 %v2213
    %v3205 = vunpack.c.l.b16 %v2214
    %v3206 = vunpack.c.h.b16 %v2214
    %v3207 = vunpack.c.l.b16 %v2215
    %v3208 = vunpack.c.h.b16 %v2215
    %v3209 = vunpack.c.l.b16 %v2216
    %v3210 = vunpack.c.h.b16 %v2216
    %v3211 = vunpack.c.l.b16 %v2217
    %v3212 = vunpack.c.h.b16 %v2217
    %v3213 = vunpack.c.l.b16 %v2218
    %v3214 = vunpack.c.h.b16 %v2218
    %v3215 = vunpack.c.l.b16 %v2219
    %v3216 = vunpack.c.h.b16 %v2219
    %v3217 = vunpack.c.l.b16 %v2220
    %v3218 = vunpack.c.h.b16 %v2220
    %v3219 = vunpack.c.l.b16 %v2221
    %v3220 = vunpack.c.h.b16 %v2221
    %v3221 = vunpack.c.l.b16 %v2222
    %v3222 = vunpack.c.h.b16 %v2222
    %v3223 = vunpack.c.l.b16 %v2223
    %v3224 = vunpack.c.h.b16 %v2223
    %v3225 = vunpack.c.l.b16 %v2224
    %v3226 = vunpack.c.h.b16 %v2224
    %v3227 = vunpack.c.l.b16 %v2225
    %v3228 = vunpack.c.h.b16 %v2225
    %v3229 = vunpack.c.l.b16 %v2226
    %v3230 = vunpack.c.h.b16 %v2226
    %v3231 = vunpack.c.l.b16 %v2227
    %v3232 = vunpack.c.h.b16 %v2227
    %v3233 = vunpack.c.l.b16 %v2228
    %v3234 = vunpack.c.h.b16 %v2228
    %v3235 = vunpack.c.l.b16 %v2229
    %v3236 = vunpack.c.h.b16 %v2229
    %v3237 = vunpack.c.l.b16 %v2230
    %v3238 = vunpack.c.h.b16 %v2230
    %v3239 = vunpack.c.l.b16 %v2231
    %v3240 = vunpack.c.h.b16 %v2231
    %v3241 = vunpack.c.l.b16 %v2232
    %v3242 = vunpack.c.h.b16 %v2232
    %v3243 = vunpack.c.l.b16 %v2233
    %v3244 = vunpack.c.h.b16 %v2233
    %v3245 = vunpack.c.l.b16 %v2234
    %v3246 = vunpack.c.h.b16 %v2234
    %v3247 = vunpack.c.l.b16 %v2235
    %v3248 = vunpack.c.h.b16 %v2235
    %v3249 = vunpack.c.l.b16 %v2236
    %v3250 = vunpack.c.h.b16 %v2236
    %v3251 = vunpack.c.l.b16 %v2237
    %v3252 = vunpack.c.h.b16 %v2237
    %v3253 = vunpack.c.l.b16 %v2238
    %v3254 = vunpack.c.h.b16 %v2238
    %v3255 = vunpack.c.l.b16 %v2239
    %v3256 = vunpack.c.h.b16 %v2239
    %v3257 = vunpack.c.l.b16 %v2240
    %v3258 = vunpack.c.h.b16 %v2240
    %v3259 = vunpack.c.l.b16 %v2241
    %v3260 = vunpack.c.h.b16 %v2241
    %v3261 = vunpack.c.l.b16 %v2242
    %v3262 = vunpack.c.h.b16 %v2242
    %v3263 = vunpack.c.l.b16 %v2243
    %v3264 = vunpack.c.h.b16 %v2243
    %v3265 = vunpack.c.l.b16 %v2244
    %v3266 = vunpack.c.h.b16 %v2244
    %v3267 = vunpack.c.l.b16 %v2245
    %v3268 = vunpack.c.h.b16 %v2245
    %v3269 = vunpack.c.l.b16 %v2246
    %v3270 = vunpack.c.h.b16 %v2246
    %v3271 = vunpack.c.l.b16 %v2247
    %v3272 = vunpack.c.h.b16 %v2247
    %v3273 = vunpack.c.l.b16 %v2248
    %v3274 = vunpack.c.h.b16 %v2248
    %v3275 = vunpack.c.l.b16 %v2249
    %v3276 = vunpack.c.h.b16 %v2249
    %v3277 = vunpack.c.l.b16 %v2250
    %v3278 = vunpack.c.h.b16 %v2250
    %v3279 = vunpack.c.l.b16 %v2251
    %v3280 = vunpack.c.h.b16 %v2251
    %v3281 = vunpack.c.l.b16 %v2252
    %v3282 = vunpack.c.h.b16 %v2252
    %v3283 = vunpack.c.l.b16 %v2253
    %v3284 = vunpack.c.h.b16 %v2253
    %v3285 = vunpack.c.l.b16 %v2254
    %v3286 = vunpack.c.h.b16 %v2254
    %v3287 = vunpack.c.l.b16 %v2255
    %v3288 = vunpack.c.h.b16 %v2255
    %v3289 = vunpack.c.l.b16 %v2256
    %v3290 = vunpack.c.h.b16 %v2256
    %v3291 = vunpack.c.l.b16 %v2257
    %v3292 = vunpack.c.h.b16 %v2257
    %v3293 = vunpack.c.l.b16 %v2258
    %v3294 = vunpack.c.h.b16 %v2258
    %v3295 = vunpack.c.l.b16 %v2259
    %v3296 = vunpack.c.h.b16 %v2259
    %v3297 = vunpack.c.l.b16 %v2260
    %v3298 = vunpack.c.h.b16 %v2260
    %v3299 = vunpack.c.l.b16 %v2261
    %v3300 = vunpack.c.h.b16 %v2261
    %v3301 = vunpack.c.l.b16 %v2262
    %v3302 = vunpack.c.h.b16 %v2262
    %v3303 = vunpack.c.l.b16 %v2263
    %v3304 = vunpack.c.h.b16 %v2263
    %v3305 = vunpack.c.l.b16 %v2264
    %v3306 = vunpack.c.h.b16 %v2264
    %v3307 = vunpack.c.l.b16 %v2265
    %v3308 = vunpack.c.h.b16 %v2265
    %v3309 = vunpack.c.l.b16 %v2266
    %v3310 = vunpack.c.h.b16 %v2266
    %v3311 = vunpack.c.l.b16 %v2267
    %v3312 = vunpack.c.h.b16 %v2267
    %v3313 = vunpack.c.l.b16 %v2268
    %v3314 = vunpack.c.h.b16 %v2268
    %v3315 = vunpack.c.l.b16 %v2269
    %v3316 = vunpack.c.h.b16 %v2269
    %v3317 = vunpack.c.l.b16 %v2270
    %v3318 = vunpack.c.h.b16 %v2270
    %v3319 = vunpack.c.l.b16 %v2271
    %v3320 = vunpack.c.h.b16 %v2271
    %v3321 = vunpack.c.l.b16 %v2272
    %v3322 = vunpack.c.h.b16 %v2272
    %v3323 = vunpack.c.l.b16 %v2273
    %v3324 = vunpack.c.h.b16 %v2273
    %v3325 = vunpack.c.l.b16 %v2274
    %v3326 = vunpack.c.h.b16 %v2274
    %v3327 = vunpack.c.l.b16 %v2275
    %v3328 = vunpack.c.h.b16 %v2275
    %v3329 = vunpack.c.l.b16 %v2276
    %v3330 = vunpack.c.h.b16 %v2276
    %v3331 = vunpack.c.l.b16 %v2277
    %v3332 = vunpack.c.h.b16 %v2277
    %v3333 = vunpack.c.l.b16 %v2278
    %v3334 = vunpack.c.h.b16 %v2278
    %v3335 = vunpack.c.l.b16 %v2279
    %v3336 = vunpack.c.h.b16 %v2279
    %v3337 = vunpack.c.l.b16 %v2280
    %v3338 = vunpack.c.h.b16 %v2280
    %v3339 = vunpack.c.l.b16 %v2281
    %v3340 = vunpack.c.h.b16 %v2281
    %v3341 = vunpack.c.l.b16 %v2282
    %v3342 = vunpack.c.h.b16 %v2282
    %v3343 = vunpack.c.l.b16 %v2283
    %v3344 = vunpack.c.h.b16 %v2283
    %v3345 = vunpack.c.l.b16 %v2284
    %v3346 = vunpack.c.h.b16 %v2284
    %v3347 = vunpack.c.l.b16 %v2285
    %v3348 = vunpack.c.h.b16 %v2285
    %v3349 = vunpack.c.l.b16 %v2286
    %v3350 = vunpack.c.h.b16 %v2286
    %v3351 = vunpack.c.l.b16 %v2287
    %v3352 = vunpack.c.h.b16 %v2287
    %v3353 = vunpack.c.l.b16 %v2288
    %v3354 = vunpack.c.h.b16 %v2288
    %v3355 = vunpack.c.l.b16 %v2289
    %v3356 = vunpack.c.h.b16 %v2289
    %v3357 = vunpack.c.l.b16 %v2290
    %v3358 = vunpack.c.h.b16 %v2290
    %v3359 = vunpack.c.l.b16 %v2291
    %v3360 = vunpack.c.h.b16 %v2291
    %v3361 = vunpack.c.l.b16 %v2292
    %v3362 = vunpack.c.h.b16 %v2292
    %v3363 = vunpack.c.l.b16 %v2293
    %v3364 = vunpack.c.h.b16 %v2293
    %v3365 = vunpack.c.l.b16 %v2294
    %v3366 = vunpack.c.h.b16 %v2294
    %v3367 = vunpack.c.l.b16 %v2295
    %v3368 = vunpack.c.h.b16 %v2295
    %v3369 = vunpack.c.l.b16 %v2296
    %v3370 = vunpack.c.h.b16 %v2296
    %v3371 = vunpack.c.l.b16 %v2297
    %v3372 = vunpack.c.h.b16 %v2297
    %v3373 = vunpack.c.l.b16 %v2298
    %v3374 = vunpack.c.h.b16 %v2298
    %v3375 = vunpack.c.l.b16 %v2299
    %v3376 = vunpack.c.h.b16 %v2299
    %v3377 = vunpack.c.l.b16 %v2300
    %v3378 = vunpack.c.h.b16 %v2300
    %v3379 = vunpack.c.l.b16 %v2301
    %v3380 = vunpack.c.h.b16 %v2301
    %v3381 = vunpack.c.l.b16 %v2302
    %v3382 = vunpack.c.h.b16 %v2302
    %v3383 = vunpack.c.l.b16 %v2303
    %v3384 = vunpack.c.h.b16 %v2303
    %v3385 = vunpack.c.l.b16 %v2304
    %v3386 = vunpack.c.h.b16 %v2304
    %v3387 = vunpack.c.l.b16 %v2305
    %v3388 = vunpack.c.h.b16 %v2305
    %v3389 = vunpack.c.l.b16 %v2306
    %v3390 = vunpack.c.h.b16 %v2306
    %v3391 = vunpack.c.l.b16 %v2307
    %v3392 = vunpack.c.h.b16 %v2307
    %v3393 = vunpack.c.l.b16 %v2308
    %v3394 = vunpack.c.h.b16 %v2308
    %v3395 = vunpack.c.l.b16 %v2309
    %v3396 = vunpack.c.h.b16 %v2309
    %v3397 = vunpack.c.l.b16 %v2310
    %v3398 = vunpack.c.h.b16 %v2310
    %v3399 = vunpack.c.l.b16 %v2311
    %v3400 = vunpack.c.h.b16 %v2311
    %v3401 = vunpack.c.l.b16 %v2312
    %v3402 = vunpack.c.h.b16 %v2312
    %v3403 = vunpack.c.l.b16 %v2313
    %v3404 = vunpack.c.h.b16 %v2313
    %v3405 = vunpack.c.l.b16 %v2314
    %v3406 = vunpack.c.h.b16 %v2314
    %v3407 = vunpack.c.l.b16 %v2315
    %v3408 = vunpack.c.h.b16 %v2315
    %v3409 = vunpack.c.l.b16 %v2316
    %v3410 = vunpack.c.h.b16 %v2316
    %v3411 = vunpack.c.l.b16 %v2317
    %v3412 = vunpack.c.h.b16 %v2317
    %v3413 = vunpack.c.l.b16 %v2318
    %v3414 = vunpack.c.h.b16 %v2318
    %v3415 = vunpack.c.l.b16 %v2319
    %v3416 = vunpack.c.h.b16 %v2319
    %v3417 = vunpack.c.l.b16 %v2320
    %v3418 = vunpack.c.h.b16 %v2320
    %v3419 = vunpack.c.l.b16 %v2321
    %v3420 = vunpack.c.h.b16 %v2321
    %v3421 = vunpack.c.l.b16 %v2322
    %v3422 = vunpack.c.h.b16 %v2322
    %v3423 = vunpack.c.l.b16 %v2323
    %v3424 = vunpack.c.h.b16 %v2323
    %v3425 = vunpack.c.l.b16 %v2324
    %v3426 = vunpack.c.h.b16 %v2324
    %v3427 = vunpack.c.l.b16 %v2325
    %v3428 = vunpack.c.h.b16 %v2325
    %v3429 = vunpack.c.l.b16 %v2326
    %v3430 = vunpack.c.h.b16 %v2326
    %v3431 = vunpack.c.l.b16 %v2327
    %v3432 = vunpack.c.h.b16 %v2327
    %v3433 = vunpack.c.l.b16 %v2328
    %v3434 = vunpack.c.h.b16 %v2328
    %v3435 = vunpack.c.l.b16 %v2329
    %v3436 = vunpack.c.h.b16 %v2329
    %v3437 = vunpack.c.l.b16 %v2330
    %v3438 = vunpack.c.h.b16 %v2330
    %v3439 = vunpack.c.l.b16 %v2331
    %v3440 = vunpack.c.h.b16 %v2331
    %v3441 = vunpack.c.l.b16 %v2332
    %v3442 = vunpack.c.h.b16 %v2332
    %v3443 = vunpack.c.l.b16 %v2333
    %v3444 = vunpack.c.h.b16 %v2333
    %v3445 = vunpack.c.l.b16 %v2334
    %v3446 = vunpack.c.h.b16 %v2334
    %v3447 = vunpack.c.l.b16 %v2335
    %v3448 = vunpack.c.h.b16 %v2335
    %v3449 = vunpack.c.l.b16 %v2336
    %v3450 = vunpack.c.h.b16 %v2336
    %v3451 = vunpack.c.l.b16 %v2337
    %v3452 = vunpack.c.h.b16 %v2337
    %v3453 = vunpack.c.l.b16 %v2338
    %v3454 = vunpack.c.h.b16 %v2338
    %v3455 = vunpack.c.l.b16 %v2339
    %v3456 = vunpack.c.h.b16 %v2339
    %v3457 = vunpack.c.l.b16 %v2340
    %v3458 = vunpack.c.h.b16 %v2340
    %v3459 = vunpack.c.l.b16 %v2341
    %v3460 = vunpack.c.h.b16 %v2341
    %v3461 = vunpack.c.l.b16 %v2342
    %v3462 = vunpack.c.h.b16 %v2342
    %v3463 = vunpack.c.l.b16 %v2343
    %v3464 = vunpack.c.h.b16 %v2343
    %v3465 = vunpack.c.l.b16 %v2344
    %v3466 = vunpack.c.h.b16 %v2344
    %v3467 = vunpack.c.l.b16 %v2345
    %v3468 = vunpack.c.h.b16 %v2345
    %v3469 = vunpack.c.l.b16 %v2346
    %v3470 = vunpack.c.h.b16 %v2346
    %v3471 = vunpack.c.l.b16 %v2347
    %v3472 = vunpack.c.h.b16 %v2347
    %v3473 = vunpack.c.l.b16 %v2348
    %v3474 = vunpack.c.h.b16 %v2348
    %v3475 = vunpack.c.l.b16 %v2349
    %v3476 = vunpack.c.h.b16 %v2349
    %v3477 = vunpack.c.l.b16 %v2350
    %v3478 = vunpack.c.h.b16 %v2350
    %v3479 = vunpack.c.l.b16 %v2351
    %v3480 = vunpack.c.h.b16 %v2351
    %v3481 = vunpack.c.l.b16 %v2352
    %v3482 = vunpack.c.h.b16 %v2352
    %v3483 = vunpack.c.l.b16 %v2353
    %v3484 = vunpack.c.h.b16 %v2353
    %v3485 = vunpack.c.l.b16 %v2354
    %v3486 = vunpack.c.h.b16 %v2354
    %v3487 = vunpack.c.l.b16 %v2355
    %v3488 = vunpack.c.h.b16 %v2355
    %v3489 = vunpack.c.l.b16 %v2356
    %v3490 = vunpack.c.h.b16 %v2356
    %v3491 = vunpack.c.l.b16 %v2357
    %v3492 = vunpack.c.h.b16 %v2357
    %v3493 = vunpack.c.l.b16 %v2358
    %v3494 = vunpack.c.h.b16 %v2358
    %v3495 = vunpack.c.l.b16 %v2359
    %v3496 = vunpack.c.h.b16 %v2359
    %v3497 = vunpack.c.l.b16 %v2360
    %v3498 = vunpack.c.h.b16 %v2360
    %v3499 = vunpack.c.l.b16 %v2361
    %v3500 = vunpack.c.h.b16 %v2361
    %v3501 = vunpack.c.l.b16 %v2362
    %v3502 = vunpack.c.h.b16 %v2362
    %v3503 = vunpack.c.l.b16 %v2363
    %v3504 = vunpack.c.h.b16 %v2363
    %v3505 = vunpack.c.l.b16 %v2364
    %v3506 = vunpack.c.h.b16 %v2364
    %v3507 = vunpack.c.l.b16 %v2365
    %v3508 = vunpack.c.h.b16 %v2365
    %v3509 = vunpack.c.l.b16 %v2366
    %v3510 = vunpack.c.h.b16 %v2366
    %v3511 = vunpack.c.l.b16 %v2367
    %v3512 = vunpack.c.h.b16 %v2367
    %v3513 = vunpack.c.l.b16 %v2368
    %v3514 = vunpack.c.h.b16 %v2368
    %v3515 = vunpack.c.l.b16 %v2369
    %v3516 = vunpack.c.h.b16 %v2369
    %v3517 = vunpack.c.l.b16 %v2370
    %v3518 = vunpack.c.h.b16 %v2370
    %v3519 = vunpack.c.l.b16 %v2371
    %v3520 = vunpack.c.h.b16 %v2371
    %v3521 = vunpack.c.l.b16 %v2372
    %v3522 = vunpack.c.h.b16 %v2372
    %v3523 = vunpack.c.l.b16 %v2373
    %v3524 = vunpack.c.h.b16 %v2373
    %v3525 = vunpack.c.l.b16 %v2374
    %v3526 = vunpack.c.h.b16 %v2374
    %v3527 = vunpack.c.l.b16 %v2375
    %v3528 = vunpack.c.h.b16 %v2375
    %v3529 = vunpack.c.l.b16 %v2376
    %v3530 = vunpack.c.h.b16 %v2376
    %v3531 = vunpack.c.l.b16 %v2377
    %v3532 = vunpack.c.h.b16 %v2377
    %v3533 = vunpack.c.l.b16 %v2378
    %v3534 = vunpack.c.h.b16 %v2378
    %v3535 = vunpack.c.l.b16 %v2379
    %v3536 = vunpack.c.h.b16 %v2379
    %v3537 = vunpack.c.l.b16 %v2380
    %v3538 = vunpack.c.h.b16 %v2380
    %v3539 = vunpack.c.l.b16 %v2381
    %v3540 = vunpack.c.h.b16 %v2381
    %v3541 = vunpack.c.l.b16 %v2382
    %v3542 = vunpack.c.h.b16 %v2382
    %v3543 = vunpack.c.l.b16 %v2383
    %v3544 = vunpack.c.h.b16 %v2383
    %v3545 = vunpack.c.l.b16 %v2384
    %v3546 = vunpack.c.h.b16 %v2384
    %v3547 = vunpack.c.l.b16 %v2385
    %v3548 = vunpack.c.h.b16 %v2385
    %v3549 = vunpack.c.l.b16 %v2386
    %v3550 = vunpack.c.h.b16 %v2386
    %v3551 = vunpack.c.l.b16 %v2387
    %v3552 = vunpack.c.h.b16 %v2387
    %v3553 = vunpack.c.l.b16 %v2388
    %v3554 = vunpack.c.h.b16 %v2388
    %v3555 = vunpack.c.l.b16 %v2389
    %v3556 = vunpack.c.h.b16 %v2389
    %v3557 = vunpack.c.l.b16 %v2390
    %v3558 = vunpack.c.h.b16 %v2390
    %v3559 = vunpack.c.l.b16 %v2391
    %v3560 = vunpack.c.h.b16 %v2391
    %v3561 = vunpack.c.l.b16 %v2392
    %v3562 = vunpack.c.h.b16 %v2392
    %v3563 = vunpack.c.l.b16 %v2393
    %v3564 = vunpack.c.h.b16 %v2393
    %v3565 = vunpack.c.l.b16 %v2394
    %v3566 = vunpack.c.h.b16 %v2394
    %v3567 = vunpack.c.l.b16 %v2395
    %v3568 = vunpack.c.h.b16 %v2395
    %v3569 = vunpack.c.l.b16 %v2396
    %v3570 = vunpack.c.h.b16 %v2396
    %v3571 = vunpack.c.l.b16 %v2397
    %v3572 = vunpack.c.h.b16 %v2397
    %v3573 = vunpack.c.l.b16 %v2398
    %v3574 = vunpack.c.h.b16 %v2398
    %v3575 = vunpack.c.l.b16 %v2399
    %v3576 = vunpack.c.h.b16 %v2399
    %v3577 = vunpack.c.l.b16 %v2400
    %v3578 = vunpack.c.h.b16 %v2400
    %v3579 = vunpack.c.l.b16 %v2401
    %v3580 = vunpack.c.h.b16 %v2401
    %v3581 = vunpack.c.l.b16 %v2402
    %v3582 = vunpack.c.h.b16 %v2402
    %v3583 = vunpack.c.l.b16 %v2403
    %v3584 = vunpack.c.h.b16 %v2403
    %v3585 = vunpack.c.l.b16 %v2404
    %v3586 = vunpack.c.h.b16 %v2404
    %v3587 = vunpack.c.l.b16 %v2405
    %v3588 = vunpack.c.h.b16 %v2405
    %v3589 = vunpack.c.l.b16 %v2406
    %v3590 = vunpack.c.h.b16 %v2406
    %v3591 = vunpack.c.l.b16 %v2407
    %v3592 = vunpack.c.h.b16 %v2407
    %v3593 = vunpack.c.l.b16 %v2408
    %v3594 = vunpack.c.h.b16 %v2408
    %v3595 = vunpack.c.l.b16 %v2409
    %v3596 = vunpack.c.h.b16 %v2409
    %v3597 = vunpack.c.l.b16 %v2410
    %v3598 = vunpack.c.h.b16 %v2410
    %v3599 = vunpack.c.l.b16 %v2411
    %v3600 = vunpack.c.h.b16 %v2411
    %v3601 = vunpack.c.l.b16 %v2412
    %v3602 = vunpack.c.h.b16 %v2412
    %v3603 = vunpack.c.l.b16 %v2413
    %v3604 = vunpack.c.h.b16 %v2413
    %v3605 = vunpack.c.l.b16 %v2414
    %v3606 = vunpack.c.h.b16 %v2414
    %v3607 = vunpack.c.l.b16 %v2415
    %v3608 = vunpack.c.h.b16 %v2415
    %v3609 = vunpack.c.l.b16 %v2416
    %v3610 = vunpack.c.h.b16 %v2416
    %v3611 = vunpack.c.l.b16 %v2417
    %v3612 = vunpack.c.h.b16 %v2417
    %v3613 = vunpack.c.l.b16 %v2418
    %v3614 = vunpack.c.h.b16 %v2418
    %v3615 = vunpack.c.l.b16 %v2419
    %v3616 = vunpack.c.h.b16 %v2419
    %v3617 = vunpack.c.l.b16 %v2420
    %v3618 = vunpack.c.h.b16 %v2420
    %v3619 = vunpack.c.l.b16 %v2421
    %v3620 = vunpack.c.h.b16 %v2421
    %v3621 = vunpack.c.l.b16 %v2422
    %v3622 = vunpack.c.h.b16 %v2422
    %v3623 = vunpack.c.l.b16 %v2423
    %v3624 = vunpack.c.h.b16 %v2423
    %v3625 = vunpack.c.l.b16 %v2424
    %v3626 = vunpack.c.h.b16 %v2424
    %v3627 = vunpack.c.l.b16 %v2425
    %v3628 = vunpack.c.h.b16 %v2425
    %v3629 = vunpack.c.l.b16 %v2426
    %v3630 = vunpack.c.h.b16 %v2426
    %v3631 = vunpack.c.l.b16 %v2427
    %v3632 = vunpack.c.h.b16 %v2427
    %v3633 = vunpack.c.l.b16 %v2428
    %v3634 = vunpack.c.h.b16 %v2428
    %v3635 = vunpack.c.l.b16 %v2429
    %v3636 = vunpack.c.h.b16 %v2429
    %v3637 = vunpack.c.l.b16 %v2430
    %v3638 = vunpack.c.h.b16 %v2430
    %v3639 = vunpack.c.l.b16 %v2431
    %v3640 = vunpack.c.h.b16 %v2431
    %v3641 = vunpack.c.l.b16 %v2432
    %v3642 = vunpack.c.h.b16 %v2432
    %v3643 = vunpack.c.l.b16 %v2433
    %v3644 = vunpack.c.h.b16 %v2433
    %v3645 = vunpack.c.l.b16 %v2434
    %v3646 = vunpack.c.h.b16 %v2434
    %v3647 = vunpack.c.l.b16 %v2435
    %v3648 = vunpack.c.h.b16 %v2435
    %v3649 = vunpack.c.l.b16 %v2436
    %v3650 = vunpack.c.h.b16 %v2436
    %v3651 = vunpack.c.l.b16 %v2437
    %v3652 = vunpack.c.h.b16 %v2437
    %v3653 = vunpack.c.l.b16 %v2438
    %v3654 = vunpack.c.h.b16 %v2438
    %v3655 = vunpack.c.l.b16 %v2439
    %v3656 = vunpack.c.h.b16 %v2439
    %v3657 = vunpack.c.l.b16 %v2440
    %v3658 = vunpack.c.h.b16 %v2440
    %v3659 = vunpack.c.l.b16 %v2441
    %v3660 = vunpack.c.h.b16 %v2441
    %v3661 = vunpack.c.l.b16 %v2442
    %v3662 = vunpack.c.h.b16 %v2442
    %v3663 = vunpack.c.l.b16 %v2443
    %v3664 = vunpack.c.h.b16 %v2443
    %v3665 = vunpack.c.l.b16 %v2444
    %v3666 = vunpack.c.h.b16 %v2444
    %v3667 = vunpack.c.l.b16 %v2445
    %v3668 = vunpack.c.h.b16 %v2445
    %v3669 = vunpack.c.l.b16 %v2446
    %v3670 = vunpack.c.h.b16 %v2446
    %v3671 = vunpack.c.l.b16 %v2447
    %v3672 = vunpack.c.h.b16 %v2447
    %v3673 = vunpack.c.l.b16 %v2448
    %v3674 = vunpack.c.h.b16 %v2448
    %v3675 = vunpack.c.l.b16 %v2449
    %v3676 = vunpack.c.h.b16 %v2449
    %v3677 = vunpack.c.l.b16 %v2450
    %v3678 = vunpack.c.h.b16 %v2450
    %v3679 = vunpack.c.l.b16 %v2451
    %v3680 = vunpack.c.h.b16 %v2451
    %v3681 = vunpack.c.l.b16 %v2452
    %v3682 = vunpack.c.h.b16 %v2452
    %v3683 = vunpack.c.l.b16 %v2453
    %v3684 = vunpack.c.h.b16 %v2453
    %v3685 = vunpack.c.l.b16 %v2454
    %v3686 = vunpack.c.h.b16 %v2454
    %v3687 = vunpack.c.l.b16 %v2455
    %v3688 = vunpack.c.h.b16 %v2455
    %v3689 = vunpack.c.l.b16 %v2456
    %v3690 = vunpack.c.h.b16 %v2456
    %v3691 = vunpack.c.l.b16 %v2457
    %v3692 = vunpack.c.h.b16 %v2457
    %v3693 = vunpack.c.l.b16 %v2458
    %v3694 = vunpack.c.h.b16 %v2458
    %v3695 = vunpack.c.l.b16 %v2459
    %v3696 = vunpack.c.h.b16 %v2459
    %v3697 = vunpack.c.l.b16 %v2460
    %v3698 = vunpack.c.h.b16 %v2460
    %v3699 = vunpack.c.l.b16 %v2461
    %v3700 = vunpack.c.h.b16 %v2461
    %v3701 = vunpack.c.l.b16 %v2462
    %v3702 = vunpack.c.h.b16 %v2462
    %v3703 = vunpack.c.l.b16 %v2463
    %v3704 = vunpack.c.h.b16 %v2463
    %v3705 = vunpack.c.l.b16 %v2464
    %v3706 = vunpack.c.h.b16 %v2464
    %v3707 = vunpack.c.l.b16 %v2465
    %v3708 = vunpack.c.h.b16 %v2465
    %v3709 = vunpack.c.l.b16 %v2466
    %v3710 = vunpack.c.h.b16 %v2466
    %v3711 = vunpack.c.l.b16 %v2467
    %v3712 = vunpack.c.h.b16 %v2467
    %v3713 = vunpack.c.l.b16 %v2468
    %v3714 = vunpack.c.h.b16 %v2468
    %v3715 = vunpack.c.l.b16 %v2469
    %v3716 = vunpack.c.h.b16 %v2469
    %v3717 = vunpack.c.l.b16 %v2470
    %v3718 = vunpack.c.h.b16 %v2470
    %v3719 = vunpack.c.l.b16 %v2471
    %v3720 = vunpack.c.h.b16 %v2471
    %v3721 = vunpack.c.l.b16 %v2472
    %v3722 = vunpack.c.h.b16 %v2472
    %v3723 = vunpack.c.l.b16 %v2473
    %v3724 = vunpack.c.h.b16 %v2473
    %v3725 = vunpack.c.l.b16 %v2474
    %v3726 = vunpack.c.h.b16 %v2474
    %v3727 = vunpack.c.l.b16 %v2475
    %v3728 = vunpack.c.h.b16 %v2475
    %v3729 = vunpack.c.l.b16 %v2476
    %v3730 = vunpack.c.h.b16 %v2476
    %v3731 = vunpack.c.l.b16 %v2477
    %v3732 = vunpack.c.h.b16 %v2477
    %v3733 = vunpack.c.l.b16 %v2478
    %v3734 = vunpack.c.h.b16 %v2478
    %v3735 = vunpack.c.l.b16 %v2479
    %v3736 = vunpack.c.h.b16 %v2479
    %v3737 = vunpack.c.l.b16 %v2480
    %v3738 = vunpack.c.h.b16 %v2480
    %v3739 = vunpack.c.l.b16 %v2481
    %v3740 = vunpack.c.h.b16 %v2481
    %v3741 = vunpack.c.l.b16 %v2482
    %v3742 = vunpack.c.h.b16 %v2482
    %v3743 = vunpack.c.l.b16 %v2483
    %v3744 = vunpack.c.h.b16 %v2483
    %v3745 = vunpack.c.l.b16 %v2484
    %v3746 = vunpack.c.h.b16 %v2484
    %v3747 = vunpack.c.l.b16 %v2485
    %v3748 = vunpack.c.h.b16 %v2485
    %v3749 = vunpack.c.l.b16 %v2486
    %v3750 = vunpack.c.h.b16 %v2486
    %v3751 = vunpack.c.l.b16 %v2487
    %v3752 = vunpack.c.h.b16 %v2487
    %v3753 = vunpack.c.l.b16 %v2488
    %v3754 = vunpack.c.h.b16 %v2488
    %v3755 = vunpack.c.l.b16 %v2489
    %v3756 = vunpack.c.h.b16 %v2489
    %v3757 = vunpack.c.l.b16 %v2490
    %v3758 = vunpack.c.h.b16 %v2490
    %v3759 = vunpack.c.l.b16 %v2491
    %v3760 = vunpack.c.h.b16 %v2491
    %v3761 = vunpack.c.l.b16 %v2492
    %v3762 = vunpack.c.h.b16 %v2492
    %v3763 = vunpack.c.l.b16 %v2493
    %v3764 = vunpack.c.h.b16 %v2493
    %v3765 = vunpack.c.l.b16 %v2494
    %v3766 = vunpack.c.h.b16 %v2494
    %v3767 = vunpack.c.l.b16 %v2495
    %v3768 = vunpack.c.h.b16 %v2495
    %v3769 = vunpack.c.l.b16 %v2496
    %v3770 = vunpack.c.h.b16 %v2496
    %v3771 = vunpack.c.l.b16 %v2497
    %v3772 = vunpack.c.h.b16 %v2497
    %v3773 = vunpack.c.l.b16 %v2498
    %v3774 = vunpack.c.h.b16 %v2498
    %v3775 = vunpack.c.l.b16 %v2499
    %v3776 = vunpack.c.h.b16 %v2499
    %v3777 = vunpack.c.l.b16 %v2500
    %v3778 = vunpack.c.h.b16 %v2500
    %v3779 = vunpack.c.l.b16 %v2501
    %v3780 = vunpack.c.h.b16 %v2501
    %v3781 = vunpack.c.l.b16 %v2502
    %v3782 = vunpack.c.h.b16 %v2502
    %v3783 = vunpack.c.l.b16 %v2503
    %v3784 = vunpack.c.h.b16 %v2503
    %v3785 = vunpack.c.l.b16 %v2504
    %v3786 = vunpack.c.h.b16 %v2504
    %v3787 = vunpack.c.l.b16 %v2505
    %v3788 = vunpack.c.h.b16 %v2505
    %v3789 = vunpack.c.l.b16 %v2506
    %v3790 = vunpack.c.h.b16 %v2506
    %v3791 = vunpack.c.l.b16 %v2507
    %v3792 = vunpack.c.h.b16 %v2507
    %v3793 = vunpack.c.l.b16 %v2508
    %v3794 = vunpack.c.h.b16 %v2508
    %v3795 = vunpack.c.l.b16 %v2509
    %v3796 = vunpack.c.h.b16 %v2509
    %v3797 = vunpack.c.l.b16 %v2510
    %v3798 = vunpack.c.h.b16 %v2510
    %v3799 = vunpack.c.l.b16 %v2511
    %v3800 = vunpack.c.h.b16 %v2511
    %v3801 = vunpack.c.l.b16 %v2512
    %v3802 = vunpack.c.h.b16 %v2512
    %v3803 = vunpack.c.l.b16 %v2513
    %v3804 = vunpack.c.h.b16 %v2513
    %v3805 = vunpack.c.l.b16 %v2514
    %v3806 = vunpack.c.h.b16 %v2514
    %v3807 = vunpack.c.l.b16 %v2515
    %v3808 = vunpack.c.h.b16 %v2515
    %v3809 = vunpack.c.l.b16 %v2516
    %v3810 = vunpack.c.h.b16 %v2516
    %v3811 = vunpack.c.l.b16 %v2517
    %v3812 = vunpack.c.h.b16 %v2517
    %v3813 = vunpack.c.l.b16 %v2518
    %v3814 = vunpack.c.h.b16 %v2518
    %v3815 = vunpack.c.l.b16 %v2519
    %v3816 = vunpack.c.h.b16 %v2519
    %v3817 = vunpack.c.l.b16 %v2520
    %v3818 = vunpack.c.h.b16 %v2520
    %v3819 = vunpack.c.l.b16 %v2521
    %v3820 = vunpack.c.h.b16 %v2521
    %v3821 = vunpack.c.l.b16 %v2522
    %v3822 = vunpack.c.h.b16 %v2522
    %v3823 = vunpack.c.l.b16 %v2523
    %v3824 = vunpack.c.h.b16 %v2523
    %v3825 = vunpack.c.l.b16 %v2524
    %v3826 = vunpack.c.h.b16 %v2524
    %v3827 = vunpack.c.l.b16 %v2525
    %v3828 = vunpack.c.h.b16 %v2525
    %v3829 = vunpack.c.l.b16 %v2526
    %v3830 = vunpack.c.h.b16 %v2526
    %v3831 = vunpack.c.l.b16 %v2527
    %v3832 = vunpack.c.h.b16 %v2527
    %v3833 = vunpack.c.l.b16 %v2528
    %v3834 = vunpack.c.h.b16 %v2528
    %v3835 = vunpack.c.l.b16 %v2529
    %v3836 = vunpack.c.h.b16 %v2529
    %v3837 = vunpack.c.l.b16 %v2530
    %v3838 = vunpack.c.h.b16 %v2530
    %v3839 = vunpack.c.l.b16 %v2531
    %v3840 = vunpack.c.h.b16 %v2531
    %v3841 = vunpack.c.l.b16 %v2532
    %v3842 = vunpack.c.h.b16 %v2532
    %v3843 = vunpack.c.l.b16 %v2533
    %v3844 = vunpack.c.h.b16 %v2533
    %v3845 = vunpack.c.l.b16 %v2534
    %v3846 = vunpack.c.h.b16 %v2534
    %v3847 = vunpack.c.l.b16 %v2535
    %v3848 = vunpack.c.h.b16 %v2535
    %v3849 = vunpack.c.l.b16 %v2536
    %v3850 = vunpack.c.h.b16 %v2536
    %v3851 = vunpack.c.l.b16 %v2537
    %v3852 = vunpack.c.h.b16 %v2537
    %v3853 = vunpack.c.l.b16 %v2538
    %v3854 = vunpack.c.h.b16 %v2538
    %v3855 = vunpack.c.l.b16 %v2539
    %v3856 = vunpack.c.h.b16 %v2539
    %v3857 = vunpack.c.l.b16 %v2540
    %v3858 = vunpack.c.h.b16 %v2540
    %v3859 = vunpack.c.l.b16 %v2541
    %v3860 = vunpack.c.h.b16 %v2541
    %v3861 = vunpack.c.l.b16 %v2542
    %v3862 = vunpack.c.h.b16 %v2542
    %v3863 = vunpack.c.l.b16 %v2543
    %v3864 = vunpack.c.h.b16 %v2543
    %v3865 = vunpack.c.l.b16 %v2544
    %v3866 = vunpack.c.h.b16 %v2544
    %v3867 = vunpack.c.l.b16 %v2545
    %v3868 = vunpack.c.h.b16 %v2545
    %v3869 = vunpack.c.l.b16 %v2546
    %v3870 = vunpack.c.h.b16 %v2546
    %v3871 = vunpack.c.l.b16 %v2547
    %v3872 = vunpack.c.h.b16 %v2547
    %v3873 = vunpack.c.l.b16 %v2548
    %v3874 = vunpack.c.h.b16 %v2548
    %v3875 = vunpack.c.l.b16 %v2549
    %v3876 = vunpack.c.h.b16 %v2549
    %v3877 = vunpack.c.l.b16 %v2550
    %v3878 = vunpack.c.h.b16 %v2550
    %v3879 = vunpack.c.l.b16 %v2551
    %v3880 = vunpack.c.h.b16 %v2551
    %v3881 = vunpack.c.l.b16 %v2552
    %v3882 = vunpack.c.h.b16 %v2552
    %v3883 = vunpack.c.l.b16 %v2553
    %v3884 = vunpack.c.h.b16 %v2553
    %v3885 = vunpack.c.l.b16 %v2554
    %v3886 = vunpack.c.h.b16 %v2554
    %v3887 = vunpack.c.l.b16 %v2555
    %v3888 = vunpack.c.h.b16 %v2555
    %v3889 = vunpack.c.l.b16 %v2556
    %v3890 = vunpack.c.h.b16 %v2556
    %v3891 = vunpack.c.l.b16 %v2557
    %v3892 = vunpack.c.h.b16 %v2557
    %v3893 = vunpack.c.l.b16 %v2558
    %v3894 = vunpack.c.h.b16 %v2558
    %v3895 = vunpack.c.l.b16 %v2559
    %v3896 = vunpack.c.h.b16 %v2559
    %v3897 = vunpack.c.l.b16 %v2560
    %v3898 = vunpack.c.h.b16 %v2560
    %v3899 = vunpack.c.l.b16 %v2561
    %v3900 = vunpack.c.h.b16 %v2561
    %v3901 = vunpack.c.l.b16 %v2562
    %v3902 = vunpack.c.h.b16 %v2562
    %v3903 = vunpack.c.l.b16 %v2563
    %v3904 = vunpack.c.h.b16 %v2563
    %v3905 = vunpack.c.l.b16 %v2564
    %v3906 = vunpack.c.h.b16 %v2564
    %v3907 = vunpack.c.l.b16 %v2565
    %v3908 = vunpack.c.h.b16 %v2565
    %v3909 = vunpack.c.l.b16 %v2566
    %v3910 = vunpack.c.h.b16 %v2566
    %v3911 = vunpack.c.l.b16 %v2567
    %v3912 = vunpack.c.h.b16 %v2567
    %v3913 = vunpack.c.l.b16 %v2568
    %v3914 = vunpack.c.h.b16 %v2568
    %v3915 = vunpack.c.l.b16 %v2569
    %v3916 = vunpack.c.h.b16 %v2569
    %v3917 = vunpack.c.l.b16 %v2570
    %v3918 = vunpack.c.h.b16 %v2570
    %v3919 = vunpack.c.l.b16 %v2571
    %v3920 = vunpack.c.h.b16 %v2571
    %v3921 = vunpack.c.l.b16 %v2572
    %v3922 = vunpack.c.h.b16 %v2572
    %v3923 = vunpack.c.l.b16 %v2573
    %v3924 = vunpack.c.h.b16 %v2573
    %v3925 = vunpack.c.l.b16 %v2574
    %v3926 = vunpack.c.h.b16 %v2574
    %v3927 = vunpack.c.l.b16 %v2575
    %v3928 = vunpack.c.h.b16 %v2575
    %v3929 = vunpack.c.l.b16 %v2576
    %v3930 = vunpack.c.h.b16 %v2576
    %v3931 = vpack.c.b16 %v3039, %v3035
    %v3932 = vpack.c.b16 %v3040, %v3036
    %v3933 = vpack.c.b16 %v3041, %v3037
    %v3934 = vpack.c.b16 %v3042, %v3038
    %v3935 = vpack.c.b16 %v3047, %v3043
    %v3936 = vpack.c.b16 %v3048, %v3044
    %v3937 = vpack.c.b16 %v3049, %v3045
    %v3938 = vpack.c.b16 %v3050, %v3046
    %v3939 = vpack.c.b16 %v3055, %v3051
    %v3940 = vpack.c.b16 %v3056, %v3052
    %v3941 = vpack.c.b16 %v3057, %v3053
    %v3942 = vpack.c.b16 %v3058, %v3054
    %v3943 = vpack.c.b16 %v3063, %v3059
    %v3944 = vpack.c.b16 %v3064, %v3060
    %v3945 = vpack.c.b16 %v3065, %v3061
    %v3946 = vpack.c.b16 %v3066, %v3062
    %v3947 = vpack.c.b16 %v3071, %v3067
    %v3948 = vpack.c.b16 %v3072, %v3068
    %v3949 = vpack.c.b16 %v3073, %v3069
    %v3950 = vpack.c.b16 %v3074, %v3070
    %v3951 = vpack.c.b16 %v3079, %v3075
    %v3952 = vpack.c.b16 %v3080, %v3076
    %v3953 = vpack.c.b16 %v3081, %v3077
    %v3954 = vpack.c.b16 %v3082, %v3078
    %v3955 = vpack.c.b16 %v3087, %v3083
    %v3956 = vpack.c.b16 %v3088, %v3084
    %v3957 = vpack.c.b16 %v3089, %v3085
    %v3958 = vpack.c.b16 %v3090, %v3086
    %v3959 = vpack.c.b16 %v3095, %v3091
    %v3960 = vpack.c.b16 %v3096, %v3092
    %v3961 = vpack.c.b16 %v3097, %v3093
    %v3962 = vpack.c.b16 %v3098, %v3094
    %v3963 = vpack.c.b16 %v3103, %v3099
    %v3964 = vpack.c.b16 %v3104, %v3100
    %v3965 = vpack.c.b16 %v3105, %v3101
    %v3966 = vpack.c.b16 %v3106, %v3102
    %v3967 = vpack.c.b16 %v3111, %v3107
    %v3968 = vpack.c.b16 %v3112, %v3108
    %v3969 = vpack.c.b16 %v3113, %v3109
    %v3970 = vpack.c.b16 %v3114, %v3110
    %v3971 = vpack.c.b16 %v3119, %v3115
    %v3972 = vpack.c.b16 %v3120, %v3116
    %v3973 = vpack.c.b16 %v3121, %v3117
    %v3974 = vpack.c.b16 %v3122, %v3118
    %v3975 = vpack.c.b16 %v3127, %v3123
    %v3976 = vpack.c.b16 %v3128, %v3124
    %v3977 = vpack.c.b16 %v3129, %v3125
    %v3978 = vpack.c.b16 %v3130, %v3126
    %v3979 = vpack.c.b16 %v3135, %v3131
    %v3980 = vpack.c.b16 %v3136, %v3132
    %v3981 = vpack.c.b16 %v3137, %v3133
    %v3982 = vpack.c.b16 %v3138, %v3134
    %v3983 = vpack.c.b16 %v3143, %v3139
    %v3984 = vpack.c.b16 %v3144, %v3140
    %v3985 = vpack.c.b16 %v3145, %v3141
    %v3986 = vpack.c.b16 %v3146, %v3142
    %v3987 = vpack.c.b16 %v3151, %v3147
    %v3988 = vpack.c.b16 %v3152, %v3148
    %v3989 = vpack.c.b16 %v3153, %v3149
    %v3990 = vpack.c.b16 %v3154, %v3150
    %v3991 = vpack.c.b16 %v3159, %v3155
    %v3992 = vpack.c.b16 %v3160, %v3156
    %v3993 = vpack.c.b16 %v3161, %v3157
    %v3994 = vpack.c.b16 %v3162, %v3158
    %v3995 = vpack.c.b16 %v3167, %v3163
    %v3996 = vpack.c.b16 %v3168, %v3164
    %v3997 = vpack.c.b16 %v3169, %v3165
    %v3998 = vpack.c.b16 %v3170, %v3166
    %v3999 = vpack.c.b16 %v3175, %v3171
    %v4000 = vpack.c.b16 %v3176, %v3172
    %v4001 = vpack.c.b16 %v3177, %v3173
    %v4002 = vpack.c.b16 %v3178, %v3174
    %v4003 = vpack.c.b16 %v3183, %v3179
    %v4004 = vpack.c.b16 %v3184, %v3180
    %v4005 = vpack.c.b16 %v3185, %v3181
    %v4006 = vpack.c.b16 %v3186, %v3182
    %v4007 = vpack.c.b16 %v3191, %v3187
    %v4008 = vpack.c.b16 %v3192, %v3188
    %v4009 = vpack.c.b16 %v3193, %v3189
    %v4010 = vpack.c.b16 %v3194, %v3190
    %v4011 = vpack.c.b16 %v3199, %v3195
    %v4012 = vpack.c.b16 %v3200, %v3196
    %v4013 = vpack.c.b16 %v3201, %v3197
    %v4014 = vpack.c.b16 %v3202, %v3198
    %v4015 = vpack.c.b16 %v3207, %v3203
    %v4016 = vpack.c.b16 %v3208, %v3204
    %v4017 = vpack.c.b16 %v3209, %v3205
    %v4018 = vpack.c.b16 %v3210, %v3206
    %v4019 = vpack.c.b16 %v3215, %v3211
    %v4020 = vpack.c.b16 %v3216, %v3212
    %v4021 = vpack.c.b16 %v3217, %v3213
    %v4022 = vpack.c.b16 %v3218, %v3214
    %v4023 = vpack.c.b16 %v3223, %v3219
    %v4024 = vpack.c.b16 %v3224, %v3220
    %v4025 = vpack.c.b16 %v3225, %v3221
    %v4026 = vpack.c.b16 %v3226, %v3222
    %v4027 = vpack.c.b16 %v3231, %v3227
    %v4028 = vpack.c.b16 %v3232, %v3228
    %v4029 = vpack.c.b16 %v3233, %v3229
    %v4030 = vpack.c.b16 %v3234, %v3230
    %v4031 = vpack.c.b16 %v3239, %v3235
    %v4032 = vpack.c.b16 %v3240, %v3236
    %v4033 = vpack.c.b16 %v3241, %v3237
    %v4034 = vpack.c.b16 %v3242, %v3238
    %v4035 = vpack.c.b16 %v3247, %v3243
    %v4036 = vpack.c.b16 %v3248, %v3244
    %v4037 = vpack.c.b16 %v3249, %v3245
    %v4038 = vpack.c.b16 %v3250, %v3246
    %v4039 = vpack.c.b16 %v3255, %v3251
    %v4040 = vpack.c.b16 %v3256, %v3252
    %v4041 = vpack.c.b16 %v3257, %v3253
    %v4042 = vpack.c.b16 %v3258, %v3254
    %v4043 = vpack.c.b16 %v3263, %v3259
    %v4044 = vpack.c.b16 %v3264, %v3260
    %v4045 = vpack.c.b16 %v3265, %v3261
    %v4046 = vpack.c.b16 %v3266, %v3262
    %v4047 = vpack.c.b16 %v3271, %v3267
    %v4048 = vpack.c.b16 %v3272, %v3268
    %v4049 = vpack.c.b16 %v3273, %v3269
    %v4050 = vpack.c.b16 %v3274, %v3270
    %v4051 = vpack.c.b16 %v3279, %v3275
    %v4052 = vpack.c.b16 %v3280, %v3276
    %v4053 = vpack.c.b16 %v3281, %v3277
    %v4054 = vpack.c.b16 %v3282, %v3278
    %v4055 = vpack.c.b16 %v3287, %v3283
    %v4056 = vpack.c.b16 %v3288, %v3284
    %v4057 = vpack.c.b16 %v3289, %v3285
    %v4058 = vpack.c.b16 %v3290, %v3286
    %v4059 = vpack.c.b16 %v3295, %v3291
    %v4060 = vpack.c.b16 %v3296, %v3292
    %v4061 = vpack.c.b16 %v3297, %v3293
    %v4062 = vpack.c.b16 %v3298, %v3294
    %v4063 = vpack.c.b16 %v3303, %v3299
    %v4064 = vpack.c.b16 %v3304, %v3300
    %v4065 = vpack.c.b16 %v3305, %v3301
    %v4066 = vpack.c.b16 %v3306, %v3302
    %v4067 = vpack.c.b16 %v3311, %v3307
    %v4068 = vpack.c.b16 %v3312, %v3308
    %v4069 = vpack.c.b16 %v3313, %v3309
    %v4070 = vpack.c.b16 %v3314, %v3310
    %v4071 = vpack.c.b16 %v3319, %v3315
    %v4072 = vpack.c.b16 %v3320, %v3316
    %v4073 = vpack.c.b16 %v3321, %v3317
    %v4074 = vpack.c.b16 %v3322, %v3318
    %v4075 = vpack.c.b16 %v3327, %v3323
    %v4076 = vpack.c.b16 %v3328, %v3324
    %v4077 = vpack.c.b16 %v3329, %v3325
    %v4078 = vpack.c.b16 %v3330, %v3326
    %v4079 = vpack.c.b16 %v3335, %v3331
    %v4080 = vpack.c.b16 %v3336, %v3332
    %v4081 = vpack.c.b16 %v3337, %v3333
    %v4082 = vpack.c.b16 %v3338, %v3334
    %v4083 = vpack.c.b16 %v3343, %v3339
    %v4084 = vpack.c.b16 %v3344, %v3340
    %v4085 = vpack.c.b16 %v3345, %v3341
    %v4086 = vpack.c.b16 %v3346, %v3342
    %v4087 = vpack.c.b16 %v3351, %v3347
    %v4088 = vpack.c.b16 %v3352, %v3348
    %v4089 = vpack.c.b16 %v3353, %v3349
    %v4090 = vpack.c.b16 %v3354, %v3350
    %v4091 = vpack.c.b16 %v3359, %v3355
    %v4092 = vpack.c.b16 %v3360, %v3356
    %v4093 = vpack.c.b16 %v3361, %v3357
    %v4094 = vpack.c.b16 %v3362, %v3358
    %v4095 = vpack.c.b16 %v3367, %v3363
    %v4096 = vpack.c.b16 %v3368, %v3364
    %v4097 = vpack.c.b16 %v3369, %v3365
    %v4098 = vpack.c.b16 %v3370, %v3366
    %v4099 = vpack.c.b16 %v3375, %v3371
    %v4100 = vpack.c.b16 %v3376, %v3372
    %v4101 = vpack.c.b16 %v3377, %v3373
    %v4102 = vpack.c.b16 %v3378, %v3374
    %v4103 = vpack.c.b16 %v3383, %v3379
    %v4104 = vpack.c.b16 %v3384, %v3380
    %v4105 = vpack.c.b16 %v3385, %v3381
    %v4106 = vpack.c.b16 %v3386, %v3382
    %v4107 = vpack.c.b16 %v3391, %v3387
    %v4108 = vpack.c.b16 %v3392, %v3388
    %v4109 = vpack.c.b16 %v3393, %v3389
    %v4110 = vpack.c.b16 %v3394, %v3390
    %v4111 = vpack.c.b16 %v3399, %v3395
    %v4112 = vpack.c.b16 %v3400, %v3396
    %v4113 = vpack.c.b16 %v3401, %v3397
    %v4114 = vpack.c.b16 %v3402, %v3398
    %v4115 = vpack.c.b16 %v3407, %v3403
    %v4116 = vpack.c.b16 %v3408, %v3404
    %v4117 = vpack.c.b16 %v3409, %v3405
    %v4118 = vpack.c.b16 %v3410, %v3406
    %v4119 = vpack.c.b16 %v3415, %v3411
    %v4120 = vpack.c.b16 %v3416, %v3412
    %v4121 = vpack.c.b16 %v3417, %v3413
    %v4122 = vpack.c.b16 %v3418, %v3414
    %v4123 = vpack.c.b16 %v3423, %v3419
    %v4124 = vpack.c.b16 %v3424, %v3420
    %v4125 = vpack.c.b16 %v3425, %v3421
    %v4126 = vpack.c.b16 %v3426, %v3422
    %v4127 = vpack.c.b16 %v3431, %v3427
    %v4128 = vpack.c.b16 %v3432, %v3428
    %v4129 = vpack.c.b16 %v3433, %v3429
    %v4130 = vpack.c.b16 %v3434, %v3430
    %v4131 = vpack.c.b16 %v3439, %v3435
    %v4132 = vpack.c.b16 %v3440, %v3436
    %v4133 = vpack.c.b16 %v3441, %v3437
    %v4134 = vpack.c.b16 %v3442, %v3438
    %v4135 = vpack.c.b16 %v3447, %v3443
    %v4136 = vpack.c.b16 %v3448, %v3444
    %v4137 = vpack.c.b16 %v3449, %v3445
    %v4138 = vpack.c.b16 %v3450, %v3446
    %v4139 = vpack.c.b16 %v3455, %v3451
    %v4140 = vpack.c.b16 %v3456, %v3452
    %v4141 = vpack.c.b16 %v3457, %v3453
    %v4142 = vpack.c.b16 %v3458, %v3454
    %v4143 = vpack.c.b16 %v3463, %v3459
    %v4144 = vpack.c.b16 %v3464, %v3460
    %v4145 = vpack.c.b16 %v3465, %v3461
    %v4146 = vpack.c.b16 %v3466, %v3462
    %v4147 = vpack.c.b16 %v3471, %v3467
    %v4148 = vpack.c.b16 %v3472, %v3468
    %v4149 = vpack.c.b16 %v3473, %v3469
    %v4150 = vpack.c.b16 %v3474, %v3470
    %v4151 = vpack.c.b16 %v3479, %v3475
    %v4152 = vpack.c.b16 %v3480, %v3476
    %v4153 = vpack.c.b16 %v3481, %v3477
    %v4154 = vpack.c.b16 %v3482, %v3478
    %v4155 = vpack.c.b16 %v3487, %v3483
    %v4156 = vpack.c.b16 %v3488, %v3484
    %v4157 = vpack.c.b16 %v3489, %v3485
    %v4158 = vpack.c.b16 %v3490, %v3486
    %v4159 = vpack.c.b16 %v3495, %v3491
    %v4160 = vpack.c.b16 %v3496, %v3492
    %v4161 = vpack.c.b16 %v3497, %v3493
    %v4162 = vpack.c.b16 %v3498, %v3494
    %v4163 = vpack.c.b16 %v3503, %v3499
    %v4164 = vpack.c.b16 %v3504, %v3500
    %v4165 = vpack.c.b16 %v3505, %v3501
    %v4166 = vpack.c.b16 %v3506, %v3502
    %v4167 = vpack.c.b16 %v3511, %v3507
    %v4168 = vpack.c.b16 %v3512, %v3508
    %v4169 = vpack.c.b16 %v3513, %v3509
    %v4170 = vpack.c.b16 %v3514, %v3510
    %v4171 = vpack.c.b16 %v3519, %v3515
    %v4172 = vpack.c.b16 %v3520, %v3516
    %v4173 = vpack.c.b16 %v3521, %v3517
    %v4174 = vpack.c.b16 %v3522, %v3518
    %v4175 = vpack.c.b16 %v3527, %v3523
    %v4176 = vpack.c.b16 %v3528, %v3524
    %v4177 = vpack.c.b16 %v3529, %v3525
    %v4178 = vpack.c.b16 %v3530, %v3526
    %v4179 = vpack.c.b16 %v3535, %v3531
    %v4180 = vpack.c.b16 %v3536, %v3532
    %v4181 = vpack.c.b16 %v3537, %v3533
    %v4182 = vpack.c.b16 %v3538, %v3534
    %v4183 = vpack.c.b16 %v3543, %v3539
    %v4184 = vpack.c.b16 %v3544, %v3540
    %v4185 = vpack.c.b16 %v3545, %v3541
    %v4186 = vpack.c.b16 %v3546, %v3542
    %v4187 = vpack.c.b16 %v3551, %v3547
    %v4188 = vpack.c.b16 %v3552, %v3548
    %v4189 = vpack.c.b16 %v3553, %v3549
    %v4190 = vpack.c.b16 %v3554, %v3550
    %v4191 = vpack.c.b16 %v3559, %v3555
    %v4192 = vpack.c.b16 %v3560, %v3556
    %v4193 = vpack.c.b16 %v3561, %v3557
    %v4194 = vpack.c.b16 %v3562, %v3558
    %v4195 = vpack.c.b16 %v3567, %v3563
    %v4196 = vpack.c.b16 %v3568, %v3564
    %v4197 = vpack.c.b16 %v3569, %v3565
    %v4198 = vpack.c.b16 %v3570, %v3566
    %v4199 = vpack.c.b16 %v3575, %v3571
    %v4200 = vpack.c.b16 %v3576, %v3572
    %v4201 = vpack.c.b16 %v3577, %v3573
    %v4202 = vpack.c.b16 %v3578, %v3574
    %v4203 = vpack.c.b16 %v3583, %v3579
    %v4204 = vpack.c.b16 %v3584, %v3580
    %v4205 = vpack.c.b16 %v3585, %v3581
    %v4206 = vpack.c.b16 %v3586, %v3582
    %v4207 = vpack.c.b16 %v3591, %v3587
    %v4208 = vpack.c.b16 %v3592, %v3588
    %v4209 = vpack.c.b16 %v3593, %v3589
    %v4210 = vpack.c.b16 %v3594, %v3590
    %v4211 = vpack.c.b16 %v3599, %v3595
    %v4212 = vpack.c.b16 %v3600, %v3596
    %v4213 = vpack.c.b16 %v3601, %v3597
    %v4214 = vpack.c.b16 %v3602, %v3598
    %v4215 = vpack.c.b16 %v3607, %v3603
    %v4216 = vpack.c.b16 %v3608, %v3604
    %v4217 = vpack.c.b16 %v3609, %v3605
    %v4218 = vpack.c.b16 %v3610, %v3606
    %v4219 = vpack.c.b16 %v3615, %v3611
    %v4220 = vpack.c.b16 %v3616, %v3612
    %v4221 = vpack.c.b16 %v3617, %v3613
    %v4222 = vpack.c.b16 %v3618, %v3614
    %v4223 = vpack.c.b16 %v3623, %v3619
    %v4224 = vpack.c.b16 %v3624, %v3620
    %v4225 = vpack.c.b16 %v3625, %v3621
    %v4226 = vpack.c.b16 %v3626, %v3622
    %v4227 = vpack.c.b16 %v3631, %v3627
    %v4228 = vpack.c.b16 %v3632, %v3628
    %v4229 = vpack.c.b16 %v3633, %v3629
    %v4230 = vpack.c.b16 %v3634, %v3630
    %v4231 = vpack.c.b16 %v3639, %v3635
    %v4232 = vpack.c.b16 %v3640, %v3636
    %v4233 = vpack.c.b16 %v3641, %v3637
    %v4234 = vpack.c.b16 %v3642, %v3638
    %v4235 = vpack.c.b16 %v3647, %v3643
    %v4236 = vpack.c.b16 %v3648, %v3644
    %v4237 = vpack.c.b16 %v3649, %v3645
    %v4238 = vpack.c.b16 %v3650, %v3646
    %v4239 = vpack.c.b16 %v3655, %v3651
    %v4240 = vpack.c.b16 %v3656, %v3652
    %v4241 = vpack.c.b16 %v3657, %v3653
    %v4242 = vpack.c.b16 %v3658, %v3654
    %v4243 = vpack.c.b16 %v3663, %v3659
    %v4244 = vpack.c.b16 %v3664, %v3660
    %v4245 = vpack.c.b16 %v3665, %v3661
    %v4246 = vpack.c.b16 %v3666, %v3662
    %v4247 = vpack.c.b16 %v3671, %v3667
    %v4248 = vpack.c.b16 %v3672, %v3668
    %v4249 = vpack.c.b16 %v3673, %v3669
    %v4250 = vpack.c.b16 %v3674, %v3670
    %v4251 = vpack.c.b16 %v3679, %v3675
    %v4252 = vpack.c.b16 %v3680, %v3676
    %v4253 = vpack.c.b16 %v3681, %v3677
    %v4254 = vpack.c.b16 %v3682, %v3678
    %v4255 = vpack.c.b16 %v3687, %v3683
    %v4256 = vpack.c.b16 %v3688, %v3684
    %v4257 = vpack.c.b16 %v3689, %v3685
    %v4258 = vpack.c.b16 %v3690, %v3686
    %v4259 = vpack.c.b16 %v3695, %v3691
    %v4260 = vpack.c.b16 %v3696, %v3692
    %v4261 = vpack.c.b16 %v3697, %v3693
    %v4262 = vpack.c.b16 %v3698, %v3694
    %v4263 = vpack.c.b16 %v3703, %v3699
    %v4264 = vpack.c.b16 %v3704, %v3700
    %v4265 = vpack.c.b16 %v3705, %v3701
    %v4266 = vpack.c.b16 %v3706, %v3702
    %v4267 = vpack.c.b16 %v3711, %v3707
    %v4268 = vpack.c.b16 %v3712, %v3708
    %v4269 = vpack.c.b16 %v3713, %v3709
    %v4270 = vpack.c.b16 %v3714, %v3710
    %v4271 = vpack.c.b16 %v3719, %v3715
    %v4272 = vpack.c.b16 %v3720, %v3716
    %v4273 = vpack.c.b16 %v3721, %v3717
    %v4274 = vpack.c.b16 %v3722, %v3718
    %v4275 = vpack.c.b16 %v3727, %v3723
    %v4276 = vpack.c.b16 %v3728, %v3724
    %v4277 = vpack.c.b16 %v3729, %v3725
    %v4278 = vpack.c.b16 %v3730, %v3726
    %v4279 = vpack.c.b16 %v3735, %v3731
    %v4280 = vpack.c.b16 %v3736, %v3732
    %v4281 = vpack.c.b16 %v3737, %v3733
    %v4282 = vpack.c.b16 %v3738, %v3734
    %v4283 = vpack.c.b16 %v3743, %v3739
    %v4284 = vpack.c.b16 %v3744, %v3740
    %v4285 = vpack.c.b16 %v3745, %v3741
    %v4286 = vpack.c.b16 %v3746, %v3742
    %v4287 = vpack.c.b16 %v3751, %v3747
    %v4288 = vpack.c.b16 %v3752, %v3748
    %v4289 = vpack.c.b16 %v3753, %v3749
    %v4290 = vpack.c.b16 %v3754, %v3750
    %v4291 = vpack.c.b16 %v3759, %v3755
    %v4292 = vpack.c.b16 %v3760, %v3756
    %v4293 = vpack.c.b16 %v3761, %v3757
    %v4294 = vpack.c.b16 %v3762, %v3758
    %v4295 = vpack.c.b16 %v3767, %v3763
    %v4296 = vpack.c.b16 %v3768, %v3764
    %v4297 = vpack.c.b16 %v3769, %v3765
    %v4298 = vpack.c.b16 %v3770, %v3766
    %v4299 = vpack.c.b16 %v3775, %v3771
    %v4300 = vpack.c.b16 %v3776, %v3772
    %v4301 = vpack.c.b16 %v3777, %v3773
    %v4302 = vpack.c.b16 %v3778, %v3774
    %v4303 = vpack.c.b16 %v3783, %v3779
    %v4304 = vpack.c.b16 %v3784, %v3780
    %v4305 = vpack.c.b16 %v3785, %v3781
    %v4306 = vpack.c.b16 %v3786, %v3782
    %v4307 = vpack.c.b16 %v3791, %v3787
    %v4308 = vpack.c.b16 %v3792, %v3788
    %v4309 = vpack.c.b16 %v3793, %v3789
    %v4310 = vpack.c.b16 %v3794, %v3790
    %v4311 = vpack.c.b16 %v3799, %v3795
    %v4312 = vpack.c.b16 %v3800, %v3796
    %v4313 = vpack.c.b16 %v3801, %v3797
    %v4314 = vpack.c.b16 %v3802, %v3798
    %v4315 = vpack.c.b16 %v3807, %v3803
    %v4316 = vpack.c.b16 %v3808, %v3804
    %v4317 = vpack.c.b16 %v3809, %v3805
    %v4318 = vpack.c.b16 %v3810, %v3806
    %v4319 = vpack.c.b16 %v3815, %v3811
    %v4320 = vpack.c.b16 %v3816, %v3812
    %v4321 = vpack.c.b16 %v3817, %v3813
    %v4322 = vpack.c.b16 %v3818, %v3814
    %v4323 = vpack.c.b16 %v3823, %v3819
    %v4324 = vpack.c.b16 %v3824, %v3820
    %v4325 = vpack.c.b16 %v3825, %v3821
    %v4326 = vpack.c.b16 %v3826, %v3822
    %v4327 = vpack.c.b16 %v3831, %v3827
    %v4328 = vpack.c.b16 %v3832, %v3828
    %v4329 = vpack.c.b16 %v3833, %v3829
    %v4330 = vpack.c.b16 %v3834, %v3830
    %v4331 = vpack.c.b16 %v3839, %v3835
    %v4332 = vpack.c.b16 %v3840, %v3836
    %v4333 = vpack.c.b16 %v3841, %v3837
    %v4334 = vpack.c.b16 %v3842, %v3838
    %v4335 = vpack.c.b16 %v3847, %v3843
    %v4336 = vpack.c.b16 %v3848, %v3844
    %v4337 = vpack.c.b16 %v3849, %v3845
    %v4338 = vpack.c.b16 %v3850, %v3846
    %v4339 = vpack.c.b16 %v3855, %v3851
    %v4340 = vpack.c.b16 %v3856, %v3852
    %v4341 = vpack.c.b16 %v3857, %v3853
    %v4342 = vpack.c.b16 %v3858, %v3854
    %v4343 = vpack.c.b16 %v3863, %v3859
    %v4344 = vpack.c.b16 %v3864, %v3860
    %v4345 = vpack.c.b16 %v3865, %v3861
    %v4346 = vpack.c.b16 %v3866, %v3862
    %v4347 = vpack.c.b16 %v3871, %v3867
    %v4348 = vpack.c.b16 %v3872, %v3868
    %v4349 = vpack.c.b16 %v3873, %v3869
    %v4350 = vpack.c.b16 %v3874, %v3870
    %v4351 = vpack.c.b16 %v3879, %v3875
    %v4352 = vpack.c.b16 %v3880, %v3876
    %v4353 = vpack.c.b16 %v3881, %v3877
    %v4354 = vpack.c.b16 %v3882, %v3878
    %v4355 = vpack.c.b16 %v3887, %v3883
    %v4356 = vpack.c.b16 %v3888, %v3884
    %v4357 = vpack.c.b16 %v3889, %v3885
    %v4358 = vpack.c.b16 %v3890, %v3886
    %v4359 = vpack.c.b16 %v3895, %v3891
    %v4360 = vpack.c.b16 %v3896, %v3892
    %v4361 = vpack.c.b16 %v3897, %v3893
    %v4362 = vpack.c.b16 %v3898, %v3894
    %v4363 = vpack.c.b16 %v3903, %v3899
    %v4364 = vpack.c.b16 %v3904, %v3900
    %v4365 = vpack.c.b16 %v3905, %v3901
    %v4366 = vpack.c.b16 %v3906, %v3902
    %v4367 = vpack.c.b16 %v3911, %v3907
    %v4368 = vpack.c.b16 %v3912, %v3908
    %v4369 = vpack.c.b16 %v3913, %v3909
    %v4370 = vpack.c.b16 %v3914, %v3910
    %v4371 = vpack.c.b16 %v3919, %v3915
    %v4372 = vpack.c.b16 %v3920, %v3916
    %v4373 = vpack.c.b16 %v3921, %v3917
    %v4374 = vpack.c.b16 %v3922, %v3918
    %v4375 = vpack.c.b16 %v3927, %v3923
    %v4376 = vpack.c.b16 %v3928, %v3924
    %v4377 = vpack.c.b16 %v3929, %v3925
    %v4378 = vpack.c.b16 %v3930, %v3926
    %4827 = vmatpush.bf16.msra.mxu0 %v3959
    %4828 = vmatpush.bf16.msra.mxu0 %v3955
    %4829 = vmatpush.bf16.msra.mxu0 %v3951
    %4830 = vmatpush.bf16.msra.mxu0 %v3947
    %4831 = vmatpush.bf16.msra.mxu0 %v3943
    %4832 = vmatpush.bf16.msra.mxu0 %v3939
    %4833 = vmatpush.bf16.msra.mxu0 %v3935
    %4834 = vmatpush.bf16.msra.mxu0 %v3931
    %4835 = vmatmul.bf16.gmra.mxu0 %v2115
    %v4836 = vpop.f32.mrf.mxu0
    %v4837 = vadd.f32 %v2579, %v4836
    %v4838 = vpop.f32.mrf.mxu0
    %4839 = vdwg.mxu0
    %4840 = vmatpush.bf16.msra.mxu0 %v3991
    %4841 = vmatpush.bf16.msra.mxu0 %v3987
    %4842 = vmatpush.bf16.msra.mxu0 %v3983
    %4843 = vmatpush.bf16.msra.mxu0 %v3979
    %4844 = vmatpush.bf16.msra.mxu0 %v3975
    %4845 = vmatpush.bf16.msra.mxu0 %v3971
    %4846 = vmatpush.bf16.msra.mxu0 %v3967
    %4847 = vmatpush.bf16.msra.mxu0 %v3963
    %4848 = vmatmul.bf16.gmra.mxu0 %v2116
    %v4849 = vpop.f32.mrf.mxu0
    %v4850 = vadd.f32 %v4837, %v4849
    %v4851 = vpop.f32.mrf.mxu0
    %4852 = vdwg.mxu0
    %4853 = vmatpush.bf16.msra.mxu0 %v4023
    %4854 = vmatpush.bf16.msra.mxu0 %v4019
    %4855 = vmatpush.bf16.msra.mxu0 %v4015
    %4856 = vmatpush.bf16.msra.mxu0 %v4011
    %4857 = vmatpush.bf16.msra.mxu0 %v4007
    %4858 = vmatpush.bf16.msra.mxu0 %v4003
    %4859 = vmatpush.bf16.msra.mxu0 %v3999
    %4860 = vmatpush.bf16.msra.mxu0 %v3995
    %4861 = vmatmul.bf16.gmra.mxu0 %v2117
    %v4862 = vpop.f32.mrf.mxu0
    %v4863 = vadd.f32 %v4850, %v4862
    %v4864 = vpop.f32.mrf.mxu0
    %4865 = vdwg.mxu0
    %4866 = vmatpush.bf16.msra.mxu0 %v4055
    %4867 = vmatpush.bf16.msra.mxu0 %v4051
    %4868 = vmatpush.bf16.msra.mxu0 %v4047
    %4869 = vmatpush.bf16.msra.mxu0 %v4043
    %4870 = vmatpush.bf16.msra.mxu0 %v4039
    %4871 = vmatpush.bf16.msra.mxu0 %v4035
    %4872 = vmatpush.bf16.msra.mxu0 %v4031
    %4873 = vmatpush.bf16.msra.mxu0 %v4027
    %4874 = vmatmul.bf16.gmra.mxu0 %v2118
    %v4875 = vpop.f32.mrf.mxu0
    %v4876 = vadd.f32 %v4863, %v4875
    %v4877 = vpop.f32.mrf.mxu0
    %4878 = vdwg.mxu0
    %4879 = vmatpush.bf16.msra.mxu0 %v4087
    %4880 = vmatpush.bf16.msra.mxu0 %v4083
    %4881 = vmatpush.bf16.msra.mxu0 %v4079
    %4882 = vmatpush.bf16.msra.mxu0 %v4075
    %4883 = vmatpush.bf16.msra.mxu0 %v4071
    %4884 = vmatpush.bf16.msra.mxu0 %v4067
    %4885 = vmatpush.bf16.msra.mxu0 %v4063
    %4886 = vmatpush.bf16.msra.mxu0 %v4059
    %4887 = vmatmul.bf16.gmra.mxu0 %v2119
    %v4888 = vpop.f32.mrf.mxu0
    %v4889 = vadd.f32 %v4876, %v4888
    %v4890 = vpop.f32.mrf.mxu0
    %4891 = vdwg.mxu0
    %4892 = vmatpush.bf16.msra.mxu0 %v4119
    %4893 = vmatpush.bf16.msra.mxu0 %v4115
    %4894 = vmatpush.bf16.msra.mxu0 %v4111
    %4895 = vmatpush.bf16.msra.mxu0 %v4107
    %4896 = vmatpush.bf16.msra.mxu0 %v4103
    %4897 = vmatpush.bf16.msra.mxu0 %v4099
    %4898 = vmatpush.bf16.msra.mxu0 %v4095
    %4899 = vmatpush.bf16.msra.mxu0 %v4091
    %4900 = vmatmul.bf16.gmra.mxu0 %v2120
    %v4901 = vpop.f32.mrf.mxu0
    %v4902 = vadd.f32 %v4889, %v4901
    %v4903 = vpop.f32.mrf.mxu0
    %4904 = vdwg.mxu0
    %4905 = vmatpush.bf16.msra.mxu0 %v4151
    %4906 = vmatpush.bf16.msra.mxu0 %v4147
    %4907 = vmatpush.bf16.msra.mxu0 %v4143
    %4908 = vmatpush.bf16.msra.mxu0 %v4139
    %4909 = vmatpush.bf16.msra.mxu0 %v4135
    %4910 = vmatpush.bf16.msra.mxu0 %v4131
    %4911 = vmatpush.bf16.msra.mxu0 %v4127
    %4912 = vmatpush.bf16.msra.mxu0 %v4123
    %4913 = vmatmul.bf16.gmra.mxu0 %v2121
    %v4914 = vpop.f32.mrf.mxu0
    %v4915 = vadd.f32 %v4902, %v4914
    %v4916 = vpop.f32.mrf.mxu0
    %4917 = vdwg.mxu0
    %4918 = vmatpush.bf16.msra.mxu0 %v4183
    %4919 = vmatpush.bf16.msra.mxu0 %v4179
    %4920 = vmatpush.bf16.msra.mxu0 %v4175
    %4921 = vmatpush.bf16.msra.mxu0 %v4171
    %4922 = vmatpush.bf16.msra.mxu0 %v4167
    %4923 = vmatpush.bf16.msra.mxu0 %v4163
    %4924 = vmatpush.bf16.msra.mxu0 %v4159
    %4925 = vmatpush.bf16.msra.mxu0 %v4155
    %4926 = vmatmul.bf16.gmra.mxu0 %v2122
    %v4927 = vpop.f32.mrf.mxu0
    %v4928 = vadd.f32 %v4915, %v4927
    %v4929 = vpop.f32.mrf.mxu0
    %4930 = vdwg.mxu0
    %4931 = vmatpush.bf16.msra.mxu0 %v4215
    %4932 = vmatpush.bf16.msra.mxu0 %v4211
    %4933 = vmatpush.bf16.msra.mxu0 %v4207
    %4934 = vmatpush.bf16.msra.mxu0 %v4203
    %4935 = vmatpush.bf16.msra.mxu0 %v4199
    %4936 = vmatpush.bf16.msra.mxu0 %v4195
    %4937 = vmatpush.bf16.msra.mxu0 %v4191
    %4938 = vmatpush.bf16.msra.mxu0 %v4187
    %4939 = vmatmul.bf16.gmra.mxu0 %v2123
    %v4940 = vpop.f32.mrf.mxu0
    %v4941 = vadd.f32 %v4928, %v4940
    %v4942 = vpop.f32.mrf.mxu0
    %4943 = vdwg.mxu0
    %4944 = vmatpush.bf16.msra.mxu0 %v4247
    %4945 = vmatpush.bf16.msra.mxu0 %v4243
    %4946 = vmatpush.bf16.msra.mxu0 %v4239
    %4947 = vmatpush.bf16.msra.mxu0 %v4235
    %4948 = vmatpush.bf16.msra.mxu0 %v4231
    %4949 = vmatpush.bf16.msra.mxu0 %v4227
    %4950 = vmatpush.bf16.msra.mxu0 %v4223
    %4951 = vmatpush.bf16.msra.mxu0 %v4219
    %4952 = vmatmul.bf16.gmra.mxu0 %v2124
    %v4953 = vpop.f32.mrf.mxu0
    %v4954 = vadd.f32 %v4941, %v4953
    %v4955 = vpop.f32.mrf.mxu0
    %4956 = vdwg.mxu0
    %4957 = vmatpush.bf16.msra.mxu0 %v4279
    %4958 = vmatpush.bf16.msra.mxu0 %v4275
    %4959 = vmatpush.bf16.msra.mxu0 %v4271
    %4960 = vmatpush.bf16.msra.mxu0 %v4267
    %4961 = vmatpush.bf16.msra.mxu0 %v4263
    %4962 = vmatpush.bf16.msra.mxu0 %v4259
    %4963 = vmatpush.bf16.msra.mxu0 %v4255
    %4964 = vmatpush.bf16.msra.mxu0 %v4251
    %4965 = vmatmul.bf16.gmra.mxu0 %v2125
    %v4966 = vpop.f32.mrf.mxu0
    %v4967 = vadd.f32 %v4954, %v4966
    %v4968 = vpop.f32.mrf.mxu0
    %4969 = vdwg.mxu0
    %4970 = vmatpush.bf16.msra.mxu0 %v4311
    %4971 = vmatpush.bf16.msra.mxu0 %v4307
    %4972 = vmatpush.bf16.msra.mxu0 %v4303
    %4973 = vmatpush.bf16.msra.mxu0 %v4299
    %4974 = vmatpush.bf16.msra.mxu0 %v4295
    %4975 = vmatpush.bf16.msra.mxu0 %v4291
    %4976 = vmatpush.bf16.msra.mxu0 %v4287
    %4977 = vmatpush.bf16.msra.mxu0 %v4283
    %4978 = vmatmul.bf16.gmra.mxu0 %v2126
    %v4979 = vpop.f32.mrf.mxu0
    %v4980 = vadd.f32 %v4967, %v4979
    %v4981 = vpop.f32.mrf.mxu0
    %4982 = vdwg.mxu0
    %4983 = vmatpush.bf16.msra.mxu0 %v4343
    %4984 = vmatpush.bf16.msra.mxu0 %v4339
    %4985 = vmatpush.bf16.msra.mxu0 %v4335
    %4986 = vmatpush.bf16.msra.mxu0 %v4331
    %4987 = vmatpush.bf16.msra.mxu0 %v4327
    %4988 = vmatpush.bf16.msra.mxu0 %v4323
    %4989 = vmatpush.bf16.msra.mxu0 %v4319
    %4990 = vmatpush.bf16.msra.mxu0 %v4315
    %4991 = vmatmul.bf16.gmra.mxu0 %v2127
    %v4992 = vpop.f32.mrf.mxu0
    %v4993 = vadd.f32 %v4980, %v4992
    %v4994 = vpop.f32.mrf.mxu0
    %4995 = vdwg.mxu0
    %4996 = vmatpush.bf16.msra.mxu0 %v4375
    %4997 = vmatpush.bf16.msra.mxu0 %v4371
    %4998 = vmatpush.bf16.msra.mxu0 %v4367
    %4999 = vmatpush.bf16.msra.mxu0 %v4363
    %5000 = vmatpush.bf16.msra.mxu0 %v4359
    %5001 = vmatpush.bf16.msra.mxu0 %v4355
    %5002 = vmatpush.bf16.msra.mxu0 %v4351
    %5003 = vmatpush.bf16.msra.mxu0 %v4347
    %5004 = vmatmul.bf16.gmra.mxu0 %v2128
    %v5005 = vpop.f32.mrf.mxu0
    %v5006 = vadd.f32 %v4993, %v5005
    %v5007 = vpop.f32.mrf.mxu0
    %5008 = vdwg.mxu0
    %5009 = vmatpush.bf16.msra.mxu0 %v3960
    %5010 = vmatpush.bf16.msra.mxu0 %v3956
    %5011 = vmatpush.bf16.msra.mxu0 %v3952
    %5012 = vmatpush.bf16.msra.mxu0 %v3948
    %5013 = vmatpush.bf16.msra.mxu0 %v3944
    %5014 = vmatpush.bf16.msra.mxu0 %v3940
    %5015 = vmatpush.bf16.msra.mxu0 %v3936
    %5016 = vmatpush.bf16.msra.mxu0 %v3932
    %5017 = vmatmul.bf16.gmra.mxu0 %v2115
    %v5018 = vpop.f32.mrf.mxu0
    %v5019 = vadd.f32 %v2580, %v5018
    %v5020 = vpop.f32.mrf.mxu0
    %5021 = vdwg.mxu0
    %5022 = vmatpush.bf16.msra.mxu0 %v3992
    %5023 = vmatpush.bf16.msra.mxu0 %v3988
    %5024 = vmatpush.bf16.msra.mxu0 %v3984
    %5025 = vmatpush.bf16.msra.mxu0 %v3980
    %5026 = vmatpush.bf16.msra.mxu0 %v3976
    %5027 = vmatpush.bf16.msra.mxu0 %v3972
    %5028 = vmatpush.bf16.msra.mxu0 %v3968
    %5029 = vmatpush.bf16.msra.mxu0 %v3964
    %5030 = vmatmul.bf16.gmra.mxu0 %v2116
    %v5031 = vpop.f32.mrf.mxu0
    %v5032 = vadd.f32 %v5019, %v5031
    %v5033 = vpop.f32.mrf.mxu0
    %5034 = vdwg.mxu0
    %5035 = vmatpush.bf16.msra.mxu0 %v4024
    %5036 = vmatpush.bf16.msra.mxu0 %v4020
    %5037 = vmatpush.bf16.msra.mxu0 %v4016
    %5038 = vmatpush.bf16.msra.mxu0 %v4012
    %5039 = vmatpush.bf16.msra.mxu0 %v4008
    %5040 = vmatpush.bf16.msra.mxu0 %v4004
    %5041 = vmatpush.bf16.msra.mxu0 %v4000
    %5042 = vmatpush.bf16.msra.mxu0 %v3996
    %5043 = vmatmul.bf16.gmra.mxu0 %v2117
    %v5044 = vpop.f32.mrf.mxu0
    %v5045 = vadd.f32 %v5032, %v5044
    %v5046 = vpop.f32.mrf.mxu0
    %5047 = vdwg.mxu0
    %5048 = vmatpush.bf16.msra.mxu0 %v4056
    %5049 = vmatpush.bf16.msra.mxu0 %v4052
    %5050 = vmatpush.bf16.msra.mxu0 %v4048
    %5051 = vmatpush.bf16.msra.mxu0 %v4044
    %5052 = vmatpush.bf16.msra.mxu0 %v4040
    %5053 = vmatpush.bf16.msra.mxu0 %v4036
    %5054 = vmatpush.bf16.msra.mxu0 %v4032
    %5055 = vmatpush.bf16.msra.mxu0 %v4028
    %5056 = vmatmul.bf16.gmra.mxu0 %v2118
    %v5057 = vpop.f32.mrf.mxu0
    %v5058 = vadd.f32 %v5045, %v5057
    %v5059 = vpop.f32.mrf.mxu0
    %5060 = vdwg.mxu0
    %5061 = vmatpush.bf16.msra.mxu0 %v4088
    %5062 = vmatpush.bf16.msra.mxu0 %v4084
    %5063 = vmatpush.bf16.msra.mxu0 %v4080
    %5064 = vmatpush.bf16.msra.mxu0 %v4076
    %5065 = vmatpush.bf16.msra.mxu0 %v4072
    %5066 = vmatpush.bf16.msra.mxu0 %v4068
    %5067 = vmatpush.bf16.msra.mxu0 %v4064
    %5068 = vmatpush.bf16.msra.mxu0 %v4060
    %5069 = vmatmul.bf16.gmra.mxu0 %v2119
    %v5070 = vpop.f32.mrf.mxu0
    %v5071 = vadd.f32 %v5058, %v5070
    %v5072 = vpop.f32.mrf.mxu0
    %5073 = vdwg.mxu0
    %5074 = vmatpush.bf16.msra.mxu0 %v4120
    %5075 = vmatpush.bf16.msra.mxu0 %v4116
    %5076 = vmatpush.bf16.msra.mxu0 %v4112
    %5077 = vmatpush.bf16.msra.mxu0 %v4108
    %5078 = vmatpush.bf16.msra.mxu0 %v4104
    %5079 = vmatpush.bf16.msra.mxu0 %v4100
    %5080 = vmatpush.bf16.msra.mxu0 %v4096
    %5081 = vmatpush.bf16.msra.mxu0 %v4092
    %5082 = vmatmul.bf16.gmra.mxu0 %v2120
    %v5083 = vpop.f32.mrf.mxu0
    %v5084 = vadd.f32 %v5071, %v5083
    %v5085 = vpop.f32.mrf.mxu0
    %5086 = vdwg.mxu0
    %5087 = vmatpush.bf16.msra.mxu0 %v4152
    %5088 = vmatpush.bf16.msra.mxu0 %v4148
    %5089 = vmatpush.bf16.msra.mxu0 %v4144
    %5090 = vmatpush.bf16.msra.mxu0 %v4140
    %5091 = vmatpush.bf16.msra.mxu0 %v4136
    %5092 = vmatpush.bf16.msra.mxu0 %v4132
    %5093 = vmatpush.bf16.msra.mxu0 %v4128
    %5094 = vmatpush.bf16.msra.mxu0 %v4124
    %5095 = vmatmul.bf16.gmra.mxu0 %v2121
    %v5096 = vpop.f32.mrf.mxu0
    %v5097 = vadd.f32 %v5084, %v5096
    %v5098 = vpop.f32.mrf.mxu0
    %5099 = vdwg.mxu0
    %5100 = vmatpush.bf16.msra.mxu0 %v4184
    %5101 = vmatpush.bf16.msra.mxu0 %v4180
    %5102 = vmatpush.bf16.msra.mxu0 %v4176
    %5103 = vmatpush.bf16.msra.mxu0 %v4172
    %5104 = vmatpush.bf16.msra.mxu0 %v4168
    %5105 = vmatpush.bf16.msra.mxu0 %v4164
    %5106 = vmatpush.bf16.msra.mxu0 %v4160
    %5107 = vmatpush.bf16.msra.mxu0 %v4156
    %5108 = vmatmul.bf16.gmra.mxu0 %v2122
    %v5109 = vpop.f32.mrf.mxu0
    %v5110 = vadd.f32 %v5097, %v5109
    %v5111 = vpop.f32.mrf.mxu0
    %5112 = vdwg.mxu0
    %5113 = vmatpush.bf16.msra.mxu0 %v4216
    %5114 = vmatpush.bf16.msra.mxu0 %v4212
    %5115 = vmatpush.bf16.msra.mxu0 %v4208
    %5116 = vmatpush.bf16.msra.mxu0 %v4204
    %5117 = vmatpush.bf16.msra.mxu0 %v4200
    %5118 = vmatpush.bf16.msra.mxu0 %v4196
    %5119 = vmatpush.bf16.msra.mxu0 %v4192
    %5120 = vmatpush.bf16.msra.mxu0 %v4188
    %5121 = vmatmul.bf16.gmra.mxu0 %v2123
    %v5122 = vpop.f32.mrf.mxu0
    %v5123 = vadd.f32 %v5110, %v5122
    %v5124 = vpop.f32.mrf.mxu0
    %5125 = vdwg.mxu0
    %5126 = vmatpush.bf16.msra.mxu0 %v4248
    %5127 = vmatpush.bf16.msra.mxu0 %v4244
    %5128 = vmatpush.bf16.msra.mxu0 %v4240
    %5129 = vmatpush.bf16.msra.mxu0 %v4236
    %5130 = vmatpush.bf16.msra.mxu0 %v4232
    %5131 = vmatpush.bf16.msra.mxu0 %v4228
    %5132 = vmatpush.bf16.msra.mxu0 %v4224
    %5133 = vmatpush.bf16.msra.mxu0 %v4220
    %5134 = vmatmul.bf16.gmra.mxu0 %v2124
    %v5135 = vpop.f32.mrf.mxu0
    %v5136 = vadd.f32 %v5123, %v5135
    %v5137 = vpop.f32.mrf.mxu0
    %5138 = vdwg.mxu0
    %5139 = vmatpush.bf16.msra.mxu0 %v4280
    %5140 = vmatpush.bf16.msra.mxu0 %v4276
    %5141 = vmatpush.bf16.msra.mxu0 %v4272
    %5142 = vmatpush.bf16.msra.mxu0 %v4268
    %5143 = vmatpush.bf16.msra.mxu0 %v4264
    %5144 = vmatpush.bf16.msra.mxu0 %v4260
    %5145 = vmatpush.bf16.msra.mxu0 %v4256
    %5146 = vmatpush.bf16.msra.mxu0 %v4252
    %5147 = vmatmul.bf16.gmra.mxu0 %v2125
    %v5148 = vpop.f32.mrf.mxu0
    %v5149 = vadd.f32 %v5136, %v5148
    %v5150 = vpop.f32.mrf.mxu0
    %5151 = vdwg.mxu0
    %5152 = vmatpush.bf16.msra.mxu0 %v4312
    %5153 = vmatpush.bf16.msra.mxu0 %v4308
    %5154 = vmatpush.bf16.msra.mxu0 %v4304
    %5155 = vmatpush.bf16.msra.mxu0 %v4300
    %5156 = vmatpush.bf16.msra.mxu0 %v4296
    %5157 = vmatpush.bf16.msra.mxu0 %v4292
    %5158 = vmatpush.bf16.msra.mxu0 %v4288
    %5159 = vmatpush.bf16.msra.mxu0 %v4284
    %5160 = vmatmul.bf16.gmra.mxu0 %v2126
    %v5161 = vpop.f32.mrf.mxu0
    %v5162 = vadd.f32 %v5149, %v5161
    %v5163 = vpop.f32.mrf.mxu0
    %5164 = vdwg.mxu0
    %5165 = vmatpush.bf16.msra.mxu0 %v4344
    %5166 = vmatpush.bf16.msra.mxu0 %v4340
    %5167 = vmatpush.bf16.msra.mxu0 %v4336
    %5168 = vmatpush.bf16.msra.mxu0 %v4332
    %5169 = vmatpush.bf16.msra.mxu0 %v4328
    %5170 = vmatpush.bf16.msra.mxu0 %v4324
    %5171 = vmatpush.bf16.msra.mxu0 %v4320
    %5172 = vmatpush.bf16.msra.mxu0 %v4316
    %5173 = vmatmul.bf16.gmra.mxu0 %v2127
    %v5174 = vpop.f32.mrf.mxu0
    %v5175 = vadd.f32 %v5162, %v5174
    %v5176 = vpop.f32.mrf.mxu0
    %5177 = vdwg.mxu0
    %5178 = vmatpush.bf16.msra.mxu0 %v4376
    %5179 = vmatpush.bf16.msra.mxu0 %v4372
    %5180 = vmatpush.bf16.msra.mxu0 %v4368
    %5181 = vmatpush.bf16.msra.mxu0 %v4364
    %5182 = vmatpush.bf16.msra.mxu0 %v4360
    %5183 = vmatpush.bf16.msra.mxu0 %v4356
    %5184 = vmatpush.bf16.msra.mxu0 %v4352
    %5185 = vmatpush.bf16.msra.mxu0 %v4348
    %5186 = vmatmul.bf16.gmra.mxu0 %v2128
    %v5187 = vpop.f32.mrf.mxu0
    %v5188 = vadd.f32 %v5175, %v5187
    %v5189 = vpop.f32.mrf.mxu0
    %5190 = vdwg.mxu0
    %5191 = vmatpush.bf16.msra.mxu0 %v3961
    %5192 = vmatpush.bf16.msra.mxu0 %v3957
    %5193 = vmatpush.bf16.msra.mxu0 %v3953
    %5194 = vmatpush.bf16.msra.mxu0 %v3949
    %5195 = vmatpush.bf16.msra.mxu0 %v3945
    %5196 = vmatpush.bf16.msra.mxu0 %v3941
    %5197 = vmatpush.bf16.msra.mxu0 %v3937
    %5198 = vmatpush.bf16.msra.mxu0 %v3933
    %5199 = vmatmul.bf16.gmra.mxu0 %v2115
    %v5200 = vpop.f32.mrf.mxu0
    %v5201 = vadd.f32 %v2581, %v5200
    %v5202 = vpop.f32.mrf.mxu0
    %5203 = vdwg.mxu0
    %5204 = vmatpush.bf16.msra.mxu0 %v3993
    %5205 = vmatpush.bf16.msra.mxu0 %v3989
    %5206 = vmatpush.bf16.msra.mxu0 %v3985
    %5207 = vmatpush.bf16.msra.mxu0 %v3981
    %5208 = vmatpush.bf16.msra.mxu0 %v3977
    %5209 = vmatpush.bf16.msra.mxu0 %v3973
    %5210 = vmatpush.bf16.msra.mxu0 %v3969
    %5211 = vmatpush.bf16.msra.mxu0 %v3965
    %5212 = vmatmul.bf16.gmra.mxu0 %v2116
    %v5213 = vpop.f32.mrf.mxu0
    %v5214 = vadd.f32 %v5201, %v5213
    %v5215 = vpop.f32.mrf.mxu0
    %5216 = vdwg.mxu0
    %5217 = vmatpush.bf16.msra.mxu0 %v4025
    %5218 = vmatpush.bf16.msra.mxu0 %v4021
    %5219 = vmatpush.bf16.msra.mxu0 %v4017
    %5220 = vmatpush.bf16.msra.mxu0 %v4013
    %5221 = vmatpush.bf16.msra.mxu0 %v4009
    %5222 = vmatpush.bf16.msra.mxu0 %v4005
    %5223 = vmatpush.bf16.msra.mxu0 %v4001
    %5224 = vmatpush.bf16.msra.mxu0 %v3997
    %5225 = vmatmul.bf16.gmra.mxu0 %v2117
    %v5226 = vpop.f32.mrf.mxu0
    %v5227 = vadd.f32 %v5214, %v5226
    %v5228 = vpop.f32.mrf.mxu0
    %5229 = vdwg.mxu0
    %5230 = vmatpush.bf16.msra.mxu0 %v4057
    %5231 = vmatpush.bf16.msra.mxu0 %v4053
    %5232 = vmatpush.bf16.msra.mxu0 %v4049
    %5233 = vmatpush.bf16.msra.mxu0 %v4045
    %5234 = vmatpush.bf16.msra.mxu0 %v4041
    %5235 = vmatpush.bf16.msra.mxu0 %v4037
    %5236 = vmatpush.bf16.msra.mxu0 %v4033
    %5237 = vmatpush.bf16.msra.mxu0 %v4029
    %5238 = vmatmul.bf16.gmra.mxu0 %v2118
    %v5239 = vpop.f32.mrf.mxu0
    %v5240 = vadd.f32 %v5227, %v5239
    %v5241 = vpop.f32.mrf.mxu0
    %5242 = vdwg.mxu0
    %5243 = vmatpush.bf16.msra.mxu0 %v4089
    %5244 = vmatpush.bf16.msra.mxu0 %v4085
    %5245 = vmatpush.bf16.msra.mxu0 %v4081
    %5246 = vmatpush.bf16.msra.mxu0 %v4077
    %5247 = vmatpush.bf16.msra.mxu0 %v4073
    %5248 = vmatpush.bf16.msra.mxu0 %v4069
    %5249 = vmatpush.bf16.msra.mxu0 %v4065
    %5250 = vmatpush.bf16.msra.mxu0 %v4061
    %5251 = vmatmul.bf16.gmra.mxu0 %v2119
    %v5252 = vpop.f32.mrf.mxu0
    %v5253 = vadd.f32 %v5240, %v5252
    %v5254 = vpop.f32.mrf.mxu0
    %5255 = vdwg.mxu0
    %5256 = vmatpush.bf16.msra.mxu0 %v4121
    %5257 = vmatpush.bf16.msra.mxu0 %v4117
    %5258 = vmatpush.bf16.msra.mxu0 %v4113
    %5259 = vmatpush.bf16.msra.mxu0 %v4109
    %5260 = vmatpush.bf16.msra.mxu0 %v4105
    %5261 = vmatpush.bf16.msra.mxu0 %v4101
    %5262 = vmatpush.bf16.msra.mxu0 %v4097
    %5263 = vmatpush.bf16.msra.mxu0 %v4093
    %5264 = vmatmul.bf16.gmra.mxu0 %v2120
    %v5265 = vpop.f32.mrf.mxu0
    %v5266 = vadd.f32 %v5253, %v5265
    %v5267 = vpop.f32.mrf.mxu0
    %5268 = vdwg.mxu0
    %5269 = vmatpush.bf16.msra.mxu0 %v4153
    %5270 = vmatpush.bf16.msra.mxu0 %v4149
    %5271 = vmatpush.bf16.msra.mxu0 %v4145
    %5272 = vmatpush.bf16.msra.mxu0 %v4141
    %5273 = vmatpush.bf16.msra.mxu0 %v4137
    %5274 = vmatpush.bf16.msra.mxu0 %v4133
    %5275 = vmatpush.bf16.msra.mxu0 %v4129
    %5276 = vmatpush.bf16.msra.mxu0 %v4125
    %5277 = vmatmul.bf16.gmra.mxu0 %v2121
    %v5278 = vpop.f32.mrf.mxu0
    %v5279 = vadd.f32 %v5266, %v5278
    %v5280 = vpop.f32.mrf.mxu0
    %5281 = vdwg.mxu0
    %5282 = vmatpush.bf16.msra.mxu0 %v4185
    %5283 = vmatpush.bf16.msra.mxu0 %v4181
    %5284 = vmatpush.bf16.msra.mxu0 %v4177
    %5285 = vmatpush.bf16.msra.mxu0 %v4173
    %5286 = vmatpush.bf16.msra.mxu0 %v4169
    %5287 = vmatpush.bf16.msra.mxu0 %v4165
    %5288 = vmatpush.bf16.msra.mxu0 %v4161
    %5289 = vmatpush.bf16.msra.mxu0 %v4157
    %5290 = vmatmul.bf16.gmra.mxu0 %v2122
    %v5291 = vpop.f32.mrf.mxu0
    %v5292 = vadd.f32 %v5279, %v5291
    %v5293 = vpop.f32.mrf.mxu0
    %5294 = vdwg.mxu0
    %5295 = vmatpush.bf16.msra.mxu0 %v4217
    %5296 = vmatpush.bf16.msra.mxu0 %v4213
    %5297 = vmatpush.bf16.msra.mxu0 %v4209
    %5298 = vmatpush.bf16.msra.mxu0 %v4205
    %5299 = vmatpush.bf16.msra.mxu0 %v4201
    %5300 = vmatpush.bf16.msra.mxu0 %v4197
    %5301 = vmatpush.bf16.msra.mxu0 %v4193
    %5302 = vmatpush.bf16.msra.mxu0 %v4189
    %5303 = vmatmul.bf16.gmra.mxu0 %v2123
    %v5304 = vpop.f32.mrf.mxu0
    %v5305 = vadd.f32 %v5292, %v5304
    %v5306 = vpop.f32.mrf.mxu0
    %5307 = vdwg.mxu0
    %5308 = vmatpush.bf16.msra.mxu0 %v4249
    %5309 = vmatpush.bf16.msra.mxu0 %v4245
    %5310 = vmatpush.bf16.msra.mxu0 %v4241
    %5311 = vmatpush.bf16.msra.mxu0 %v4237
    %5312 = vmatpush.bf16.msra.mxu0 %v4233
    %5313 = vmatpush.bf16.msra.mxu0 %v4229
    %5314 = vmatpush.bf16.msra.mxu0 %v4225
    %5315 = vmatpush.bf16.msra.mxu0 %v4221
    %5316 = vmatmul.bf16.gmra.mxu0 %v2124
    %v5317 = vpop.f32.mrf.mxu0
    %v5318 = vadd.f32 %v5305, %v5317
    %v5319 = vpop.f32.mrf.mxu0
    %5320 = vdwg.mxu0
    %5321 = vmatpush.bf16.msra.mxu0 %v4281
    %5322 = vmatpush.bf16.msra.mxu0 %v4277
    %5323 = vmatpush.bf16.msra.mxu0 %v4273
    %5324 = vmatpush.bf16.msra.mxu0 %v4269
    %5325 = vmatpush.bf16.msra.mxu0 %v4265
    %5326 = vmatpush.bf16.msra.mxu0 %v4261
    %5327 = vmatpush.bf16.msra.mxu0 %v4257
    %5328 = vmatpush.bf16.msra.mxu0 %v4253
    %5329 = vmatmul.bf16.gmra.mxu0 %v2125
    %v5330 = vpop.f32.mrf.mxu0
    %v5331 = vadd.f32 %v5318, %v5330
    %v5332 = vpop.f32.mrf.mxu0
    %5333 = vdwg.mxu0
    %5334 = vmatpush.bf16.msra.mxu0 %v4313
    %5335 = vmatpush.bf16.msra.mxu0 %v4309
    %5336 = vmatpush.bf16.msra.mxu0 %v4305
    %5337 = vmatpush.bf16.msra.mxu0 %v4301
    %5338 = vmatpush.bf16.msra.mxu0 %v4297
    %5339 = vmatpush.bf16.msra.mxu0 %v4293
    %5340 = vmatpush.bf16.msra.mxu0 %v4289
    %5341 = vmatpush.bf16.msra.mxu0 %v4285
    %5342 = vmatmul.bf16.gmra.mxu0 %v2126
    %v5343 = vpop.f32.mrf.mxu0
    %v5344 = vadd.f32 %v5331, %v5343
    %v5345 = vpop.f32.mrf.mxu0
    %5346 = vdwg.mxu0
    %5347 = vmatpush.bf16.msra.mxu0 %v4345
    %5348 = vmatpush.bf16.msra.mxu0 %v4341
    %5349 = vmatpush.bf16.msra.mxu0 %v4337
    %5350 = vmatpush.bf16.msra.mxu0 %v4333
    %5351 = vmatpush.bf16.msra.mxu0 %v4329
    %5352 = vmatpush.bf16.msra.mxu0 %v4325
    %5353 = vmatpush.bf16.msra.mxu0 %v4321
    %5354 = vmatpush.bf16.msra.mxu0 %v4317
    %5355 = vmatmul.bf16.gmra.mxu0 %v2127
    %v5356 = vpop.f32.mrf.mxu0
    %v5357 = vadd.f32 %v5344, %v5356
    %v5358 = vpop.f32.mrf.mxu0
    %5359 = vdwg.mxu0
    %5360 = vmatpush.bf16.msra.mxu0 %v4377
    %5361 = vmatpush.bf16.msra.mxu0 %v4373
    %5362 = vmatpush.bf16.msra.mxu0 %v4369
    %5363 = vmatpush.bf16.msra.mxu0 %v4365
    %5364 = vmatpush.bf16.msra.mxu0 %v4361
    %5365 = vmatpush.bf16.msra.mxu0 %v4357
    %5366 = vmatpush.bf16.msra.mxu0 %v4353
    %5367 = vmatpush.bf16.msra.mxu0 %v4349
    %5368 = vmatmul.bf16.gmra.mxu0 %v2128
    %v5369 = vpop.f32.mrf.mxu0
    %v5370 = vadd.f32 %v5357, %v5369
    %v5371 = vpop.f32.mrf.mxu0
    %5372 = vdwg.mxu0
    %5373 = vmatpush.bf16.msra.mxu0 %v3962
    %5374 = vmatpush.bf16.msra.mxu0 %v3958
    %5375 = vmatpush.bf16.msra.mxu0 %v3954
    %5376 = vmatpush.bf16.msra.mxu0 %v3950
    %5377 = vmatpush.bf16.msra.mxu0 %v3946
    %5378 = vmatpush.bf16.msra.mxu0 %v3942
    %5379 = vmatpush.bf16.msra.mxu0 %v3938
    %5380 = vmatpush.bf16.msra.mxu0 %v3934
    %5381 = vmatmul.bf16.gmra.mxu0 %v2115
    %v5382 = vpop.f32.mrf.mxu0
    %v5383 = vadd.f32 %v2582, %v5382
    %v5384 = vpop.f32.mrf.mxu0
    %5385 = vdwg.mxu0
    %5386 = vmatpush.bf16.msra.mxu0 %v3994
    %5387 = vmatpush.bf16.msra.mxu0 %v3990
    %5388 = vmatpush.bf16.msra.mxu0 %v3986
    %5389 = vmatpush.bf16.msra.mxu0 %v3982
    %5390 = vmatpush.bf16.msra.mxu0 %v3978
    %5391 = vmatpush.bf16.msra.mxu0 %v3974
    %5392 = vmatpush.bf16.msra.mxu0 %v3970
    %5393 = vmatpush.bf16.msra.mxu0 %v3966
    %5394 = vmatmul.bf16.gmra.mxu0 %v2116
    %v5395 = vpop.f32.mrf.mxu0
    %v5396 = vadd.f32 %v5383, %v5395
    %v5397 = vpop.f32.mrf.mxu0
    %5398 = vdwg.mxu0
    %5399 = vmatpush.bf16.msra.mxu0 %v4026
    %5400 = vmatpush.bf16.msra.mxu0 %v4022
    %5401 = vmatpush.bf16.msra.mxu0 %v4018
    %5402 = vmatpush.bf16.msra.mxu0 %v4014
    %5403 = vmatpush.bf16.msra.mxu0 %v4010
    %5404 = vmatpush.bf16.msra.mxu0 %v4006
    %5405 = vmatpush.bf16.msra.mxu0 %v4002
    %5406 = vmatpush.bf16.msra.mxu0 %v3998
    %5407 = vmatmul.bf16.gmra.mxu0 %v2117
    %v5408 = vpop.f32.mrf.mxu0
    %v5409 = vadd.f32 %v5396, %v5408
    %v5410 = vpop.f32.mrf.mxu0
    %5411 = vdwg.mxu0
    %5412 = vmatpush.bf16.msra.mxu0 %v4058
    %5413 = vmatpush.bf16.msra.mxu0 %v4054
    %5414 = vmatpush.bf16.msra.mxu0 %v4050
    %5415 = vmatpush.bf16.msra.mxu0 %v4046
    %5416 = vmatpush.bf16.msra.mxu0 %v4042
    %5417 = vmatpush.bf16.msra.mxu0 %v4038
    %5418 = vmatpush.bf16.msra.mxu0 %v4034
    %5419 = vmatpush.bf16.msra.mxu0 %v4030
    %5420 = vmatmul.bf16.gmra.mxu0 %v2118
    %v5421 = vpop.f32.mrf.mxu0
    %v5422 = vadd.f32 %v5409, %v5421
    %v5423 = vpop.f32.mrf.mxu0
    %5424 = vdwg.mxu0
    %5425 = vmatpush.bf16.msra.mxu0 %v4090
    %5426 = vmatpush.bf16.msra.mxu0 %v4086
    %5427 = vmatpush.bf16.msra.mxu0 %v4082
    %5428 = vmatpush.bf16.msra.mxu0 %v4078
    %5429 = vmatpush.bf16.msra.mxu0 %v4074
    %5430 = vmatpush.bf16.msra.mxu0 %v4070
    %5431 = vmatpush.bf16.msra.mxu0 %v4066
    %5432 = vmatpush.bf16.msra.mxu0 %v4062
    %5433 = vmatmul.bf16.gmra.mxu0 %v2119
    %v5434 = vpop.f32.mrf.mxu0
    %v5435 = vadd.f32 %v5422, %v5434
    %v5436 = vpop.f32.mrf.mxu0
    %5437 = vdwg.mxu0
    %5438 = vmatpush.bf16.msra.mxu0 %v4122
    %5439 = vmatpush.bf16.msra.mxu0 %v4118
    %5440 = vmatpush.bf16.msra.mxu0 %v4114
    %5441 = vmatpush.bf16.msra.mxu0 %v4110
    %5442 = vmatpush.bf16.msra.mxu0 %v4106
    %5443 = vmatpush.bf16.msra.mxu0 %v4102
    %5444 = vmatpush.bf16.msra.mxu0 %v4098
    %5445 = vmatpush.bf16.msra.mxu0 %v4094
    %5446 = vmatmul.bf16.gmra.mxu0 %v2120
    %v5447 = vpop.f32.mrf.mxu0
    %v5448 = vadd.f32 %v5435, %v5447
    %v5449 = vpop.f32.mrf.mxu0
    %5450 = vdwg.mxu0
    %5451 = vmatpush.bf16.msra.mxu0 %v4154
    %5452 = vmatpush.bf16.msra.mxu0 %v4150
    %5453 = vmatpush.bf16.msra.mxu0 %v4146
    %5454 = vmatpush.bf16.msra.mxu0 %v4142
    %5455 = vmatpush.bf16.msra.mxu0 %v4138
    %5456 = vmatpush.bf16.msra.mxu0 %v4134
    %5457 = vmatpush.bf16.msra.mxu0 %v4130
    %5458 = vmatpush.bf16.msra.mxu0 %v4126
    %5459 = vmatmul.bf16.gmra.mxu0 %v2121
    %v5460 = vpop.f32.mrf.mxu0
    %v5461 = vadd.f32 %v5448, %v5460
    %v5462 = vpop.f32.mrf.mxu0
    %5463 = vdwg.mxu0
    %5464 = vmatpush.bf16.msra.mxu0 %v4186
    %5465 = vmatpush.bf16.msra.mxu0 %v4182
    %5466 = vmatpush.bf16.msra.mxu0 %v4178
    %5467 = vmatpush.bf16.msra.mxu0 %v4174
    %5468 = vmatpush.bf16.msra.mxu0 %v4170
    %5469 = vmatpush.bf16.msra.mxu0 %v4166
    %5470 = vmatpush.bf16.msra.mxu0 %v4162
    %5471 = vmatpush.bf16.msra.mxu0 %v4158
    %5472 = vmatmul.bf16.gmra.mxu0 %v2122
    %v5473 = vpop.f32.mrf.mxu0
    %v5474 = vadd.f32 %v5461, %v5473
    %v5475 = vpop.f32.mrf.mxu0
    %5476 = vdwg.mxu0
    %5477 = vmatpush.bf16.msra.mxu0 %v4218
    %5478 = vmatpush.bf16.msra.mxu0 %v4214
    %5479 = vmatpush.bf16.msra.mxu0 %v4210
    %5480 = vmatpush.bf16.msra.mxu0 %v4206
    %5481 = vmatpush.bf16.msra.mxu0 %v4202
    %5482 = vmatpush.bf16.msra.mxu0 %v4198
    %5483 = vmatpush.bf16.msra.mxu0 %v4194
    %5484 = vmatpush.bf16.msra.mxu0 %v4190
    %5485 = vmatmul.bf16.gmra.mxu0 %v2123
    %v5486 = vpop.f32.mrf.mxu0
    %v5487 = vadd.f32 %v5474, %v5486
    %v5488 = vpop.f32.mrf.mxu0
    %5489 = vdwg.mxu0
    %5490 = vmatpush.bf16.msra.mxu0 %v4250
    %5491 = vmatpush.bf16.msra.mxu0 %v4246
    %5492 = vmatpush.bf16.msra.mxu0 %v4242
    %5493 = vmatpush.bf16.msra.mxu0 %v4238
    %5494 = vmatpush.bf16.msra.mxu0 %v4234
    %5495 = vmatpush.bf16.msra.mxu0 %v4230
    %5496 = vmatpush.bf16.msra.mxu0 %v4226
    %5497 = vmatpush.bf16.msra.mxu0 %v4222
    %5498 = vmatmul.bf16.gmra.mxu0 %v2124
    %v5499 = vpop.f32.mrf.mxu0
    %v5500 = vadd.f32 %v5487, %v5499
    %v5501 = vpop.f32.mrf.mxu0
    %5502 = vdwg.mxu0
    %5503 = vmatpush.bf16.msra.mxu0 %v4282
    %5504 = vmatpush.bf16.msra.mxu0 %v4278
    %5505 = vmatpush.bf16.msra.mxu0 %v4274
    %5506 = vmatpush.bf16.msra.mxu0 %v4270
    %5507 = vmatpush.bf16.msra.mxu0 %v4266
    %5508 = vmatpush.bf16.msra.mxu0 %v4262
    %5509 = vmatpush.bf16.msra.mxu0 %v4258
    %5510 = vmatpush.bf16.msra.mxu0 %v4254
    %5511 = vmatmul.bf16.gmra.mxu0 %v2125
    %v5512 = vpop.f32.mrf.mxu0
    %v5513 = vadd.f32 %v5500, %v5512
    %v5514 = vpop.f32.mrf.mxu0
    %5515 = vdwg.mxu0
    %5516 = vmatpush.bf16.msra.mxu0 %v4314
    %5517 = vmatpush.bf16.msra.mxu0 %v4310
    %5518 = vmatpush.bf16.msra.mxu0 %v4306
    %5519 = vmatpush.bf16.msra.mxu0 %v4302
    %5520 = vmatpush.bf16.msra.mxu0 %v4298
    %5521 = vmatpush.bf16.msra.mxu0 %v4294
    %5522 = vmatpush.bf16.msra.mxu0 %v4290
    %5523 = vmatpush.bf16.msra.mxu0 %v4286
    %5524 = vmatmul.bf16.gmra.mxu0 %v2126
    %v5525 = vpop.f32.mrf.mxu0
    %v5526 = vadd.f32 %v5513, %v5525
    %v5527 = vpop.f32.mrf.mxu0
    %5528 = vdwg.mxu0
    %5529 = vmatpush.bf16.msra.mxu0 %v4346
    %5530 = vmatpush.bf16.msra.mxu0 %v4342
    %5531 = vmatpush.bf16.msra.mxu0 %v4338
    %5532 = vmatpush.bf16.msra.mxu0 %v4334
    %5533 = vmatpush.bf16.msra.mxu0 %v4330
    %5534 = vmatpush.bf16.msra.mxu0 %v4326
    %5535 = vmatpush.bf16.msra.mxu0 %v4322
    %5536 = vmatpush.bf16.msra.mxu0 %v4318
    %5537 = vmatmul.bf16.gmra.mxu0 %v2127
    %v5538 = vpop.f32.mrf.mxu0
    %v5539 = vadd.f32 %v5526, %v5538
    %v5540 = vpop.f32.mrf.mxu0
    %5541 = vdwg.mxu0
    %5542 = vmatpush.bf16.msra.mxu0 %v4378
    %5543 = vmatpush.bf16.msra.mxu0 %v4374
    %5544 = vmatpush.bf16.msra.mxu0 %v4370
    %5545 = vmatpush.bf16.msra.mxu0 %v4366
    %5546 = vmatpush.bf16.msra.mxu0 %v4362
    %5547 = vmatpush.bf16.msra.mxu0 %v4358
    %5548 = vmatpush.bf16.msra.mxu0 %v4354
    %5549 = vmatpush.bf16.msra.mxu0 %v4350
    %5550 = vmatmul.bf16.gmra.mxu0 %v2128
    %v5551 = vpop.f32.mrf.mxu0
    %v5552 = vadd.f32 %v5539, %v5551
    %v5553 = vpop.f32.mrf.mxu0
    %5554 = vdwg.mxu0
    %v5555 = vmax.f32 %v5006, 0.0
    %v5556 = vmax.f32 %v5188, 0.0
    %v5557 = vmax.f32 %v5370, 0.0
    %v5558 = vmax.f32 %v5552, 0.0
    %v5559 = vpack.c.bf16 %v5555, %v5555
    %v5560 = vpack.c.bf16 %v5556, %v5556
    %v5561 = vpack.c.bf16 %v5557, %v5557
    %v5562 = vpack.c.bf16 %v5558, %v5558
    %v5563 = vld [vmem:[#allocation24] sm:$0xff]
    %v5564 = vld [vmem:[#allocation24 + $0x8] sm:$0xff]
    %v5565 = vld [vmem:[#allocation24 + $0x10] sm:$0xff]
    %v5566 = vld [vmem:[#allocation24 + $0x18] sm:$0xff]
    %v5567 = vld [vmem:[#allocation24 + $0x20] sm:$0xff]
    %v5568 = vld [vmem:[#allocation24 + $0x28] sm:$0xff]
    %v5569 = vld [vmem:[#allocation24 + $0x30] sm:$0xff]
    %v5570 = vld [vmem:[#allocation24 + $0x38] sm:$0xff]
    %v5571 = vld [vmem:[#allocation24 + $0x40] sm:$0xff]
    %v5572 = vld [vmem:[#allocation24 + $0x48] sm:$0xff]
    %v5573 = vld [vmem:[#allocation24 + $0x50] sm:$0xff]
    %v5574 = vld [vmem:[#allocation24 + $0x58] sm:$0xff]
    %v5575 = vld [vmem:[#allocation24 + $0x60] sm:$0xff]
    %v5576 = vld [vmem:[#allocation24 + $0x68] sm:$0xff]
    %v5577 = vld [vmem:[#allocation24 + $0x70] sm:$0xff]
    %v5578 = vld [vmem:[#allocation24 + $0x78] sm:$0xff]
    %v5579 = vld [vmem:[#allocation24 + $0x80] sm:$0xff]
    %v5580 = vld [vmem:[#allocation24 + $0x88] sm:$0xff]
    %v5581 = vld [vmem:[#allocation24 + $0x90] sm:$0xff]
    %v5582 = vld [vmem:[#allocation24 + $0x98] sm:$0xff]
    %v5583 = vld [vmem:[#allocation24 + $0xa0] sm:$0xff]
    %v5584 = vld [vmem:[#allocation24 + $0xa8] sm:$0xff]
    %v5585 = vld [vmem:[#allocation24 + $0xb0] sm:$0xff]
    %v5586 = vld [vmem:[#allocation24 + $0xb8] sm:$0xff]
    %v5587 = vld [vmem:[#allocation24 + $0xc0] sm:$0xff]
    %v5588 = vld [vmem:[#allocation24 + $0xc8] sm:$0xff]
    %v5589 = vld [vmem:[#allocation24 + $0xd0] sm:$0xff]
    %v5590 = vld [vmem:[#allocation24 + $0xd8] sm:$0xff]
    %v5591 = vld [vmem:[#allocation24 + $0xe0] sm:$0xff]
    %v5592 = vld [vmem:[#allocation24 + $0xe8] sm:$0xff]
    %v5593 = vld [vmem:[#allocation24 + $0xf0] sm:$0xff]
    %v5594 = vld [vmem:[#allocation24 + $0xf8] sm:$0xff]
    %v5595 = vld [vmem:[#allocation24 + $0x100] sm:$0xff]
    %v5596 = vld [vmem:[#allocation24 + $0x108] sm:$0xff]
    %v5597 = vld [vmem:[#allocation24 + $0x110] sm:$0xff]
    %v5598 = vld [vmem:[#allocation24 + $0x118] sm:$0xff]
    %v5599 = vld [vmem:[#allocation24 + $0x120] sm:$0xff]
    %v5600 = vld [vmem:[#allocation24 + $0x128] sm:$0xff]
    %v5601 = vld [vmem:[#allocation24 + $0x130] sm:$0xff]
    %v5602 = vld [vmem:[#allocation24 + $0x138] sm:$0xff]
    %v5603 = vld [vmem:[#allocation24 + $0x140] sm:$0xff]
    %v5604 = vld [vmem:[#allocation24 + $0x148] sm:$0xff]
    %v5605 = vld [vmem:[#allocation24 + $0x150] sm:$0xff]
    %v5606 = vld [vmem:[#allocation24 + $0x158] sm:$0xff]
    %v5607 = vld [vmem:[#allocation24 + $0x160] sm:$0xff]
    %v5608 = vld [vmem:[#allocation24 + $0x168] sm:$0xff]
    %v5609 = vld [vmem:[#allocation24 + $0x170] sm:$0xff]
    %v5610 = vld [vmem:[#allocation24 + $0x178] sm:$0xff]
    %v5611 = vld [vmem:[#allocation24 + $0x180] sm:$0xff]
    %v5612 = vld [vmem:[#allocation24 + $0x188] sm:$0xff]
    %v5613 = vld [vmem:[#allocation24 + $0x190] sm:$0xff]
    %v5614 = vld [vmem:[#allocation24 + $0x198] sm:$0xff]
    %v5615 = vld [vmem:[#allocation24 + $0x1a0] sm:$0xff]
    %v5616 = vld [vmem:[#allocation24 + $0x1a8] sm:$0xff]
    %v5617 = vld [vmem:[#allocation24 + $0x1b0] sm:$0xff]
    %v5618 = vld [vmem:[#allocation24 + $0x1b8] sm:$0xff]
    %v5619 = vld [vmem:[#allocation24 + $0x1c0] sm:$0xff]
    %v5620 = vld [vmem:[#allocation24 + $0x1c8] sm:$0xff]
    %v5621 = vld [vmem:[#allocation24 + $0x1d0] sm:$0xff]
    %v5622 = vld [vmem:[#allocation24 + $0x1d8] sm:$0xff]
    %v5623 = vld [vmem:[#allocation24 + $0x1e0] sm:$0xff]
    %v5624 = vld [vmem:[#allocation24 + $0x1e8] sm:$0xff]
    %v5625 = vld [vmem:[#allocation24 + $0x1f0] sm:$0xff]
    %v5626 = vld [vmem:[#allocation24 + $0x1f8] sm:$0xff]
    %v5627 = vld [vmem:[#allocation25] sm:$0x3]
    %v5629 = vperm.slane %v5627, 0
    %v5630 = vperm.slane %v5627, 1
    %v5697 = vunpack.c.l.b16 %v5563
    %v5698 = vunpack.c.h.b16 %v5563
    %v5699 = vunpack.c.l.b16 %v5564
    %v5700 = vunpack.c.h.b16 %v5564
    %v5701 = vunpack.c.l.b16 %v5565
    %v5702 = vunpack.c.h.b16 %v5565
    %v5703 = vunpack.c.l.b16 %v5566
    %v5704 = vunpack.c.h.b16 %v5566
    %v5705 = vunpack.c.l.b16 %v5567
    %v5706 = vunpack.c.h.b16 %v5567
    %v5707 = vunpack.c.l.b16 %v5568
    %v5708 = vunpack.c.h.b16 %v5568
    %v5709 = vunpack.c.l.b16 %v5569
    %v5710 = vunpack.c.h.b16 %v5569
    %v5711 = vunpack.c.l.b16 %v5570
    %v5712 = vunpack.c.h.b16 %v5570
    %v5713 = vunpack.c.l.b16 %v5571
    %v5714 = vunpack.c.h.b16 %v5571
    %v5715 = vunpack.c.l.b16 %v5572
    %v5716 = vunpack.c.h.b16 %v5572
    %v5717 = vunpack.c.l.b16 %v5573
    %v5718 = vunpack.c.h.b16 %v5573
    %v5719 = vunpack.c.l.b16 %v5574
    %v5720 = vunpack.c.h.b16 %v5574
    %v5721 = vunpack.c.l.b16 %v5575
    %v5722 = vunpack.c.h.b16 %v5575
    %v5723 = vunpack.c.l.b16 %v5576
    %v5724 = vunpack.c.h.b16 %v5576
    %v5725 = vunpack.c.l.b16 %v5577
    %v5726 = vunpack.c.h.b16 %v5577
    %v5727 = vunpack.c.l.b16 %v5578
    %v5728 = vunpack.c.h.b16 %v5578
    %v5729 = vunpack.c.l.b16 %v5579
    %v5730 = vunpack.c.h.b16 %v5579
    %v5731 = vunpack.c.l.b16 %v5580
    %v5732 = vunpack.c.h.b16 %v5580
    %v5733 = vunpack.c.l.b16 %v5581
    %v5734 = vunpack.c.h.b16 %v5581
    %v5735 = vunpack.c.l.b16 %v5582
    %v5736 = vunpack.c.h.b16 %v5582
    %v5737 = vunpack.c.l.b16 %v5583
    %v5738 = vunpack.c.h.b16 %v5583
    %v5739 = vunpack.c.l.b16 %v5584
    %v5740 = vunpack.c.h.b16 %v5584
    %v5741 = vunpack.c.l.b16 %v5585
    %v5742 = vunpack.c.h.b16 %v5585
    %v5743 = vunpack.c.l.b16 %v5586
    %v5744 = vunpack.c.h.b16 %v5586
    %v5745 = vunpack.c.l.b16 %v5587
    %v5746 = vunpack.c.h.b16 %v5587
    %v5747 = vunpack.c.l.b16 %v5588
    %v5748 = vunpack.c.h.b16 %v5588
    %v5749 = vunpack.c.l.b16 %v5589
    %v5750 = vunpack.c.h.b16 %v5589
    %v5751 = vunpack.c.l.b16 %v5590
    %v5752 = vunpack.c.h.b16 %v5590
    %v5753 = vunpack.c.l.b16 %v5591
    %v5754 = vunpack.c.h.b16 %v5591
    %v5755 = vunpack.c.l.b16 %v5592
    %v5756 = vunpack.c.h.b16 %v5592
    %v5757 = vunpack.c.l.b16 %v5593
    %v5758 = vunpack.c.h.b16 %v5593
    %v5759 = vunpack.c.l.b16 %v5594
    %v5760 = vunpack.c.h.b16 %v5594
    %v5761 = vunpack.c.l.b16 %v5595
    %v5762 = vunpack.c.h.b16 %v5595
    %v5763 = vunpack.c.l.b16 %v5596
    %v5764 = vunpack.c.h.b16 %v5596
    %v5765 = vunpack.c.l.b16 %v5597
    %v5766 = vunpack.c.h.b16 %v5597
    %v5767 = vunpack.c.l.b16 %v5598
    %v5768 = vunpack.c.h.b16 %v5598
    %v5769 = vunpack.c.l.b16 %v5599
    %v5770 = vunpack.c.h.b16 %v5599
    %v5771 = vunpack.c.l.b16 %v5600
    %v5772 = vunpack.c.h.b16 %v5600
    %v5773 = vunpack.c.l.b16 %v5601
    %v5774 = vunpack.c.h.b16 %v5601
    %v5775 = vunpack.c.l.b16 %v5602
    %v5776 = vunpack.c.h.b16 %v5602
    %v5777 = vunpack.c.l.b16 %v5603
    %v5778 = vunpack.c.h.b16 %v5603
    %v5779 = vunpack.c.l.b16 %v5604
    %v5780 = vunpack.c.h.b16 %v5604
    %v5781 = vunpack.c.l.b16 %v5605
    %v5782 = vunpack.c.h.b16 %v5605
    %v5783 = vunpack.c.l.b16 %v5606
    %v5784 = vunpack.c.h.b16 %v5606
    %v5785 = vunpack.c.l.b16 %v5607
    %v5786 = vunpack.c.h.b16 %v5607
    %v5787 = vunpack.c.l.b16 %v5608
    %v5788 = vunpack.c.h.b16 %v5608
    %v5789 = vunpack.c.l.b16 %v5609
    %v5790 = vunpack.c.h.b16 %v5609
    %v5791 = vunpack.c.l.b16 %v5610
    %v5792 = vunpack.c.h.b16 %v5610
    %v5793 = vunpack.c.l.b16 %v5611
    %v5794 = vunpack.c.h.b16 %v5611
    %v5795 = vunpack.c.l.b16 %v5612
    %v5796 = vunpack.c.h.b16 %v5612
    %v5797 = vunpack.c.l.b16 %v5613
    %v5798 = vunpack.c.h.b16 %v5613
    %v5799 = vunpack.c.l.b16 %v5614
    %v5800 = vunpack.c.h.b16 %v5614
    %v5801 = vunpack.c.l.b16 %v5615
    %v5802 = vunpack.c.h.b16 %v5615
    %v5803 = vunpack.c.l.b16 %v5616
    %v5804 = vunpack.c.h.b16 %v5616
    %v5805 = vunpack.c.l.b16 %v5617
    %v5806 = vunpack.c.h.b16 %v5617
    %v5807 = vunpack.c.l.b16 %v5618
    %v5808 = vunpack.c.h.b16 %v5618
    %v5809 = vunpack.c.l.b16 %v5619
    %v5810 = vunpack.c.h.b16 %v5619
    %v5811 = vunpack.c.l.b16 %v5620
    %v5812 = vunpack.c.h.b16 %v5620
    %v5813 = vunpack.c.l.b16 %v5621
    %v5814 = vunpack.c.h.b16 %v5621
    %v5815 = vunpack.c.l.b16 %v5622
    %v5816 = vunpack.c.h.b16 %v5622
    %v5817 = vunpack.c.l.b16 %v5623
    %v5818 = vunpack.c.h.b16 %v5623
    %v5819 = vunpack.c.l.b16 %v5624
    %v5820 = vunpack.c.h.b16 %v5624
    %v5821 = vunpack.c.l.b16 %v5625
    %v5822 = vunpack.c.h.b16 %v5625
    %v5823 = vunpack.c.l.b16 %v5626
    %v5824 = vunpack.c.h.b16 %v5626
    %v5825 = vpack.c.b16 %v5699, %v5697
    %v5826 = vpack.c.b16 %v5700, %v5698
    %v5827 = vpack.c.b16 %v5703, %v5701
    %v5828 = vpack.c.b16 %v5704, %v5702
    %v5829 = vpack.c.b16 %v5707, %v5705
    %v5830 = vpack.c.b16 %v5708, %v5706
    %v5831 = vpack.c.b16 %v5711, %v5709
    %v5832 = vpack.c.b16 %v5712, %v5710
    %v5833 = vpack.c.b16 %v5715, %v5713
    %v5834 = vpack.c.b16 %v5716, %v5714
    %v5835 = vpack.c.b16 %v5719, %v5717
    %v5836 = vpack.c.b16 %v5720, %v5718
    %v5837 = vpack.c.b16 %v5723, %v5721
    %v5838 = vpack.c.b16 %v5724, %v5722
    %v5839 = vpack.c.b16 %v5727, %v5725
    %v5840 = vpack.c.b16 %v5728, %v5726
    %v5841 = vpack.c.b16 %v5731, %v5729
    %v5842 = vpack.c.b16 %v5732, %v5730
    %v5843 = vpack.c.b16 %v5735, %v5733
    %v5844 = vpack.c.b16 %v5736, %v5734
    %v5845 = vpack.c.b16 %v5739, %v5737
    %v5846 = vpack.c.b16 %v5740, %v5738
    %v5847 = vpack.c.b16 %v5743, %v5741
    %v5848 = vpack.c.b16 %v5744, %v5742
    %v5849 = vpack.c.b16 %v5747, %v5745
    %v5850 = vpack.c.b16 %v5748, %v5746
    %v5851 = vpack.c.b16 %v5751, %v5749
    %v5852 = vpack.c.b16 %v5752, %v5750
    %v5853 = vpack.c.b16 %v5755, %v5753
    %v5854 = vpack.c.b16 %v5756, %v5754
    %v5855 = vpack.c.b16 %v5759, %v5757
    %v5856 = vpack.c.b16 %v5760, %v5758
    %v5857 = vpack.c.b16 %v5763, %v5761
    %v5858 = vpack.c.b16 %v5764, %v5762
    %v5859 = vpack.c.b16 %v5767, %v5765
    %v5860 = vpack.c.b16 %v5768, %v5766
    %v5861 = vpack.c.b16 %v5771, %v5769
    %v5862 = vpack.c.b16 %v5772, %v5770
    %v5863 = vpack.c.b16 %v5775, %v5773
    %v5864 = vpack.c.b16 %v5776, %v5774
    %v5865 = vpack.c.b16 %v5779, %v5777
    %v5866 = vpack.c.b16 %v5780, %v5778
    %v5867 = vpack.c.b16 %v5783, %v5781
    %v5868 = vpack.c.b16 %v5784, %v5782
    %v5869 = vpack.c.b16 %v5787, %v5785
    %v5870 = vpack.c.b16 %v5788, %v5786
    %v5871 = vpack.c.b16 %v5791, %v5789
    %v5872 = vpack.c.b16 %v5792, %v5790
    %v5873 = vpack.c.b16 %v5795, %v5793
    %v5874 = vpack.c.b16 %v5796, %v5794
    %v5875 = vpack.c.b16 %v5799, %v5797
    %v5876 = vpack.c.b16 %v5800, %v5798
    %v5877 = vpack.c.b16 %v5803, %v5801
    %v5878 = vpack.c.b16 %v5804, %v5802
    %v5879 = vpack.c.b16 %v5807, %v5805
    %v5880 = vpack.c.b16 %v5808, %v5806
    %v5881 = vpack.c.b16 %v5811, %v5809
    %v5882 = vpack.c.b16 %v5812, %v5810
    %v5883 = vpack.c.b16 %v5815, %v5813
    %v5884 = vpack.c.b16 %v5816, %v5814
    %v5885 = vpack.c.b16 %v5819, %v5817
    %v5886 = vpack.c.b16 %v5820, %v5818
    %v5887 = vpack.c.b16 %v5823, %v5821
    %v5888 = vpack.c.b16 %v5824, %v5822
    %5953 = vmatpush.bf16.msra.mxu0 %v5839
    %5954 = vmatpush.bf16.msra.mxu0 %v5837
    %5955 = vmatpush.bf16.msra.mxu0 %v5835
    %5956 = vmatpush.bf16.msra.mxu0 %v5833
    %5957 = vmatpush.bf16.msra.mxu0 %v5831
    %5958 = vmatpush.bf16.msra.mxu0 %v5829
    %5959 = vmatpush.bf16.msra.mxu0 %v5827
    %5960 = vmatpush.bf16.msra.mxu0 %v5825
    %5961 = vmatmul.bf16.gmra.mxu0 %v5559
    %v5962 = vpop.f32.mrf.mxu0
    %v5963 = vadd.f32 %v5629, %v5962
    %v5964 = vpop.f32.mrf.mxu0
    %5965 = vdwg.mxu0
    %5966 = vmatpush.bf16.msra.mxu0 %v5855
    %5967 = vmatpush.bf16.msra.mxu0 %v5853
    %5968 = vmatpush.bf16.msra.mxu0 %v5851
    %5969 = vmatpush.bf16.msra.mxu0 %v5849
    %5970 = vmatpush.bf16.msra.mxu0 %v5847
    %5971 = vmatpush.bf16.msra.mxu0 %v5845
    %5972 = vmatpush.bf16.msra.mxu0 %v5843
    %5973 = vmatpush.bf16.msra.mxu0 %v5841
    %5974 = vmatmul.bf16.gmra.mxu0 %v5560
    %v5975 = vpop.f32.mrf.mxu0
    %v5976 = vadd.f32 %v5963, %v5975
    %v5977 = vpop.f32.mrf.mxu0
    %5978 = vdwg.mxu0
    %5979 = vmatpush.bf16.msra.mxu0 %v5871
    %5980 = vmatpush.bf16.msra.mxu0 %v5869
    %5981 = vmatpush.bf16.msra.mxu0 %v5867
    %5982 = vmatpush.bf16.msra.mxu0 %v5865
    %5983 = vmatpush.bf16.msra.mxu0 %v5863
    %5984 = vmatpush.bf16.msra.mxu0 %v5861
    %5985 = vmatpush.bf16.msra.mxu0 %v5859
    %5986 = vmatpush.bf16.msra.mxu0 %v5857
    %5987 = vmatmul.bf16.gmra.mxu0 %v5561
    %v5988 = vpop.f32.mrf.mxu0
    %v5989 = vadd.f32 %v5976, %v5988
    %v5990 = vpop.f32.mrf.mxu0
    %5991 = vdwg.mxu0
    %5992 = vmatpush.bf16.msra.mxu0 %v5887
    %5993 = vmatpush.bf16.msra.mxu0 %v5885
    %5994 = vmatpush.bf16.msra.mxu0 %v5883
    %5995 = vmatpush.bf16.msra.mxu0 %v5881
    %5996 = vmatpush.bf16.msra.mxu0 %v5879
    %5997 = vmatpush.bf16.msra.mxu0 %v5877
    %5998 = vmatpush.bf16.msra.mxu0 %v5875
    %5999 = vmatpush.bf16.msra.mxu0 %v5873
    %6000 = vmatmul.bf16.gmra.mxu0 %v5562
    %v6001 = vpop.f32.mrf.mxu0
    %v6002 = vadd.f32 %v5989, %v6001
    %v6003 = vpop.f32.mrf.mxu0
    %6004 = vdwg.mxu0
    %6005 = vmatpush.bf16.msra.mxu0 %v5840
    %6006 = vmatpush.bf16.msra.mxu0 %v5838
    %6007 = vmatpush.bf16.msra.mxu0 %v5836
    %6008 = vmatpush.bf16.msra.mxu0 %v5834
    %6009 = vmatpush.bf16.msra.mxu0 %v5832
    %6010 = vmatpush.bf16.msra.mxu0 %v5830
    %6011 = vmatpush.bf16.msra.mxu0 %v5828
    %6012 = vmatpush.bf16.msra.mxu0 %v5826
    %6013 = vmatmul.bf16.gmra.mxu0 %v5559
    %v6014 = vpop.f32.mrf.mxu0
    %v6015 = vadd.f32 %v5630, %v6014
    %v6016 = vpop.f32.mrf.mxu0
    %6017 = vdwg.mxu0
    %6018 = vmatpush.bf16.msra.mxu0 %v5856
    %6019 = vmatpush.bf16.msra.mxu0 %v5854
    %6020 = vmatpush.bf16.msra.mxu0 %v5852
    %6021 = vmatpush.bf16.msra.mxu0 %v5850
    %6022 = vmatpush.bf16.msra.mxu0 %v5848
    %6023 = vmatpush.bf16.msra.mxu0 %v5846
    %6024 = vmatpush.bf16.msra.mxu0 %v5844
    %6025 = vmatpush.bf16.msra.mxu0 %v5842
    %6026 = vmatmul.bf16.gmra.mxu0 %v5560
    %v6027 = vpop.f32.mrf.mxu0
    %v6028 = vadd.f32 %v6015, %v6027
    %v6029 = vpop.f32.mrf.mxu0
    %6030 = vdwg.mxu0
    %6031 = vmatpush.bf16.msra.mxu0 %v5872
    %6032 = vmatpush.bf16.msra.mxu0 %v5870
    %6033 = vmatpush.bf16.msra.mxu0 %v5868
    %6034 = vmatpush.bf16.msra.mxu0 %v5866
    %6035 = vmatpush.bf16.msra.mxu0 %v5864
    %6036 = vmatpush.bf16.msra.mxu0 %v5862
    %6037 = vmatpush.bf16.msra.mxu0 %v5860
    %6038 = vmatpush.bf16.msra.mxu0 %v5858
    %6039 = vmatmul.bf16.gmra.mxu0 %v5561
    %v6040 = vpop.f32.mrf.mxu0
    %v6041 = vadd.f32 %v6028, %v6040
    %v6042 = vpop.f32.mrf.mxu0
    %6043 = vdwg.mxu0
    %6044 = vmatpush.bf16.msra.mxu0 %v5888
    %6045 = vmatpush.bf16.msra.mxu0 %v5886
    %6046 = vmatpush.bf16.msra.mxu0 %v5884
    %6047 = vmatpush.bf16.msra.mxu0 %v5882
    %6048 = vmatpush.bf16.msra.mxu0 %v5880
    %6049 = vmatpush.bf16.msra.mxu0 %v5878
    %6050 = vmatpush.bf16.msra.mxu0 %v5876
    %6051 = vmatpush.bf16.msra.mxu0 %v5874
    %6052 = vmatmul.bf16.gmra.mxu0 %v5562
    %v6053 = vpop.f32.mrf.mxu0
    %v6054 = vadd.f32 %v6041, %v6053
    %v6055 = vpop.f32.mrf.mxu0
    %6056 = vdwg.mxu0
    %v6057 = vmax.f32 %v6002, 0.0
    %v6058 = vmax.f32 %v6054, 0.0
    %v6059 = vpack.c.bf16 %v6057, %v6057
    %v6060 = vpack.c.bf16 %v6058, %v6058
    %v6061 = vld [vmem:[%s16] sm:$0xf]
    %v6062 = vld [vmem:[%s16 + $0x4] sm:$0xf]
    %v6063 = vld [vmem:[%s16 + $0x8] sm:$0xf]
    %v6064 = vld [vmem:[%s16 + $0xc] sm:$0xf]
    %v6065 = vld [vmem:[%s16 + $0x10] sm:$0xf]
    %v6066 = vld [vmem:[%s16 + $0x14] sm:$0xf]
    %v6067 = vld [vmem:[%s16 + $0x18] sm:$0xf]
    %v6068 = vld [vmem:[%s16 + $0x1c] sm:$0xf]
    %v6069 = vld [vmem:[%s16 + $0x20] sm:$0xf]
    %v6070 = vld [vmem:[%s16 + $0x24] sm:$0xf]
    %v6071 = vld [vmem:[%s16 + $0x28] sm:$0xf]
    %v6072 = vld [vmem:[%s16 + $0x2c] sm:$0xf]
    %v6073 = vld [vmem:[%s16 + $0x30] sm:$0xf]
    %v6074 = vld [vmem:[%s16 + $0x34] sm:$0xf]
    %v6075 = vld [vmem:[%s16 + $0x38] sm:$0xf]
    %v6076 = vld [vmem:[%s16 + $0x3c] sm:$0xf]
    %v6077 = vld [vmem:[%s16 + $0x40] sm:$0xf]
    %v6078 = vld [vmem:[%s16 + $0x44] sm:$0xf]
    %v6079 = vld [vmem:[%s16 + $0x48] sm:$0xf]
    %v6080 = vld [vmem:[%s16 + $0x4c] sm:$0xf]
    %v6081 = vld [vmem:[%s16 + $0x50] sm:$0xf]
    %v6082 = vld [vmem:[%s16 + $0x54] sm:$0xf]
    %v6083 = vld [vmem:[%s16 + $0x58] sm:$0xf]
    %v6084 = vld [vmem:[%s16 + $0x5c] sm:$0xf]
    %v6085 = vld [vmem:[%s16 + $0x60] sm:$0xf]
    %v6086 = vld [vmem:[%s16 + $0x64] sm:$0xf]
    %v6087 = vld [vmem:[%s16 + $0x68] sm:$0xf]
    %v6088 = vld [vmem:[%s16 + $0x6c] sm:$0xf]
    %v6089 = vld [vmem:[%s16 + $0x70] sm:$0xf]
    %v6090 = vld [vmem:[%s16 + $0x74] sm:$0xf]
    %v6091 = vld [vmem:[%s16 + $0x78] sm:$0xf]
    %v6092 = vld [vmem:[%s16 + $0x7c] sm:$0xf]
    %v6093 = vld [vmem:[#allocation27] sm:$0x1]
    %v6095 = vperm.slane %v6093, 0
    %v6129 = vunpack.c.l.b16 %v6061
    %v6130 = vunpack.c.l.b16 %v6062
    %v6131 = vunpack.c.l.b16 %v6063
    %v6132 = vunpack.c.l.b16 %v6064
    %v6133 = vunpack.c.l.b16 %v6065
    %v6134 = vunpack.c.l.b16 %v6066
    %v6135 = vunpack.c.l.b16 %v6067
    %v6136 = vunpack.c.l.b16 %v6068
    %v6137 = vunpack.c.l.b16 %v6069
    %v6138 = vunpack.c.l.b16 %v6070
    %v6139 = vunpack.c.l.b16 %v6071
    %v6140 = vunpack.c.l.b16 %v6072
    %v6141 = vunpack.c.l.b16 %v6073
    %v6142 = vunpack.c.l.b16 %v6074
    %v6143 = vunpack.c.l.b16 %v6075
    %v6144 = vunpack.c.l.b16 %v6076
    %v6145 = vunpack.c.l.b16 %v6077
    %v6146 = vunpack.c.l.b16 %v6078
    %v6147 = vunpack.c.l.b16 %v6079
    %v6148 = vunpack.c.l.b16 %v6080
    %v6149 = vunpack.c.l.b16 %v6081
    %v6150 = vunpack.c.l.b16 %v6082
    %v6151 = vunpack.c.l.b16 %v6083
    %v6152 = vunpack.c.l.b16 %v6084
    %v6153 = vunpack.c.l.b16 %v6085
    %v6154 = vunpack.c.l.b16 %v6086
    %v6155 = vunpack.c.l.b16 %v6087
    %v6156 = vunpack.c.l.b16 %v6088
    %v6157 = vunpack.c.l.b16 %v6089
    %v6158 = vunpack.c.l.b16 %v6090
    %v6159 = vunpack.c.l.b16 %v6091
    %v6160 = vunpack.c.l.b16 %v6092
    %v6161 = vpack.c.b16 %v6130, %v6129
    %v6162 = vpack.c.b16 %v6132, %v6131
    %v6163 = vpack.c.b16 %v6134, %v6133
    %v6164 = vpack.c.b16 %v6136, %v6135
    %v6165 = vpack.c.b16 %v6138, %v6137
    %v6166 = vpack.c.b16 %v6140, %v6139
    %v6167 = vpack.c.b16 %v6142, %v6141
    %v6168 = vpack.c.b16 %v6144, %v6143
    %v6169 = vpack.c.b16 %v6146, %v6145
    %v6170 = vpack.c.b16 %v6148, %v6147
    %v6171 = vpack.c.b16 %v6150, %v6149
    %v6172 = vpack.c.b16 %v6152, %v6151
    %v6173 = vpack.c.b16 %v6154, %v6153
    %v6174 = vpack.c.b16 %v6156, %v6155
    %v6175 = vpack.c.b16 %v6158, %v6157
    %v6176 = vpack.c.b16 %v6160, %v6159
    %6193 = vmatpush.bf16.msra.mxu0 %v6168
    %6194 = vmatpush.bf16.msra.mxu0 %v6167
    %6195 = vmatpush.bf16.msra.mxu0 %v6166
    %6196 = vmatpush.bf16.msra.mxu0 %v6165
    %6197 = vmatpush.bf16.msra.mxu0 %v6164
    %6198 = vmatpush.bf16.msra.mxu0 %v6163
    %6199 = vmatpush.bf16.msra.mxu0 %v6162
    %6200 = vmatpush.bf16.msra.mxu0 %v6161
    %6201 = vmatmul.bf16.gmra.mxu0 %v6059
    %v6202 = vpop.f32.mrf.mxu0
    %v6203 = vadd.f32 %v6095, %v6202
    %v6204 = vpop.f32.mrf.mxu0
    %6205 = vdwg.mxu0
    %6206 = vmatpush.bf16.msra.mxu0 %v6176
    %6207 = vmatpush.bf16.msra.mxu0 %v6175
    %6208 = vmatpush.bf16.msra.mxu0 %v6174
    %6209 = vmatpush.bf16.msra.mxu0 %v6173
    %6210 = vmatpush.bf16.msra.mxu0 %v6172
    %6211 = vmatpush.bf16.msra.mxu0 %v6171
    %6212 = vmatpush.bf16.msra.mxu0 %v6170
    %6213 = vmatpush.bf16.msra.mxu0 %v6169
    %6214 = vmatmul.bf16.gmra.mxu0 %v6060
    %v6215 = vpop.f32.mrf.mxu0
    %v6216 = vadd.f32 %v6203, %v6215
    %v6217 = vpop.f32.mrf.mxu0
    %6218 = vdwg.mxu0
    %vm6219 = vcmask 205824
    %6220 = vst.msk [vmem:[#allocation28] sm:$0x3] %vm6219, %v6216
    // Predicated region
    $region134: #{cnn_forward.1} parent=1 // pred_check
      _
    $region135: #{cnn_forward.1} parent=1 // pred_check_branch
      %6222 = sbr.rel (0) target = $region137
    $region136: #{cnn_forward.1} parent=1 // pred_region
      %6224 = vsyncadd [#allocation6], 0
      %s6226 = sshll.u32 [#allocation28], 4
      %s6227 = int_to_ptr.vmem [resolvable:$true] %s6226
      %s6228 = sshll.u32 %s18, 4
      %s6229 = int_to_ptr.hbm [resolvable:$true] %s6228
      %6231 = dma.vmem_to_hbm [thread:$0]  %s6227, 32, %s6229, [#allocation6]
    $region137: #{cnn_forward.1} parent=1 // pred_fallthru
      _
    // Predicated region
    $region138: #{cnn_forward.1} parent=1 // pred_check
      _
    $region139: #{cnn_forward.1} parent=1 // pred_check_branch
      %6233 = sbr.rel (0) target = $region141
    $region140: #{cnn_forward.1} parent=1 // pred_region
      %6235 = dma.done [#allocation6], 32
    $region141: #{cnn_forward.1} parent=1 // pred_fallthru
      _
    %6236 = vsyncpa [#allocation5], 1
    %6237 = vsyncpa [#allocation8], 1
    %6238 = vsyncpa [#allocation11], 1
    %6239 = vsyncpa [#allocation14], 1
    %6240 = vsyncpa [#allocation17], 1
    %6241 = vsyncpa [#allocation20], 1
    %6242 = vsyncpa [#allocation23], 1
    %6243 = vsyncpa [#allocation26], 1
    %6244 = vsyncpa [#allocation6], 1

</llo_original>
